<compile_context>
chip_gen: v7x
topology: tpu7x:2x2x1
jax: 0.10.0
libtpu: 0.0.40
codegen_flags: <defaults>
</compile_context>

<pallas_src>
import functools

import jax
import jax.numpy as jnp
import numpy as np
from jax.experimental import pallas as pl
from jax.experimental.pallas import tpu as pltpu


def _nanconv_kernel(x_ref, w_ref, b_ref, o_ref, *, kh, kw, stride, oh, ow, threshold):
    # x_ref: (1, C, Hp, Wp)  one (padded) batch element
    # w_ref: (OC, KH*KW*C)   pre-reshaped weight (taps folded into contraction)
    # b_ref: (OC, 1)
    # o_ref: (1, OC, oh*ow)  lane-dense 2-D output block
    x = x_ref[0].astype(jnp.float32)        # (C, Hp, Wp)
    w2 = w_ref[...].astype(jnp.float32)     # (OC, K) with K = KH*KW*C
    bias = b_ref[...].astype(jnp.float32)   # (OC, 1)

    c = x.shape[0]
    total = float(c * kh * kw)
    h_span = (oh - 1) * stride + 1
    w_span = (ow - 1) * stride + 1
    p = oh * ow

    # ---- Hoisted NaN handling: computed ONCE, reused by stats + both matmuls.
    isn = jnp.isnan(x)
    isn_f = isn.astype(jnp.float32)
    x0 = jnp.where(isn, 0.0, x)

    # ---- im2col; row order (m, n, c) matches weight.transpose(0,2,3,1).reshape(OC,-1).
    cols_x, cols_m = [], []
    for m in range(kh):
        for n in range(kw):
            sl = (slice(None),
                  slice(m, m + h_span, stride),
                  slice(n, n + w_span, stride))
            cols_x.append(x0[sl].reshape(c, p))
            cols_m.append(isn_f[sl].reshape(c, p))
    x0_col = jnp.concatenate(cols_x, axis=0)     # (K, P)
    msk_col = jnp.concatenate(cols_m, axis=0)    # (K, P)

    # ---- Per-output-position NaN statistics (flattened, lane-dense).
    nan_count = jnp.sum(msk_col, axis=0, keepdims=True)   # (1, P)
    val_sum = jnp.sum(x0_col, axis=0, keepdims=True)      # (1, P)
    valid = total - nan_count
    patch_mean = val_sum / jnp.maximum(valid, 1.0)         # safe divide; masked below

    # ---- conv(filled) = conv(x0) + patch_mean * conv(nan_mask).
    conv_x0 = jnp.dot(w2, x0_col, preferred_element_type=jnp.float32)    # (OC, P)
    conv_mk = jnp.dot(w2, msk_col, preferred_element_type=jnp.float32)   # (OC, P)
    out = conv_x0 + patch_mean * conv_mk + bias

    # ---- Threshold mask; threshold*total is a trace-time constant.
    masked = jnp.logical_or(nan_count >= threshold * total,
                            nan_count >= total)                          # (1, P)
    out = jnp.where(masked, jnp.float32(jnp.nan), out)
    o_ref[0] = out.astype(o_ref.dtype)


def nan_conv2d(x, weight, bias=None, *, padding=0, stride=1, threshold=0.5):
    """NaN-aware conv2d matching NaNConv2d.forward. x: (B, C, H, W) float32."""
    B, C, H, W = x.shape
    OC, IC, KH, KW = weight.shape
    assert IC == C

    # Zero padding (matches F.pad default, so padded values are NOT NaN).
    xp = jnp.pad(x, ((0, 0), (0, 0), (padding, padding), (padding, padding)))
    Hp, Wp = H + 2 * padding, W + 2 * padding
    oh = (Hp - KH) // stride + 1
    ow = (Wp - KW) // stride + 1
    P = oh * ow
    K = KH * KW * C

    # Fold taps into the contraction dim; order (kh, kw, c) matches the kernel im2col.
    w2 = jnp.transpose(weight, (0, 2, 3, 1)).reshape(OC, K)
    if bias is None:
        bias = jnp.zeros((OC,), x.dtype)
    b2 = bias.reshape(OC, 1)

    kernel = functools.partial(
        _nanconv_kernel, kh=KH, kw=KW, stride=stride, oh=oh, ow=ow, threshold=threshold
    )

    out2d = pl.pallas_call(
        kernel,
        out_shape=jax.ShapeDtypeStruct((B, OC, P), x.dtype),
        grid=(B,),
        in_specs=[
            pl.BlockSpec((1, C, Hp, Wp), lambda b: (b, 0, 0, 0)),
            pl.BlockSpec((OC, K), lambda b: (0, 0)),
            pl.BlockSpec((OC, 1), lambda b: (0, 0)),
        ],
        out_specs=pl.BlockSpec((1, OC, P), lambda b: (b, 0, 0)),
        compiler_params=pltpu.CompilerParams(dimension_semantics=("parallel",)),
    )(xp, w2, b2)
    return out2d.reshape(B, OC, oh, ow)


def _ref_nanconv(x, w, b, padding, stride, threshold):
    """Pure-numpy reference mirroring the PyTorch loop semantics."""
    x = np.pad(x, ((0, 0), (0, 0), (padding, padding), (padding, padding)))
    B, C, H, W = x.shape
    OC, _, KH, KW = w.shape
    oh = (H - KH) // stride + 1
    ow = (W - KW) // stride + 1
    out = np.empty((B, OC, oh, ow), np.float32)
    for bb in range(B):
        for i in range(oh):
            for j in range(ow):
                patch = x[bb, :, i * stride:i * stride + KH, j * stride:j * stride + KW]
                nan = np.isnan(patch)
                total = patch.size
                ncount = int(nan.sum())
                if ncount / total >= threshold or ncount == total:
                    out[bb, :, i, j] = np.nan
                    continue
                mean = patch[~nan].sum() / (total - ncount)
                filled = np.where(nan, mean, patch)
                out[bb, :, i, j] = (filled[None] * w).sum(axis=(1, 2, 3)) + b
    return out


if __name__ == "__main__":
    key = jax.random.PRNGKey(0)
    kx, kn, kw_, kb = jax.random.split(key, 4)

    B, C, H, W = 2, 4, 16, 16
    OC, KH, KW = 8, 3, 3
    padding, stride, threshold = 1, 1, 0.5

    x = jax.random.normal(kx, (B, C, H, W), dtype=jnp.float32)
    # Inject NaNs: random sprinkle plus a dense NaN blob so some outputs are NaN.
    nan_mask = jax.random.bernoulli(kn, 0.15, (B, C, H, W))
    x = jnp.where(nan_mask, jnp.nan, x)
    x = x.at[0, :, 4:9, 4:9].set(jnp.nan)

    weight = jax.random.normal(kw_, (OC, C, KH, KW), dtype=jnp.float32) * 0.1
    bias = jax.random.normal(kb, (OC,), dtype=jnp.float32) * 0.01

    out = nan_conv2d(x, weight, bias, padding=padding, stride=stride, threshold=threshold)
    out = jax.block_until_ready(out)

    ref = _ref_nanconv(np.asarray(x), np.asarray(weight), np.asarray(bias),
                       padding, stride, threshold)
    np.testing.assert_allclose(np.asarray(out), ref, rtol=1e-4, atol=1e-4, equal_nan=True)

    print("KERNEL_OK")
</pallas_src>

<mosaic_0001>
module attributes {stable_mosaic.version = 11 : i64} {
  func.func @_nanconv_kernel(%arg0: i32, %arg1: memref<1x4x18x18xf32, #tpu.memory_space<vmem>>, %arg2: memref<8x36xf32, #tpu.memory_space<vmem>>, %arg3: memref<8x1xf32, #tpu.memory_space<vmem>>, %arg4: memref<1x8x256xf32, #tpu.memory_space<vmem>>) attributes {dimension_semantics = [#tpu.dimension_semantics<parallel>], iteration_bounds = array<i64: 2>, scalar_prefetch = 0 : i64, scratch_operands = 0 : i64, tpu.core_type = #tpu.core_type<tc>, window_params = [{transform_indices = @transform_0, window_bounds = array<i64: 1, 4, 18, 18>}, {pipeline_mode = #tpu.pipeline_mode<synchronous>, transform_indices = @transform_1, window_bounds = array<i64: 8, 36>}, {pipeline_mode = #tpu.pipeline_mode<synchronous>, transform_indices = @transform_2, window_bounds = array<i64: 8, 1>}, {transform_indices = @transform_3, window_bounds = array<i64: 1, 8, 256>}]} {
    %c0 = arith.constant 0 : index
    %c0_0 = arith.constant 0 : index
    %c0_1 = arith.constant 0 : index
    %c0_2 = arith.constant 0 : index
    %0 = vector.load %arg1[%c0, %c0_0, %c0_1, %c0_2] : memref<1x4x18x18xf32, #tpu.memory_space<vmem>>, vector<1x4x18x18xf32>
    %1 = vector.shape_cast %0 : vector<1x4x18x18xf32> to vector<4x18x18xf32>
    %c0_3 = arith.constant 0 : index
    %c0_4 = arith.constant 0 : index
    %2 = vector.load %arg2[%c0_3, %c0_4] : memref<8x36xf32, #tpu.memory_space<vmem>>, vector<8x36xf32>
    %c0_5 = arith.constant 0 : index
    %c0_6 = arith.constant 0 : index
    %3 = vector.load %arg3[%c0_5, %c0_6] : memref<8x1xf32, #tpu.memory_space<vmem>>, vector<8x1xf32>
    %4 = arith.cmpf one, %1, %1 : vector<4x18x18xf32>
    %5 = arith.extui %4 : vector<4x18x18xi1> to vector<4x18x18xi32>
    %6 = arith.sitofp %5 : vector<4x18x18xi32> to vector<4x18x18xf32>
    %cst = arith.constant 0.000000e+00 : f32
    %7 = vector.broadcast %cst : f32 to vector<4x18x18xf32>
    %8 = arith.select %4, %7, %1 : vector<4x18x18xi1>, vector<4x18x18xf32>
    %9 = vector.extract_strided_slice %8 {offsets = [0, 0, 0], sizes = [4, 16, 16], strides = [1, 1, 1]} : vector<4x18x18xf32> to vector<4x16x16xf32>
    %10 = vector.shape_cast %9 : vector<4x16x16xf32> to vector<4x256xf32>
    %11 = vector.extract_strided_slice %6 {offsets = [0, 0, 0], sizes = [4, 16, 16], strides = [1, 1, 1]} : vector<4x18x18xf32> to vector<4x16x16xf32>
    %12 = vector.shape_cast %11 : vector<4x16x16xf32> to vector<4x256xf32>
    %13 = vector.extract_strided_slice %8 {offsets = [0, 0, 1], sizes = [4, 16, 16], strides = [1, 1, 1]} : vector<4x18x18xf32> to vector<4x16x16xf32>
    %14 = vector.shape_cast %13 : vector<4x16x16xf32> to vector<4x256xf32>
    %15 = vector.extract_strided_slice %6 {offsets = [0, 0, 1], sizes = [4, 16, 16], strides = [1, 1, 1]} : vector<4x18x18xf32> to vector<4x16x16xf32>
    %16 = vector.shape_cast %15 : vector<4x16x16xf32> to vector<4x256xf32>
    %17 = vector.extract_strided_slice %8 {offsets = [0, 0, 2], sizes = [4, 16, 16], strides = [1, 1, 1]} : vector<4x18x18xf32> to vector<4x16x16xf32>
    %18 = vector.shape_cast %17 : vector<4x16x16xf32> to vector<4x256xf32>
    %19 = vector.extract_strided_slice %6 {offsets = [0, 0, 2], sizes = [4, 16, 16], strides = [1, 1, 1]} : vector<4x18x18xf32> to vector<4x16x16xf32>
    %20 = vector.shape_cast %19 : vector<4x16x16xf32> to vector<4x256xf32>
    %21 = vector.extract_strided_slice %8 {offsets = [0, 1, 0], sizes = [4, 16, 16], strides = [1, 1, 1]} : vector<4x18x18xf32> to vector<4x16x16xf32>
    %22 = vector.shape_cast %21 : vector<4x16x16xf32> to vector<4x256xf32>
    %23 = vector.extract_strided_slice %6 {offsets = [0, 1, 0], sizes = [4, 16, 16], strides = [1, 1, 1]} : vector<4x18x18xf32> to vector<4x16x16xf32>
    %24 = vector.shape_cast %23 : vector<4x16x16xf32> to vector<4x256xf32>
    %25 = vector.extract_strided_slice %8 {offsets = [0, 1, 1], sizes = [4, 16, 16], strides = [1, 1, 1]} : vector<4x18x18xf32> to vector<4x16x16xf32>
    %26 = vector.shape_cast %25 : vector<4x16x16xf32> to vector<4x256xf32>
    %27 = vector.extract_strided_slice %6 {offsets = [0, 1, 1], sizes = [4, 16, 16], strides = [1, 1, 1]} : vector<4x18x18xf32> to vector<4x16x16xf32>
    %28 = vector.shape_cast %27 : vector<4x16x16xf32> to vector<4x256xf32>
    %29 = vector.extract_strided_slice %8 {offsets = [0, 1, 2], sizes = [4, 16, 16], strides = [1, 1, 1]} : vector<4x18x18xf32> to vector<4x16x16xf32>
    %30 = vector.shape_cast %29 : vector<4x16x16xf32> to vector<4x256xf32>
    %31 = vector.extract_strided_slice %6 {offsets = [0, 1, 2], sizes = [4, 16, 16], strides = [1, 1, 1]} : vector<4x18x18xf32> to vector<4x16x16xf32>
    %32 = vector.shape_cast %31 : vector<4x16x16xf32> to vector<4x256xf32>
    %33 = vector.extract_strided_slice %8 {offsets = [0, 2, 0], sizes = [4, 16, 16], strides = [1, 1, 1]} : vector<4x18x18xf32> to vector<4x16x16xf32>
    %34 = vector.shape_cast %33 : vector<4x16x16xf32> to vector<4x256xf32>
    %35 = vector.extract_strided_slice %6 {offsets = [0, 2, 0], sizes = [4, 16, 16], strides = [1, 1, 1]} : vector<4x18x18xf32> to vector<4x16x16xf32>
    %36 = vector.shape_cast %35 : vector<4x16x16xf32> to vector<4x256xf32>
    %37 = vector.extract_strided_slice %8 {offsets = [0, 2, 1], sizes = [4, 16, 16], strides = [1, 1, 1]} : vector<4x18x18xf32> to vector<4x16x16xf32>
    %38 = vector.shape_cast %37 : vector<4x16x16xf32> to vector<4x256xf32>
    %39 = vector.extract_strided_slice %6 {offsets = [0, 2, 1], sizes = [4, 16, 16], strides = [1, 1, 1]} : vector<4x18x18xf32> to vector<4x16x16xf32>
    %40 = vector.shape_cast %39 : vector<4x16x16xf32> to vector<4x256xf32>
    %41 = vector.extract_strided_slice %8 {offsets = [0, 2, 2], sizes = [4, 16, 16], strides = [1, 1, 1]} : vector<4x18x18xf32> to vector<4x16x16xf32>
    %42 = vector.shape_cast %41 : vector<4x16x16xf32> to vector<4x256xf32>
    %43 = vector.extract_strided_slice %6 {offsets = [0, 2, 2], sizes = [4, 16, 16], strides = [1, 1, 1]} : vector<4x18x18xf32> to vector<4x16x16xf32>
    %44 = vector.shape_cast %43 : vector<4x16x16xf32> to vector<4x256xf32>
    %45 = tpu.concatenate %10, %14, %18, %22, %26, %30, %34, %38, %42 in 0 : vector<4x256xf32>, vector<4x256xf32>, vector<4x256xf32>, vector<4x256xf32>, vector<4x256xf32>, vector<4x256xf32>, vector<4x256xf32>, vector<4x256xf32>, vector<4x256xf32> -> vector<36x256xf32>
    %46 = tpu.concatenate %12, %16, %20, %24, %28, %32, %36, %40, %44 in 0 : vector<4x256xf32>, vector<4x256xf32>, vector<4x256xf32>, vector<4x256xf32>, vector<4x256xf32>, vector<4x256xf32>, vector<4x256xf32>, vector<4x256xf32>, vector<4x256xf32> -> vector<36x256xf32>
    %cst_7 = arith.constant dense<0.000000e+00> : vector<256xf32>
    %47 = vector.multi_reduction <add>, %46, %cst_7 [0] : vector<36x256xf32> to vector<256xf32>
    %48 = vector.shape_cast %47 : vector<256xf32> to vector<1x256xf32>
    %cst_8 = arith.constant dense<0.000000e+00> : vector<256xf32>
    %49 = vector.multi_reduction <add>, %45, %cst_8 [0] : vector<36x256xf32> to vector<256xf32>
    %50 = vector.shape_cast %49 : vector<256xf32> to vector<1x256xf32>
    %cst_9 = arith.constant 3.600000e+01 : f32
    %51 = vector.broadcast %cst_9 : f32 to vector<1x256xf32>
    %52 = arith.subf %51, %48 : vector<1x256xf32>
    %cst_10 = arith.constant 1.000000e+00 : f32
    %53 = vector.broadcast %cst_10 : f32 to vector<1x256xf32>
    %54 = arith.maximumf %52, %53 : vector<1x256xf32>
    %55 = arith.divf %50, %54 : vector<1x256xf32>
    %cst_11 = arith.constant dense<0.000000e+00> : vector<8x256xf32>
    %56 = tpu.matmul %2, %45, %cst_11 {dimension_numbers = #tpu.dot_dimension_numbers<[1], [0], [0], [1], [0, 0, 1, 1], [], []>} : vector<8x36xf32>, vector<36x256xf32>, vector<8x256xf32> -> vector<8x256xf32>
    %cst_12 = arith.constant dense<0.000000e+00> : vector<8x256xf32>
    %57 = tpu.matmul %2, %46, %cst_12 {dimension_numbers = #tpu.dot_dimension_numbers<[1], [0], [0], [1], [0, 0, 1, 1], [], []>} : vector<8x36xf32>, vector<36x256xf32>, vector<8x256xf32> -> vector<8x256xf32>
    %58 = vector.broadcast %55 : vector<1x256xf32> to vector<8x256xf32>
    %59 = arith.mulf %58, %57 : vector<8x256xf32>
    %60 = arith.addf %56, %59 : vector<8x256xf32>
    %61 = vector.broadcast %3 : vector<8x1xf32> to vector<8x256xf32>
    %62 = arith.addf %60, %61 : vector<8x256xf32>
    %cst_13 = arith.constant 1.800000e+01 : f32
    %63 = vector.broadcast %cst_13 : f32 to vector<1x256xf32>
    %64 = arith.cmpf oge, %48, %63 : vector<1x256xf32>
    %cst_14 = arith.constant 3.600000e+01 : f32
    %65 = vector.broadcast %cst_14 : f32 to vector<1x256xf32>
    %66 = arith.cmpf oge, %48, %65 : vector<1x256xf32>
    %67 = arith.ori %64, %66 : vector<1x256xi1>
    %cst_15 = arith.constant 0x7FC00000 : f32
    %68 = vector.shape_cast %67 : vector<1x256xi1> to vector<1x256xi1>
    %69 = vector.broadcast %68 : vector<1x256xi1> to vector<8x256xi1>
    %70 = vector.broadcast %cst_15 : f32 to vector<8x256xf32>
    %71 = arith.select %69, %70, %62 : vector<8x256xi1>, vector<8x256xf32>
    %c0_16 = arith.constant 0 : index
    %c0_17 = arith.constant 0 : index
    %c0_18 = arith.constant 0 : index
    %72 = vector.load %arg4[%c0_16, %c0_17, %c0_18] : memref<1x8x256xf32, #tpu.memory_space<vmem>>, vector<1x8x256xf32>
    %73 = vector.shape_cast %72 : vector<1x8x256xf32> to vector<8x256xf32>
    %74 = vector.shape_cast %71 : vector<8x256xf32> to vector<1x8x256xf32>
    tpu.vector_store %arg4[%c0_16, %c0_17, %c0_18], %74 {strides = array<i32>} : memref<1x8x256xf32, #tpu.memory_space<vmem>>, vector<1x8x256xf32>,
    return
  }
  func.func @transform_0(%arg0: i32) -> (i32, i32, i32, i32) {
    %c0_i32 = arith.constant 0 : i32
    %c0_i32_0 = arith.constant 0 : i32
    %c0_i32_1 = arith.constant 0 : i32
    %c0_i32_2 = arith.constant 0 : i32
    return %arg0, %c0_i32, %c0_i32_0, %c0_i32_1 : i32, i32, i32, i32
  }
  func.func @transform_1(%arg0: i32) -> (i32, i32) {
    %c0_i32 = arith.constant 0 : i32
    %c0_i32_0 = arith.constant 0 : i32
    %c0_i32_1 = arith.constant 0 : i32
    return %c0_i32, %c0_i32_0 : i32, i32
  }
  func.func @transform_2(%arg0: i32) -> (i32, i32) {
    %c0_i32 = arith.constant 0 : i32
    %c0_i32_0 = arith.constant 0 : i32
    %c0_i32_1 = arith.constant 0 : i32
    return %c0_i32, %c0_i32_0 : i32, i32
  }
  func.func @transform_3(%arg0: i32) -> (i32, i32, i32) {
    %c0_i32 = arith.constant 0 : i32
    %c0_i32_0 = arith.constant 0 : i32
    %c0_i32_1 = arith.constant 0 : i32
    return %arg0, %c0_i32, %c0_i32_0 : i32, i32, i32
  }
}

</mosaic_0001>

<llo_original>
// kernel: tpu_custom_call.1
$region0: #{tpu_custom_call.1}
  #allocation0 [shape = 'u32[]', space=smem, size = 0x4, offset = 0x4, fixed_abs, tag = 'smem constant byte address 0x4 - core index']
  #allocation1 [shape = 'u32[144,128]{1,0:T(1,128)}', space=vmem, size = 0x12000, scoped, tag = 'internal scratch']
  %s0 = inlined_call_operand.vmem [shape: f32[2,4,18,18], index: 0, kind: input, shape index: {}]
  %s1 = inlined_call_operand.vmem [shape: f32[8,36], index: 1, kind: input, shape index: {}]
  %s2 = inlined_call_operand.vmem [shape: f32[8,1], index: 2, kind: input, shape index: {}]
  %s3 = inlined_call_operand.hbm [shape: f32[2,8,256], index: 3, kind: output, shape index: {}]
  %s4 = sld [smem:[#allocation0]]
  $region45: #{tpu_custom_call.1} parent=0
    _
  %s6 = ssub.s32 1, %s4
  %s7 = scalar_select 0, %s6, %s4
  $region1: #{tpu_custom_call.1} parent=0
    #allocation2 [shape = 'u8[16384]{0}', space=vmem, size = 0x4000, scoped, tag = 'output window, operand 0']
    #allocation3 [shape = 's32[2]{0}', space=sflag, size = 0x8, scoped, tag = 'scoped memory for tpu_custom_call.1']
    %8 = vsyncpa [#allocation3], 0
    %s9 = scalar_lea.sflag [#allocation3], 1
    %10 = vsyncpa %s9, 0
    loop: start=0, step=1, limit=4
    $region2: #{tpu_custom_call.1} parent=1 // loop_pre_header
      _
    $region3: #{tpu_custom_call.1} parent=1 // loop_header
      %s12 = sphi 0, %s16
      %p13 = scmp.ge.s32.totalorder %s12, 4
      %s22 = sphi 0, %s24
      %s25 = sphi 0, %s22
      %s26 = sphi 0, %s25
      %s42 = sphi 0, %s26
      %s46 = sphi 0, %s46
      %s48 = sphi 0, %s46
      %s49 = sphi 0, %s48
      %s63 = sphi 0, %s49
      %s67 = sphi 0, %s67
      %s69 = sphi 0, %s67
      %s70 = sphi 0, %s69
      %s84 = sphi 0, %s70
      %s90 = sphi 0, %s92
      %s93 = sphi 0, %s90
      %s94 = sphi 0, %s93
      %s110 = sphi 0, %s94
    $region4: #{tpu_custom_call.1} parent=1 // loop_header_branch
      %15 = sbr.rel (%p13) target = $region8
    $region5: #{tpu_custom_call.1} parent=1 // loop_body
      %s17 = ssub.s32 %s12, 1
      %s18 = ssub.s32 %s12, 2
      %s19 = sadd.s32 %s12, 1
      %s20 = ssub.s32 %s12, %s19
      %p21 = scmp.eq.s32.totalorder %s20, 0
      %s23 = sadd.s32 %s22, 1
      %s24 = scalar_select %p21, %s22, %s23
      %p27 = pneg %p21
      %p28 = scmp.eq.s32.totalorder %s12, 1
      %p29 = por %p27, %p28
      %p30 = scmp.ne.s32.totalorder %s22, %s25
      %p31 = scmp.eq.s32.totalorder %s12, 0
      %p32 = por %p30, %p31
      %p33 = scmp.ne.s32.totalorder %s22, %s25
      %p34 = scmp.eq.s32.totalorder %s17, 1
      %p35 = por %p33, %p34
      %p36 = scmp.ne.s32.totalorder %s25, %s26
      %p37 = scmp.eq.s32.totalorder %s17, 0
      %p38 = por %p36, %p37
      %p39 = scmp.ne.s32.totalorder %s25, %s26
      %p40 = scmp.eq.s32.totalorder %s18, 1
      %p41 = por %p39, %p40
      %p43 = scmp.ne.s32.totalorder %s26, %s42
      %p44 = scmp.eq.s32.totalorder %s18, 0
      %p45 = por %p43, %p44
      %s47 = sadd.s32 %s46, 1
      %p50 = scmp.eq.s32.totalorder %s12, 1
      %p51 = scmp.ne.s32.totalorder %s46, %s48
      %p52 = scmp.eq.s32.totalorder %s12, 0
      %p53 = por %p51, %p52
      %p54 = scmp.ne.s32.totalorder %s46, %s48
      %p55 = scmp.eq.s32.totalorder %s17, 1
      %p56 = por %p54, %p55
      %p57 = scmp.ne.s32.totalorder %s48, %s49
      %p58 = scmp.eq.s32.totalorder %s17, 0
      %p59 = por %p57, %p58
      %p60 = scmp.ne.s32.totalorder %s48, %s49
      %p61 = scmp.eq.s32.totalorder %s18, 1
      %p62 = por %p60, %p61
      %p64 = scmp.ne.s32.totalorder %s49, %s63
      %p65 = scmp.eq.s32.totalorder %s18, 0
      %p66 = por %p64, %p65
      %s68 = sadd.s32 %s67, 1
      %p71 = scmp.eq.s32.totalorder %s12, 1
      %p72 = scmp.ne.s32.totalorder %s67, %s69
      %p73 = scmp.eq.s32.totalorder %s12, 0
      %p74 = por %p72, %p73
      %p75 = scmp.ne.s32.totalorder %s67, %s69
      %p76 = scmp.eq.s32.totalorder %s17, 1
      %p77 = por %p75, %p76
      %p78 = scmp.ne.s32.totalorder %s69, %s70
      %p79 = scmp.eq.s32.totalorder %s17, 0
      %p80 = por %p78, %p79
      %p81 = scmp.ne.s32.totalorder %s69, %s70
      %p82 = scmp.eq.s32.totalorder %s18, 1
      %p83 = por %p81, %p82
      %p85 = scmp.ne.s32.totalorder %s70, %s84
      %p86 = scmp.eq.s32.totalorder %s18, 0
      %p87 = por %p85, %p86
      %s88 = ssub.s32 %s12, %s19
      %p89 = scmp.eq.s32.totalorder %s88, 0
      %s91 = sadd.s32 %s90, 1
      %s92 = scalar_select %p89, %s90, %s91
      %p95 = pneg %p89
      %p96 = scmp.eq.s32.totalorder %s12, 1
      %p97 = por %p95, %p96
      %p98 = scmp.ne.s32.totalorder %s90, %s93
      %p99 = scmp.eq.s32.totalorder %s12, 0
      %p100 = por %p98, %p99
      %p101 = scmp.ne.s32.totalorder %s90, %s93
      %p102 = scmp.eq.s32.totalorder %s17, 1
      %p103 = por %p101, %p102
      %p104 = scmp.ne.s32.totalorder %s93, %s94
      %p105 = scmp.eq.s32.totalorder %s17, 0
      %p106 = por %p104, %p105
      %p107 = scmp.ne.s32.totalorder %s93, %s94
      %p108 = scmp.eq.s32.totalorder %s18, 1
      %p109 = por %p107, %p108
      %p111 = scmp.ne.s32.totalorder %s94, %s110
      %p112 = scmp.eq.s32.totalorder %s18, 0
      %p113 = por %p111, %p112
      %p114 = scmp.le.s32.totalorder 1, %s12
      %p115 = scmp.lt.s32.totalorder %s12, 3
      %p116 = pnand %p114, %p115
      %p117 = pneg %p116
      // Predicated region
      $region9: #{tpu_custom_call.1} parent=5 // pred_check
        _
      $region10: #{tpu_custom_call.1} parent=5 // pred_check_branch
        %119 = sbr.rel (%p116) target = $region12
      $region11: #{tpu_custom_call.1} parent=5 // pred_region
        %s120 = ssub.s32 %s12, 1
        // Predicated region
        $region13: #{tpu_custom_call.1} parent=11 // pred_check
          %p121 = pneg %p59
        $region14: #{tpu_custom_call.1} parent=11 // pred_check_branch
          %123 = sbr.rel (%p121) target = $region16
        $region15: #{tpu_custom_call.1} parent=11 // pred_region
          _
        $region16: #{tpu_custom_call.1} parent=11 // pred_fallthru
          _
        // Predicated region
        $region17: #{tpu_custom_call.1} parent=11 // pred_check
          %p124 = pneg %p80
        $region18: #{tpu_custom_call.1} parent=11 // pred_check_branch
          %126 = sbr.rel (%p124) target = $region20
        $region19: #{tpu_custom_call.1} parent=11 // pred_region
          _
        $region20: #{tpu_custom_call.1} parent=11 // pred_fallthru
          _
      $region12: #{tpu_custom_call.1} parent=5 // pred_fallthru
        _
      %p127 = scmp.lt.s32.totalorder %s12, 2
      // Predicated region
      $region21: #{tpu_custom_call.1} parent=5 // pred_check
        %p128 = pneg %p127
      $region22: #{tpu_custom_call.1} parent=5 // pred_check_branch
        %130 = sbr.rel (%p128) target = $region24
      $region23: #{tpu_custom_call.1} parent=5 // pred_region
        // Predicated region
        $region25: #{tpu_custom_call.1} parent=23 // pred_check
          %p131 = pneg %p32
        $region26: #{tpu_custom_call.1} parent=23 // pred_check_branch
          %133 = sbr.rel (%p131) target = $region28
        $region27: #{tpu_custom_call.1} parent=23 // pred_region
          %p134 = scmp.lt.s32.totalorder %s12, 1
          %s135 = scalar_select %p134, %s12, 1
          %s136 = smul.addr %s135, 12
          %s137 = smul.addr %s136, 8
          %s138 = scalar_lea.vmem %s0, %s137
        $region28: #{tpu_custom_call.1} parent=23 // pred_fallthru
          _
      $region24: #{tpu_custom_call.1} parent=5 // pred_fallthru
        _
      %p139 = scmp.le.s32.totalorder 1, %s12
      %p140 = scmp.lt.s32.totalorder %s12, 3
      %p141 = pnand %p139, %p140
      %p142 = pneg %p141
      // Predicated region
      $region29: #{tpu_custom_call.1} parent=5 // pred_check
        _
      $region30: #{tpu_custom_call.1} parent=5 // pred_check_branch
        %144 = sbr.rel (%p141) target = $region32
      $region31: #{tpu_custom_call.1} parent=5 // pred_region
        %s145 = ssub.s32 %s12, 1
        %p146 = scmp.lt.s32.totalorder %s17, 1
        %s147 = scalar_select %p146, %s17, 1
        %s148 = smul.addr %s147, 12
        %s149 = smul.addr %s148, 8
        %s150 = scalar_lea.vmem %s0, %s149
        %p151 = pneg %p38
        %p152 = pneg %p35
        %p153 = pneg %p59
        %p154 = pneg %p56
        %p155 = pneg %p80
        %p156 = pneg %p77
        %p157 = pneg %p106
        %p158 = pneg %p103
        %s159 = sand.u32 %s93, 1
        %s160 = scalar_lea.sflag [#allocation3], %s159
        %s161 = sand.u32 %s93, 1
        %s162 = smul.addr %s161, 16
        %s163 = scalar_lea.vmem [#allocation2], %s162
        %p164 = scmp.lt.s32.totalorder %s17, 1
        %s165 = scalar_select %p164, %s17, 1
        %s166 = smul.addr %s165, 12
        %s167 = smul.addr %s166, 8
        %s168 = scalar_lea.vmem %s0, %s167
        %v169 = vld [vmem:[%s168] sm:$0xff]
        %v170 = vld [vmem:[%s168 + $0x8] sm:$0xff]
        %v171 = vld [vmem:[%s168 + $0x10] sm:$0x3]
        %v172 = vld [vmem:[%s168 + $0x18] sm:$0xff]
        %v173 = vld [vmem:[%s168 + $0x20] sm:$0xff]
        %v174 = vld [vmem:[%s168 + $0x28] sm:$0x3]
        %v175 = vld [vmem:[%s168 + $0x30] sm:$0xff]
        %v176 = vld [vmem:[%s168 + $0x38] sm:$0xff]
        %v177 = vld [vmem:[%s168 + $0x40] sm:$0x3]
        %v178 = vld [vmem:[%s168 + $0x48] sm:$0xff]
        %v179 = vld [vmem:[%s168 + $0x50] sm:$0xff]
        %v180 = vld [vmem:[%s168 + $0x58] sm:$0x3]
        %v181 = vld [vmem:[%s1] sm:$0xff]
        %v182 = vld [vmem:[%s2] sm:$0xff]
        %vm183 = vcmp.ne.f32.partialorder %v169, %v169
        %vm184 = vcmp.ne.f32.partialorder %v170, %v170
        %vm185 = vcmp.ne.f32.partialorder %v171, %v171
        %vm186 = vcmp.ne.f32.partialorder %v172, %v172
        %vm187 = vcmp.ne.f32.partialorder %v173, %v173
        %vm188 = vcmp.ne.f32.partialorder %v174, %v174
        %vm189 = vcmp.ne.f32.partialorder %v175, %v175
        %vm190 = vcmp.ne.f32.partialorder %v176, %v176
        %vm191 = vcmp.ne.f32.partialorder %v177, %v177
        %vm192 = vcmp.ne.f32.partialorder %v178, %v178
        %vm193 = vcmp.ne.f32.partialorder %v179, %v179
        %vm194 = vcmp.ne.f32.partialorder %v180, %v180
        %v195 = vsel %vm183, 1, 0
        %v196 = vsel %vm184, 1, 0
        %v197 = vsel %vm185, 1, 0
        %v198 = vsel %vm186, 1, 0
        %v199 = vsel %vm187, 1, 0
        %v200 = vsel %vm188, 1, 0
        %v201 = vsel %vm189, 1, 0
        %v202 = vsel %vm190, 1, 0
        %v203 = vsel %vm191, 1, 0
        %v204 = vsel %vm192, 1, 0
        %v205 = vsel %vm193, 1, 0
        %v206 = vsel %vm194, 1, 0
        %v207 = vcvt.s32.f32 %v195
        %v208 = vcvt.s32.f32 %v196
        %v209 = vcvt.s32.f32 %v197
        %v210 = vcvt.s32.f32 %v198
        %v211 = vcvt.s32.f32 %v199
        %v212 = vcvt.s32.f32 %v200
        %v213 = vcvt.s32.f32 %v201
        %v214 = vcvt.s32.f32 %v202
        %v215 = vcvt.s32.f32 %v203
        %v216 = vcvt.s32.f32 %v204
        %v217 = vcvt.s32.f32 %v205
        %v218 = vcvt.s32.f32 %v206
        %v219 = vsel %vm183, 0.0, %v169
        %v220 = vsel %vm184, 0.0, %v170
        %v221 = vsel %vm185, 0.0, %v171
        %v222 = vsel %vm186, 0.0, %v172
        %v223 = vsel %vm187, 0.0, %v173
        %v224 = vsel %vm188, 0.0, %v174
        %v225 = vsel %vm189, 0.0, %v175
        %v226 = vsel %vm190, 0.0, %v176
        %v227 = vsel %vm191, 0.0, %v177
        %v228 = vsel %vm192, 0.0, %v178
        %v229 = vsel %vm193, 0.0, %v179
        %v230 = vsel %vm194, 0.0, %v180
        %v231 = vcombine.low %v219, %v225
        %v232 = vcombine.high %v219, %v225
        %v234 = vunpack.c.l.s4 1983009808
        %v235 = vunpack.c.0.s8 %v234
        %v236 = vlaneseq
        %v237 = vshrl.u32 %v236, 7
        %v238 = vsub.s32 %v235, %v237
        %v239 = vrot.slane %v231, %v238
        %v241 = vunpack.c.l.s4 1983009808
        %v242 = vunpack.c.0.s8 %v241
        %v243 = vlaneseq
        %v244 = vshrl.u32 %v243, 7
        %v245 = vsub.s32 %v242, %v244
        %v246 = vrot.slane %v232, %v245
        %v247 = vcombine.low %v222, %v228
        %v248 = vcombine.high %v222, %v228
        %v250 = vunpack.c.l.s4 1983009808
        %v251 = vunpack.c.0.s8 %v250
        %v252 = vlaneseq
        %v253 = vshrl.u32 %v252, 7
        %v254 = vsub.s32 %v251, %v253
        %v255 = vrot.slane %v247, %v254
        %v257 = vunpack.c.l.s4 1983009808
        %v258 = vunpack.c.0.s8 %v257
        %v259 = vlaneseq
        %v260 = vshrl.u32 %v259, 7
        %v261 = vsub.s32 %v258, %v260
        %v262 = vrot.slane %v248, %v261
        %v263 = vcombine.low %v239, %v255
        %v264 = vcombine.high %v239, %v255
        %v266 = vunpack.c.l.s4 1934713408
        %v267 = vunpack.c.0.s8 %v266
        %v268 = vlaneseq
        %v269 = vshrl.u32 %v268, 7
        %v270 = vsub.s32 %v267, %v269
        %v271 = vrot.slane %v263, %v270
        %v273 = vunpack.c.l.s4 1934713408
        %v274 = vunpack.c.0.s8 %v273
        %v275 = vlaneseq
        %v276 = vshrl.u32 %v275, 7
        %v277 = vsub.s32 %v274, %v276
        %v278 = vrot.slane %v264, %v277
        %v279 = vcombine.low %v246, %v262
        %v280 = vcombine.high %v246, %v262
        %v282 = vunpack.c.l.s4 1934713408
        %v283 = vunpack.c.0.s8 %v282
        %v284 = vlaneseq
        %v285 = vshrl.u32 %v284, 7
        %v286 = vsub.s32 %v283, %v285
        %v287 = vrot.slane %v279, %v286
        %v289 = vunpack.c.l.s4 1934713408
        %v290 = vunpack.c.0.s8 %v289
        %v291 = vlaneseq
        %v292 = vshrl.u32 %v291, 7
        %v293 = vsub.s32 %v290, %v292
        %v294 = vrot.slane %v280, %v293
        %v295 = vcombine.high %v271, 0.0
        %v296 = vcombine.high %v278, 0.0
        %v297 = vcombine.high %v287, 0.0
        %v298 = vcombine.high %v294, 0.0
        %v299 = vcombine.low %v220, %v226
        %v300 = vcombine.high %v220, %v226
        %v302 = vunpack.c.l.s4 1983009808
        %v303 = vunpack.c.0.s8 %v302
        %v304 = vlaneseq
        %v305 = vshrl.u32 %v304, 7
        %v306 = vsub.s32 %v303, %v305
        %v307 = vrot.slane %v299, %v306
        %v309 = vunpack.c.l.s4 1983009808
        %v310 = vunpack.c.0.s8 %v309
        %v311 = vlaneseq
        %v312 = vshrl.u32 %v311, 7
        %v313 = vsub.s32 %v310, %v312
        %v314 = vrot.slane %v300, %v313
        %v315 = vcombine.low %v223, %v229
        %v316 = vcombine.high %v223, %v229
        %v318 = vunpack.c.l.s4 1983009808
        %v319 = vunpack.c.0.s8 %v318
        %v320 = vlaneseq
        %v321 = vshrl.u32 %v320, 7
        %v322 = vsub.s32 %v319, %v321
        %v323 = vrot.slane %v315, %v322
        %v325 = vunpack.c.l.s4 1983009808
        %v326 = vunpack.c.0.s8 %v325
        %v327 = vlaneseq
        %v328 = vshrl.u32 %v327, 7
        %v329 = vsub.s32 %v326, %v328
        %v330 = vrot.slane %v316, %v329
        %v331 = vcombine.low %v307, %v323
        %v332 = vcombine.high %v307, %v323
        %v334 = vunpack.c.l.s4 1934713408
        %v335 = vunpack.c.0.s8 %v334
        %v336 = vlaneseq
        %v337 = vshrl.u32 %v336, 7
        %v338 = vsub.s32 %v335, %v337
        %v339 = vrot.slane %v331, %v338
        %v341 = vunpack.c.l.s4 1934713408
        %v342 = vunpack.c.0.s8 %v341
        %v343 = vlaneseq
        %v344 = vshrl.u32 %v343, 7
        %v345 = vsub.s32 %v342, %v344
        %v346 = vrot.slane %v332, %v345
        %v347 = vcombine.low %v314, %v330
        %v348 = vcombine.high %v314, %v330
        %v350 = vunpack.c.l.s4 1934713408
        %v351 = vunpack.c.0.s8 %v350
        %v352 = vlaneseq
        %v353 = vshrl.u32 %v352, 7
        %v354 = vsub.s32 %v351, %v353
        %v355 = vrot.slane %v347, %v354
        %v357 = vunpack.c.l.s4 1934713408
        %v358 = vunpack.c.0.s8 %v357
        %v359 = vlaneseq
        %v360 = vshrl.u32 %v359, 7
        %v361 = vsub.s32 %v358, %v360
        %v362 = vrot.slane %v348, %v361
        %v363 = vcombine.high %v339, 0.0
        %v364 = vcombine.high %v346, 0.0
        %v365 = vcombine.high %v355, 0.0
        %v366 = vcombine.high %v362, 0.0
        %368 = vrot.lane.b32.xlu0 %v295, 16
        %v369 = vpop.permute.xlu0 %368
        %372 = vrot.lane.b32.xlu0 %v278, 32
        %v373 = vpop.permute.xlu0 %372
        %376 = vrot.lane.b32.xlu0 %v296, 48
        %v377 = vpop.permute.xlu0 %376
        %380 = vrot.lane.b32.xlu0 %v287, 64
        %v381 = vpop.permute.xlu0 %380
        %384 = vrot.lane.b32.xlu0 %v297, 80
        %v385 = vpop.permute.xlu0 %384
        %388 = vrot.lane.b32.xlu0 %v294, 96
        %v389 = vpop.permute.xlu0 %388
        %392 = vrot.lane.b32.xlu0 %v298, 112
        %v393 = vpop.permute.xlu0 %392
        %396 = vrot.lane.b32.xlu0 %v363, 16
        %v397 = vpop.permute.xlu0 %396
        %400 = vrot.lane.b32.xlu0 %v346, 32
        %v401 = vpop.permute.xlu0 %400
        %404 = vrot.lane.b32.xlu0 %v364, 48
        %v405 = vpop.permute.xlu0 %404
        %408 = vrot.lane.b32.xlu0 %v355, 64
        %v409 = vpop.permute.xlu0 %408
        %412 = vrot.lane.b32.xlu0 %v365, 80
        %v413 = vpop.permute.xlu0 %412
        %416 = vrot.lane.b32.xlu0 %v362, 96
        %v417 = vpop.permute.xlu0 %416
        %420 = vrot.lane.b32.xlu0 %v366, 112
        %v421 = vpop.permute.xlu0 %420
        %vm423 = vcmask 130048
        %v424 = vsel %vm423, %v271, %v369
        %vm425 = vcmask 261120
        %v426 = vsel %vm425, %v424, %v373
        %vm427 = vcmask 392192
        %v428 = vsel %vm427, %v426, %v377
        %vm429 = vcmask 523264
        %v430 = vsel %vm429, %v428, %v381
        %vm431 = vcmask 654336
        %v432 = vsel %vm431, %v430, %v385
        %vm433 = vcmask 785408
        %v434 = vsel %vm433, %v432, %v389
        %vm435 = vcmask 916480
        %v436 = vsel %vm435, %v434, %v393
        %v437 = vsel %vm423, %v339, %v397
        %v438 = vsel %vm425, %v437, %v401
        %v439 = vsel %vm427, %v438, %v405
        %v440 = vsel %vm429, %v439, %v409
        %v441 = vsel %vm431, %v440, %v413
        %v442 = vsel %vm433, %v441, %v417
        %v443 = vsel %vm435, %v442, %v421
        %v444 = vcombine.low %v207, %v213
        %v445 = vcombine.high %v207, %v213
        %v447 = vunpack.c.l.s4 1983009808
        %v448 = vunpack.c.0.s8 %v447
        %v449 = vlaneseq
        %v450 = vshrl.u32 %v449, 7
        %v451 = vsub.s32 %v448, %v450
        %v452 = vrot.slane %v444, %v451
        %v454 = vunpack.c.l.s4 1983009808
        %v455 = vunpack.c.0.s8 %v454
        %v456 = vlaneseq
        %v457 = vshrl.u32 %v456, 7
        %v458 = vsub.s32 %v455, %v457
        %v459 = vrot.slane %v445, %v458
        %v460 = vcombine.low %v210, %v216
        %v461 = vcombine.high %v210, %v216
        %v463 = vunpack.c.l.s4 1983009808
        %v464 = vunpack.c.0.s8 %v463
        %v465 = vlaneseq
        %v466 = vshrl.u32 %v465, 7
        %v467 = vsub.s32 %v464, %v466
        %v468 = vrot.slane %v460, %v467
        %v470 = vunpack.c.l.s4 1983009808
        %v471 = vunpack.c.0.s8 %v470
        %v472 = vlaneseq
        %v473 = vshrl.u32 %v472, 7
        %v474 = vsub.s32 %v471, %v473
        %v475 = vrot.slane %v461, %v474
        %v476 = vcombine.low %v452, %v468
        %v477 = vcombine.high %v452, %v468
        %v479 = vunpack.c.l.s4 1934713408
        %v480 = vunpack.c.0.s8 %v479
        %v481 = vlaneseq
        %v482 = vshrl.u32 %v481, 7
        %v483 = vsub.s32 %v480, %v482
        %v484 = vrot.slane %v476, %v483
        %v486 = vunpack.c.l.s4 1934713408
        %v487 = vunpack.c.0.s8 %v486
        %v488 = vlaneseq
        %v489 = vshrl.u32 %v488, 7
        %v490 = vsub.s32 %v487, %v489
        %v491 = vrot.slane %v477, %v490
        %v492 = vcombine.low %v459, %v475
        %v493 = vcombine.high %v459, %v475
        %v495 = vunpack.c.l.s4 1934713408
        %v496 = vunpack.c.0.s8 %v495
        %v497 = vlaneseq
        %v498 = vshrl.u32 %v497, 7
        %v499 = vsub.s32 %v496, %v498
        %v500 = vrot.slane %v492, %v499
        %v502 = vunpack.c.l.s4 1934713408
        %v503 = vunpack.c.0.s8 %v502
        %v504 = vlaneseq
        %v505 = vshrl.u32 %v504, 7
        %v506 = vsub.s32 %v503, %v505
        %v507 = vrot.slane %v493, %v506
        %v508 = vcombine.high %v484, 0.0
        %v509 = vcombine.high %v491, 0.0
        %v510 = vcombine.high %v500, 0.0
        %v511 = vcombine.high %v507, 0.0
        %v512 = vcombine.low %v208, %v214
        %v513 = vcombine.high %v208, %v214
        %v515 = vunpack.c.l.s4 1983009808
        %v516 = vunpack.c.0.s8 %v515
        %v517 = vlaneseq
        %v518 = vshrl.u32 %v517, 7
        %v519 = vsub.s32 %v516, %v518
        %v520 = vrot.slane %v512, %v519
        %v522 = vunpack.c.l.s4 1983009808
        %v523 = vunpack.c.0.s8 %v522
        %v524 = vlaneseq
        %v525 = vshrl.u32 %v524, 7
        %v526 = vsub.s32 %v523, %v525
        %v527 = vrot.slane %v513, %v526
        %v528 = vcombine.low %v211, %v217
        %v529 = vcombine.high %v211, %v217
        %v531 = vunpack.c.l.s4 1983009808
        %v532 = vunpack.c.0.s8 %v531
        %v533 = vlaneseq
        %v534 = vshrl.u32 %v533, 7
        %v535 = vsub.s32 %v532, %v534
        %v536 = vrot.slane %v528, %v535
        %v538 = vunpack.c.l.s4 1983009808
        %v539 = vunpack.c.0.s8 %v538
        %v540 = vlaneseq
        %v541 = vshrl.u32 %v540, 7
        %v542 = vsub.s32 %v539, %v541
        %v543 = vrot.slane %v529, %v542
        %v544 = vcombine.low %v520, %v536
        %v545 = vcombine.high %v520, %v536
        %v547 = vunpack.c.l.s4 1934713408
        %v548 = vunpack.c.0.s8 %v547
        %v549 = vlaneseq
        %v550 = vshrl.u32 %v549, 7
        %v551 = vsub.s32 %v548, %v550
        %v552 = vrot.slane %v544, %v551
        %v554 = vunpack.c.l.s4 1934713408
        %v555 = vunpack.c.0.s8 %v554
        %v556 = vlaneseq
        %v557 = vshrl.u32 %v556, 7
        %v558 = vsub.s32 %v555, %v557
        %v559 = vrot.slane %v545, %v558
        %v560 = vcombine.low %v527, %v543
        %v561 = vcombine.high %v527, %v543
        %v563 = vunpack.c.l.s4 1934713408
        %v564 = vunpack.c.0.s8 %v563
        %v565 = vlaneseq
        %v566 = vshrl.u32 %v565, 7
        %v567 = vsub.s32 %v564, %v566
        %v568 = vrot.slane %v560, %v567
        %v570 = vunpack.c.l.s4 1934713408
        %v571 = vunpack.c.0.s8 %v570
        %v572 = vlaneseq
        %v573 = vshrl.u32 %v572, 7
        %v574 = vsub.s32 %v571, %v573
        %v575 = vrot.slane %v561, %v574
        %v576 = vcombine.high %v552, 0.0
        %v577 = vcombine.high %v559, 0.0
        %v578 = vcombine.high %v568, 0.0
        %v579 = vcombine.high %v575, 0.0
        %581 = vrot.lane.b32.xlu0 %v508, 16
        %v582 = vpop.permute.xlu0 %581
        %585 = vrot.lane.b32.xlu0 %v491, 32
        %v586 = vpop.permute.xlu0 %585
        %589 = vrot.lane.b32.xlu0 %v509, 48
        %v590 = vpop.permute.xlu0 %589
        %593 = vrot.lane.b32.xlu0 %v500, 64
        %v594 = vpop.permute.xlu0 %593
        %597 = vrot.lane.b32.xlu0 %v510, 80
        %v598 = vpop.permute.xlu0 %597
        %601 = vrot.lane.b32.xlu0 %v507, 96
        %v602 = vpop.permute.xlu0 %601
        %605 = vrot.lane.b32.xlu0 %v511, 112
        %v606 = vpop.permute.xlu0 %605
        %609 = vrot.lane.b32.xlu0 %v576, 16
        %v610 = vpop.permute.xlu0 %609
        %613 = vrot.lane.b32.xlu0 %v559, 32
        %v614 = vpop.permute.xlu0 %613
        %617 = vrot.lane.b32.xlu0 %v577, 48
        %v618 = vpop.permute.xlu0 %617
        %621 = vrot.lane.b32.xlu0 %v568, 64
        %v622 = vpop.permute.xlu0 %621
        %625 = vrot.lane.b32.xlu0 %v578, 80
        %v626 = vpop.permute.xlu0 %625
        %629 = vrot.lane.b32.xlu0 %v575, 96
        %v630 = vpop.permute.xlu0 %629
        %633 = vrot.lane.b32.xlu0 %v579, 112
        %v634 = vpop.permute.xlu0 %633
        %v636 = vsel %vm423, %v484, %v582
        %v637 = vsel %vm425, %v636, %v586
        %v638 = vsel %vm427, %v637, %v590
        %v639 = vsel %vm429, %v638, %v594
        %v640 = vsel %vm431, %v639, %v598
        %v641 = vsel %vm433, %v640, %v602
        %v642 = vsel %vm435, %v641, %v606
        %v643 = vsel %vm423, %v552, %v610
        %v644 = vsel %vm425, %v643, %v614
        %v645 = vsel %vm427, %v644, %v618
        %v646 = vsel %vm429, %v645, %v622
        %v647 = vsel %vm431, %v646, %v626
        %v648 = vsel %vm433, %v647, %v630
        %v649 = vsel %vm435, %v648, %v634
        %658 = vrot.lane.b32.xlu0 %v219, 127
        %v659 = vpop.permute.xlu0 %658
        %660 = vrot.lane.b32.xlu0 %v220, 127
        %v661 = vpop.permute.xlu0 %660
        %662 = vrot.lane.b32.xlu0 %v222, 127
        %v663 = vpop.permute.xlu0 %662
        %664 = vrot.lane.b32.xlu0 %v223, 127
        %v665 = vpop.permute.xlu0 %664
        %666 = vrot.lane.b32.xlu0 %v225, 127
        %v667 = vpop.permute.xlu0 %666
        %668 = vrot.lane.b32.xlu0 %v226, 127
        %v669 = vpop.permute.xlu0 %668
        %670 = vrot.lane.b32.xlu0 %v228, 127
        %v671 = vpop.permute.xlu0 %670
        %672 = vrot.lane.b32.xlu0 %v229, 127
        %v673 = vpop.permute.xlu0 %672
        %v682 = vcombine.low %v659, %v667
        %v683 = vcombine.high %v659, %v667
        %v685 = vunpack.c.l.s4 1983009808
        %v686 = vunpack.c.0.s8 %v685
        %v687 = vlaneseq
        %v688 = vshrl.u32 %v687, 7
        %v689 = vsub.s32 %v686, %v688
        %v690 = vrot.slane %v682, %v689
        %v692 = vunpack.c.l.s4 1983009808
        %v693 = vunpack.c.0.s8 %v692
        %v694 = vlaneseq
        %v695 = vshrl.u32 %v694, 7
        %v696 = vsub.s32 %v693, %v695
        %v697 = vrot.slane %v683, %v696
        %v698 = vcombine.low %v663, %v671
        %v699 = vcombine.high %v663, %v671
        %v701 = vunpack.c.l.s4 1983009808
        %v702 = vunpack.c.0.s8 %v701
        %v703 = vlaneseq
        %v704 = vshrl.u32 %v703, 7
        %v705 = vsub.s32 %v702, %v704
        %v706 = vrot.slane %v698, %v705
        %v708 = vunpack.c.l.s4 1983009808
        %v709 = vunpack.c.0.s8 %v708
        %v710 = vlaneseq
        %v711 = vshrl.u32 %v710, 7
        %v712 = vsub.s32 %v709, %v711
        %v713 = vrot.slane %v699, %v712
        %v714 = vcombine.low %v690, %v706
        %v715 = vcombine.high %v690, %v706
        %v717 = vunpack.c.l.s4 1934713408
        %v718 = vunpack.c.0.s8 %v717
        %v719 = vlaneseq
        %v720 = vshrl.u32 %v719, 7
        %v721 = vsub.s32 %v718, %v720
        %v722 = vrot.slane %v714, %v721
        %v724 = vunpack.c.l.s4 1934713408
        %v725 = vunpack.c.0.s8 %v724
        %v726 = vlaneseq
        %v727 = vshrl.u32 %v726, 7
        %v728 = vsub.s32 %v725, %v727
        %v729 = vrot.slane %v715, %v728
        %v730 = vcombine.low %v697, %v713
        %v731 = vcombine.high %v697, %v713
        %v733 = vunpack.c.l.s4 1934713408
        %v734 = vunpack.c.0.s8 %v733
        %v735 = vlaneseq
        %v736 = vshrl.u32 %v735, 7
        %v737 = vsub.s32 %v734, %v736
        %v738 = vrot.slane %v730, %v737
        %v740 = vunpack.c.l.s4 1934713408
        %v741 = vunpack.c.0.s8 %v740
        %v742 = vlaneseq
        %v743 = vshrl.u32 %v742, 7
        %v744 = vsub.s32 %v741, %v743
        %v745 = vrot.slane %v731, %v744
        %v746 = vcombine.high %v722, 0.0
        %v747 = vcombine.high %v729, 0.0
        %v748 = vcombine.high %v738, 0.0
        %v749 = vcombine.high %v745, 0.0
        %v750 = vcombine.low %v661, %v669
        %v751 = vcombine.high %v661, %v669
        %v753 = vunpack.c.l.s4 1983009808
        %v754 = vunpack.c.0.s8 %v753
        %v755 = vlaneseq
        %v756 = vshrl.u32 %v755, 7
        %v757 = vsub.s32 %v754, %v756
        %v758 = vrot.slane %v750, %v757
        %v760 = vunpack.c.l.s4 1983009808
        %v761 = vunpack.c.0.s8 %v760
        %v762 = vlaneseq
        %v763 = vshrl.u32 %v762, 7
        %v764 = vsub.s32 %v761, %v763
        %v765 = vrot.slane %v751, %v764
        %v766 = vcombine.low %v665, %v673
        %v767 = vcombine.high %v665, %v673
        %v769 = vunpack.c.l.s4 1983009808
        %v770 = vunpack.c.0.s8 %v769
        %v771 = vlaneseq
        %v772 = vshrl.u32 %v771, 7
        %v773 = vsub.s32 %v770, %v772
        %v774 = vrot.slane %v766, %v773
        %v776 = vunpack.c.l.s4 1983009808
        %v777 = vunpack.c.0.s8 %v776
        %v778 = vlaneseq
        %v779 = vshrl.u32 %v778, 7
        %v780 = vsub.s32 %v777, %v779
        %v781 = vrot.slane %v767, %v780
        %v782 = vcombine.low %v758, %v774
        %v783 = vcombine.high %v758, %v774
        %v785 = vunpack.c.l.s4 1934713408
        %v786 = vunpack.c.0.s8 %v785
        %v787 = vlaneseq
        %v788 = vshrl.u32 %v787, 7
        %v789 = vsub.s32 %v786, %v788
        %v790 = vrot.slane %v782, %v789
        %v792 = vunpack.c.l.s4 1934713408
        %v793 = vunpack.c.0.s8 %v792
        %v794 = vlaneseq
        %v795 = vshrl.u32 %v794, 7
        %v796 = vsub.s32 %v793, %v795
        %v797 = vrot.slane %v783, %v796
        %v798 = vcombine.low %v765, %v781
        %v799 = vcombine.high %v765, %v781
        %v801 = vunpack.c.l.s4 1934713408
        %v802 = vunpack.c.0.s8 %v801
        %v803 = vlaneseq
        %v804 = vshrl.u32 %v803, 7
        %v805 = vsub.s32 %v802, %v804
        %v806 = vrot.slane %v798, %v805
        %v808 = vunpack.c.l.s4 1934713408
        %v809 = vunpack.c.0.s8 %v808
        %v810 = vlaneseq
        %v811 = vshrl.u32 %v810, 7
        %v812 = vsub.s32 %v809, %v811
        %v813 = vrot.slane %v799, %v812
        %v814 = vcombine.high %v790, 0.0
        %v815 = vcombine.high %v797, 0.0
        %v816 = vcombine.high %v806, 0.0
        %v817 = vcombine.high %v813, 0.0
        %819 = vrot.lane.b32.xlu0 %v746, 16
        %v820 = vpop.permute.xlu0 %819
        %823 = vrot.lane.b32.xlu0 %v729, 32
        %v824 = vpop.permute.xlu0 %823
        %827 = vrot.lane.b32.xlu0 %v747, 48
        %v828 = vpop.permute.xlu0 %827
        %831 = vrot.lane.b32.xlu0 %v738, 64
        %v832 = vpop.permute.xlu0 %831
        %835 = vrot.lane.b32.xlu0 %v748, 80
        %v836 = vpop.permute.xlu0 %835
        %839 = vrot.lane.b32.xlu0 %v745, 96
        %v840 = vpop.permute.xlu0 %839
        %843 = vrot.lane.b32.xlu0 %v749, 112
        %v844 = vpop.permute.xlu0 %843
        %847 = vrot.lane.b32.xlu0 %v814, 16
        %v848 = vpop.permute.xlu0 %847
        %851 = vrot.lane.b32.xlu0 %v797, 32
        %v852 = vpop.permute.xlu0 %851
        %855 = vrot.lane.b32.xlu0 %v815, 48
        %v856 = vpop.permute.xlu0 %855
        %859 = vrot.lane.b32.xlu0 %v806, 64
        %v860 = vpop.permute.xlu0 %859
        %863 = vrot.lane.b32.xlu0 %v816, 80
        %v864 = vpop.permute.xlu0 %863
        %867 = vrot.lane.b32.xlu0 %v813, 96
        %v868 = vpop.permute.xlu0 %867
        %871 = vrot.lane.b32.xlu0 %v817, 112
        %v872 = vpop.permute.xlu0 %871
        %v874 = vsel %vm423, %v722, %v820
        %v875 = vsel %vm425, %v874, %v824
        %v876 = vsel %vm427, %v875, %v828
        %v877 = vsel %vm429, %v876, %v832
        %v878 = vsel %vm431, %v877, %v836
        %v879 = vsel %vm433, %v878, %v840
        %v880 = vsel %vm435, %v879, %v844
        %v881 = vsel %vm423, %v790, %v848
        %v882 = vsel %vm425, %v881, %v852
        %v883 = vsel %vm427, %v882, %v856
        %v884 = vsel %vm429, %v883, %v860
        %v885 = vsel %vm431, %v884, %v864
        %v886 = vsel %vm433, %v885, %v868
        %v887 = vsel %vm435, %v886, %v872
        %896 = vrot.lane.b32.xlu0 %v207, 127
        %v897 = vpop.permute.xlu0 %896
        %898 = vrot.lane.b32.xlu0 %v208, 127
        %v899 = vpop.permute.xlu0 %898
        %900 = vrot.lane.b32.xlu0 %v210, 127
        %v901 = vpop.permute.xlu0 %900
        %902 = vrot.lane.b32.xlu0 %v211, 127
        %v903 = vpop.permute.xlu0 %902
        %904 = vrot.lane.b32.xlu0 %v213, 127
        %v905 = vpop.permute.xlu0 %904
        %906 = vrot.lane.b32.xlu0 %v214, 127
        %v907 = vpop.permute.xlu0 %906
        %908 = vrot.lane.b32.xlu0 %v216, 127
        %v909 = vpop.permute.xlu0 %908
        %910 = vrot.lane.b32.xlu0 %v217, 127
        %v911 = vpop.permute.xlu0 %910
        %v920 = vcombine.low %v897, %v905
        %v921 = vcombine.high %v897, %v905
        %v923 = vunpack.c.l.s4 1983009808
        %v924 = vunpack.c.0.s8 %v923
        %v925 = vlaneseq
        %v926 = vshrl.u32 %v925, 7
        %v927 = vsub.s32 %v924, %v926
        %v928 = vrot.slane %v920, %v927
        %v930 = vunpack.c.l.s4 1983009808
        %v931 = vunpack.c.0.s8 %v930
        %v932 = vlaneseq
        %v933 = vshrl.u32 %v932, 7
        %v934 = vsub.s32 %v931, %v933
        %v935 = vrot.slane %v921, %v934
        %v936 = vcombine.low %v901, %v909
        %v937 = vcombine.high %v901, %v909
        %v939 = vunpack.c.l.s4 1983009808
        %v940 = vunpack.c.0.s8 %v939
        %v941 = vlaneseq
        %v942 = vshrl.u32 %v941, 7
        %v943 = vsub.s32 %v940, %v942
        %v944 = vrot.slane %v936, %v943
        %v946 = vunpack.c.l.s4 1983009808
        %v947 = vunpack.c.0.s8 %v946
        %v948 = vlaneseq
        %v949 = vshrl.u32 %v948, 7
        %v950 = vsub.s32 %v947, %v949
        %v951 = vrot.slane %v937, %v950
        %v952 = vcombine.low %v928, %v944
        %v953 = vcombine.high %v928, %v944
        %v955 = vunpack.c.l.s4 1934713408
        %v956 = vunpack.c.0.s8 %v955
        %v957 = vlaneseq
        %v958 = vshrl.u32 %v957, 7
        %v959 = vsub.s32 %v956, %v958
        %v960 = vrot.slane %v952, %v959
        %v962 = vunpack.c.l.s4 1934713408
        %v963 = vunpack.c.0.s8 %v962
        %v964 = vlaneseq
        %v965 = vshrl.u32 %v964, 7
        %v966 = vsub.s32 %v963, %v965
        %v967 = vrot.slane %v953, %v966
        %v968 = vcombine.low %v935, %v951
        %v969 = vcombine.high %v935, %v951
        %v971 = vunpack.c.l.s4 1934713408
        %v972 = vunpack.c.0.s8 %v971
        %v973 = vlaneseq
        %v974 = vshrl.u32 %v973, 7
        %v975 = vsub.s32 %v972, %v974
        %v976 = vrot.slane %v968, %v975
        %v978 = vunpack.c.l.s4 1934713408
        %v979 = vunpack.c.0.s8 %v978
        %v980 = vlaneseq
        %v981 = vshrl.u32 %v980, 7
        %v982 = vsub.s32 %v979, %v981
        %v983 = vrot.slane %v969, %v982
        %v984 = vcombine.high %v960, 0.0
        %v985 = vcombine.high %v967, 0.0
        %v986 = vcombine.high %v976, 0.0
        %v987 = vcombine.high %v983, 0.0
        %v988 = vcombine.low %v899, %v907
        %v989 = vcombine.high %v899, %v907
        %v991 = vunpack.c.l.s4 1983009808
        %v992 = vunpack.c.0.s8 %v991
        %v993 = vlaneseq
        %v994 = vshrl.u32 %v993, 7
        %v995 = vsub.s32 %v992, %v994
        %v996 = vrot.slane %v988, %v995
        %v998 = vunpack.c.l.s4 1983009808
        %v999 = vunpack.c.0.s8 %v998
        %v1000 = vlaneseq
        %v1001 = vshrl.u32 %v1000, 7
        %v1002 = vsub.s32 %v999, %v1001
        %v1003 = vrot.slane %v989, %v1002
        %v1004 = vcombine.low %v903, %v911
        %v1005 = vcombine.high %v903, %v911
        %v1007 = vunpack.c.l.s4 1983009808
        %v1008 = vunpack.c.0.s8 %v1007
        %v1009 = vlaneseq
        %v1010 = vshrl.u32 %v1009, 7
        %v1011 = vsub.s32 %v1008, %v1010
        %v1012 = vrot.slane %v1004, %v1011
        %v1014 = vunpack.c.l.s4 1983009808
        %v1015 = vunpack.c.0.s8 %v1014
        %v1016 = vlaneseq
        %v1017 = vshrl.u32 %v1016, 7
        %v1018 = vsub.s32 %v1015, %v1017
        %v1019 = vrot.slane %v1005, %v1018
        %v1020 = vcombine.low %v996, %v1012
        %v1021 = vcombine.high %v996, %v1012
        %v1023 = vunpack.c.l.s4 1934713408
        %v1024 = vunpack.c.0.s8 %v1023
        %v1025 = vlaneseq
        %v1026 = vshrl.u32 %v1025, 7
        %v1027 = vsub.s32 %v1024, %v1026
        %v1028 = vrot.slane %v1020, %v1027
        %v1030 = vunpack.c.l.s4 1934713408
        %v1031 = vunpack.c.0.s8 %v1030
        %v1032 = vlaneseq
        %v1033 = vshrl.u32 %v1032, 7
        %v1034 = vsub.s32 %v1031, %v1033
        %v1035 = vrot.slane %v1021, %v1034
        %v1036 = vcombine.low %v1003, %v1019
        %v1037 = vcombine.high %v1003, %v1019
        %v1039 = vunpack.c.l.s4 1934713408
        %v1040 = vunpack.c.0.s8 %v1039
        %v1041 = vlaneseq
        %v1042 = vshrl.u32 %v1041, 7
        %v1043 = vsub.s32 %v1040, %v1042
        %v1044 = vrot.slane %v1036, %v1043
        %v1046 = vunpack.c.l.s4 1934713408
        %v1047 = vunpack.c.0.s8 %v1046
        %v1048 = vlaneseq
        %v1049 = vshrl.u32 %v1048, 7
        %v1050 = vsub.s32 %v1047, %v1049
        %v1051 = vrot.slane %v1037, %v1050
        %v1052 = vcombine.high %v1028, 0.0
        %v1053 = vcombine.high %v1035, 0.0
        %v1054 = vcombine.high %v1044, 0.0
        %v1055 = vcombine.high %v1051, 0.0
        %1057 = vrot.lane.b32.xlu0 %v984, 16
        %v1058 = vpop.permute.xlu0 %1057
        %1061 = vrot.lane.b32.xlu0 %v967, 32
        %v1062 = vpop.permute.xlu0 %1061
        %1065 = vrot.lane.b32.xlu0 %v985, 48
        %v1066 = vpop.permute.xlu0 %1065
        %1069 = vrot.lane.b32.xlu0 %v976, 64
        %v1070 = vpop.permute.xlu0 %1069
        %1073 = vrot.lane.b32.xlu0 %v986, 80
        %v1074 = vpop.permute.xlu0 %1073
        %1077 = vrot.lane.b32.xlu0 %v983, 96
        %v1078 = vpop.permute.xlu0 %1077
        %1081 = vrot.lane.b32.xlu0 %v987, 112
        %v1082 = vpop.permute.xlu0 %1081
        %1085 = vrot.lane.b32.xlu0 %v1052, 16
        %v1086 = vpop.permute.xlu0 %1085
        %1089 = vrot.lane.b32.xlu0 %v1035, 32
        %v1090 = vpop.permute.xlu0 %1089
        %1093 = vrot.lane.b32.xlu0 %v1053, 48
        %v1094 = vpop.permute.xlu0 %1093
        %1097 = vrot.lane.b32.xlu0 %v1044, 64
        %v1098 = vpop.permute.xlu0 %1097
        %1101 = vrot.lane.b32.xlu0 %v1054, 80
        %v1102 = vpop.permute.xlu0 %1101
        %1105 = vrot.lane.b32.xlu0 %v1051, 96
        %v1106 = vpop.permute.xlu0 %1105
        %1109 = vrot.lane.b32.xlu0 %v1055, 112
        %v1110 = vpop.permute.xlu0 %1109
        %v1112 = vsel %vm423, %v960, %v1058
        %v1113 = vsel %vm425, %v1112, %v1062
        %v1114 = vsel %vm427, %v1113, %v1066
        %v1115 = vsel %vm429, %v1114, %v1070
        %v1116 = vsel %vm431, %v1115, %v1074
        %v1117 = vsel %vm433, %v1116, %v1078
        %v1118 = vsel %vm435, %v1117, %v1082
        %v1119 = vsel %vm423, %v1028, %v1086
        %v1120 = vsel %vm425, %v1119, %v1090
        %v1121 = vsel %vm427, %v1120, %v1094
        %v1122 = vsel %vm429, %v1121, %v1098
        %v1123 = vsel %vm431, %v1122, %v1102
        %v1124 = vsel %vm433, %v1123, %v1106
        %v1125 = vsel %vm435, %v1124, %v1110
        %1126 = vrot.lane.b32.xlu0 %v219, 126
        %v1127 = vpop.permute.xlu0 %1126
        %1128 = vrot.lane.b32.xlu0 %v220, 126
        %v1129 = vpop.permute.xlu0 %1128
        %1130 = vrot.lane.b32.xlu0 %v222, 126
        %v1131 = vpop.permute.xlu0 %1130
        %1132 = vrot.lane.b32.xlu0 %v223, 126
        %v1133 = vpop.permute.xlu0 %1132
        %1134 = vrot.lane.b32.xlu0 %v225, 126
        %v1135 = vpop.permute.xlu0 %1134
        %1136 = vrot.lane.b32.xlu0 %v226, 126
        %v1137 = vpop.permute.xlu0 %1136
        %1138 = vrot.lane.b32.xlu0 %v228, 126
        %v1139 = vpop.permute.xlu0 %1138
        %1140 = vrot.lane.b32.xlu0 %v229, 126
        %v1141 = vpop.permute.xlu0 %1140
        %v1150 = vcombine.low %v1127, %v1135
        %v1151 = vcombine.high %v1127, %v1135
        %v1153 = vunpack.c.l.s4 1983009808
        %v1154 = vunpack.c.0.s8 %v1153
        %v1155 = vlaneseq
        %v1156 = vshrl.u32 %v1155, 7
        %v1157 = vsub.s32 %v1154, %v1156
        %v1158 = vrot.slane %v1150, %v1157
        %v1160 = vunpack.c.l.s4 1983009808
        %v1161 = vunpack.c.0.s8 %v1160
        %v1162 = vlaneseq
        %v1163 = vshrl.u32 %v1162, 7
        %v1164 = vsub.s32 %v1161, %v1163
        %v1165 = vrot.slane %v1151, %v1164
        %v1166 = vcombine.low %v1131, %v1139
        %v1167 = vcombine.high %v1131, %v1139
        %v1169 = vunpack.c.l.s4 1983009808
        %v1170 = vunpack.c.0.s8 %v1169
        %v1171 = vlaneseq
        %v1172 = vshrl.u32 %v1171, 7
        %v1173 = vsub.s32 %v1170, %v1172
        %v1174 = vrot.slane %v1166, %v1173
        %v1176 = vunpack.c.l.s4 1983009808
        %v1177 = vunpack.c.0.s8 %v1176
        %v1178 = vlaneseq
        %v1179 = vshrl.u32 %v1178, 7
        %v1180 = vsub.s32 %v1177, %v1179
        %v1181 = vrot.slane %v1167, %v1180
        %v1182 = vcombine.low %v1158, %v1174
        %v1183 = vcombine.high %v1158, %v1174
        %v1185 = vunpack.c.l.s4 1934713408
        %v1186 = vunpack.c.0.s8 %v1185
        %v1187 = vlaneseq
        %v1188 = vshrl.u32 %v1187, 7
        %v1189 = vsub.s32 %v1186, %v1188
        %v1190 = vrot.slane %v1182, %v1189
        %v1192 = vunpack.c.l.s4 1934713408
        %v1193 = vunpack.c.0.s8 %v1192
        %v1194 = vlaneseq
        %v1195 = vshrl.u32 %v1194, 7
        %v1196 = vsub.s32 %v1193, %v1195
        %v1197 = vrot.slane %v1183, %v1196
        %v1198 = vcombine.low %v1165, %v1181
        %v1199 = vcombine.high %v1165, %v1181
        %v1201 = vunpack.c.l.s4 1934713408
        %v1202 = vunpack.c.0.s8 %v1201
        %v1203 = vlaneseq
        %v1204 = vshrl.u32 %v1203, 7
        %v1205 = vsub.s32 %v1202, %v1204
        %v1206 = vrot.slane %v1198, %v1205
        %v1208 = vunpack.c.l.s4 1934713408
        %v1209 = vunpack.c.0.s8 %v1208
        %v1210 = vlaneseq
        %v1211 = vshrl.u32 %v1210, 7
        %v1212 = vsub.s32 %v1209, %v1211
        %v1213 = vrot.slane %v1199, %v1212
        %v1214 = vcombine.high %v1190, 0.0
        %v1215 = vcombine.high %v1197, 0.0
        %v1216 = vcombine.high %v1206, 0.0
        %v1217 = vcombine.high %v1213, 0.0
        %v1218 = vcombine.low %v1129, %v1137
        %v1219 = vcombine.high %v1129, %v1137
        %v1221 = vunpack.c.l.s4 1983009808
        %v1222 = vunpack.c.0.s8 %v1221
        %v1223 = vlaneseq
        %v1224 = vshrl.u32 %v1223, 7
        %v1225 = vsub.s32 %v1222, %v1224
        %v1226 = vrot.slane %v1218, %v1225
        %v1228 = vunpack.c.l.s4 1983009808
        %v1229 = vunpack.c.0.s8 %v1228
        %v1230 = vlaneseq
        %v1231 = vshrl.u32 %v1230, 7
        %v1232 = vsub.s32 %v1229, %v1231
        %v1233 = vrot.slane %v1219, %v1232
        %v1234 = vcombine.low %v1133, %v1141
        %v1235 = vcombine.high %v1133, %v1141
        %v1237 = vunpack.c.l.s4 1983009808
        %v1238 = vunpack.c.0.s8 %v1237
        %v1239 = vlaneseq
        %v1240 = vshrl.u32 %v1239, 7
        %v1241 = vsub.s32 %v1238, %v1240
        %v1242 = vrot.slane %v1234, %v1241
        %v1244 = vunpack.c.l.s4 1983009808
        %v1245 = vunpack.c.0.s8 %v1244
        %v1246 = vlaneseq
        %v1247 = vshrl.u32 %v1246, 7
        %v1248 = vsub.s32 %v1245, %v1247
        %v1249 = vrot.slane %v1235, %v1248
        %v1250 = vcombine.low %v1226, %v1242
        %v1251 = vcombine.high %v1226, %v1242
        %v1253 = vunpack.c.l.s4 1934713408
        %v1254 = vunpack.c.0.s8 %v1253
        %v1255 = vlaneseq
        %v1256 = vshrl.u32 %v1255, 7
        %v1257 = vsub.s32 %v1254, %v1256
        %v1258 = vrot.slane %v1250, %v1257
        %v1260 = vunpack.c.l.s4 1934713408
        %v1261 = vunpack.c.0.s8 %v1260
        %v1262 = vlaneseq
        %v1263 = vshrl.u32 %v1262, 7
        %v1264 = vsub.s32 %v1261, %v1263
        %v1265 = vrot.slane %v1251, %v1264
        %v1266 = vcombine.low %v1233, %v1249
        %v1267 = vcombine.high %v1233, %v1249
        %v1269 = vunpack.c.l.s4 1934713408
        %v1270 = vunpack.c.0.s8 %v1269
        %v1271 = vlaneseq
        %v1272 = vshrl.u32 %v1271, 7
        %v1273 = vsub.s32 %v1270, %v1272
        %v1274 = vrot.slane %v1266, %v1273
        %v1276 = vunpack.c.l.s4 1934713408
        %v1277 = vunpack.c.0.s8 %v1276
        %v1278 = vlaneseq
        %v1279 = vshrl.u32 %v1278, 7
        %v1280 = vsub.s32 %v1277, %v1279
        %v1281 = vrot.slane %v1267, %v1280
        %v1282 = vcombine.high %v1258, 0.0
        %v1283 = vcombine.high %v1265, 0.0
        %v1284 = vcombine.high %v1274, 0.0
        %v1285 = vcombine.high %v1281, 0.0
        %1287 = vrot.lane.b32.xlu0 %v1214, 16
        %v1288 = vpop.permute.xlu0 %1287
        %1291 = vrot.lane.b32.xlu0 %v1197, 32
        %v1292 = vpop.permute.xlu0 %1291
        %1295 = vrot.lane.b32.xlu0 %v1215, 48
        %v1296 = vpop.permute.xlu0 %1295
        %1299 = vrot.lane.b32.xlu0 %v1206, 64
        %v1300 = vpop.permute.xlu0 %1299
        %1303 = vrot.lane.b32.xlu0 %v1216, 80
        %v1304 = vpop.permute.xlu0 %1303
        %1307 = vrot.lane.b32.xlu0 %v1213, 96
        %v1308 = vpop.permute.xlu0 %1307
        %1311 = vrot.lane.b32.xlu0 %v1217, 112
        %v1312 = vpop.permute.xlu0 %1311
        %1315 = vrot.lane.b32.xlu0 %v1282, 16
        %v1316 = vpop.permute.xlu0 %1315
        %1319 = vrot.lane.b32.xlu0 %v1265, 32
        %v1320 = vpop.permute.xlu0 %1319
        %1323 = vrot.lane.b32.xlu0 %v1283, 48
        %v1324 = vpop.permute.xlu0 %1323
        %1327 = vrot.lane.b32.xlu0 %v1274, 64
        %v1328 = vpop.permute.xlu0 %1327
        %1331 = vrot.lane.b32.xlu0 %v1284, 80
        %v1332 = vpop.permute.xlu0 %1331
        %1335 = vrot.lane.b32.xlu0 %v1281, 96
        %v1336 = vpop.permute.xlu0 %1335
        %1339 = vrot.lane.b32.xlu0 %v1285, 112
        %v1340 = vpop.permute.xlu0 %1339
        %v1342 = vsel %vm423, %v1190, %v1288
        %v1343 = vsel %vm425, %v1342, %v1292
        %v1344 = vsel %vm427, %v1343, %v1296
        %v1345 = vsel %vm429, %v1344, %v1300
        %v1346 = vsel %vm431, %v1345, %v1304
        %v1347 = vsel %vm433, %v1346, %v1308
        %v1348 = vsel %vm435, %v1347, %v1312
        %v1349 = vsel %vm423, %v1258, %v1316
        %v1350 = vsel %vm425, %v1349, %v1320
        %v1351 = vsel %vm427, %v1350, %v1324
        %v1352 = vsel %vm429, %v1351, %v1328
        %v1353 = vsel %vm431, %v1352, %v1332
        %v1354 = vsel %vm433, %v1353, %v1336
        %v1355 = vsel %vm435, %v1354, %v1340
        %1356 = vrot.lane.b32.xlu0 %v207, 126
        %v1357 = vpop.permute.xlu0 %1356
        %1358 = vrot.lane.b32.xlu0 %v208, 126
        %v1359 = vpop.permute.xlu0 %1358
        %1360 = vrot.lane.b32.xlu0 %v210, 126
        %v1361 = vpop.permute.xlu0 %1360
        %1362 = vrot.lane.b32.xlu0 %v211, 126
        %v1363 = vpop.permute.xlu0 %1362
        %1364 = vrot.lane.b32.xlu0 %v213, 126
        %v1365 = vpop.permute.xlu0 %1364
        %1366 = vrot.lane.b32.xlu0 %v214, 126
        %v1367 = vpop.permute.xlu0 %1366
        %1368 = vrot.lane.b32.xlu0 %v216, 126
        %v1369 = vpop.permute.xlu0 %1368
        %1370 = vrot.lane.b32.xlu0 %v217, 126
        %v1371 = vpop.permute.xlu0 %1370
        %v1380 = vcombine.low %v1357, %v1365
        %v1381 = vcombine.high %v1357, %v1365
        %v1383 = vunpack.c.l.s4 1983009808
        %v1384 = vunpack.c.0.s8 %v1383
        %v1385 = vlaneseq
        %v1386 = vshrl.u32 %v1385, 7
        %v1387 = vsub.s32 %v1384, %v1386
        %v1388 = vrot.slane %v1380, %v1387
        %v1390 = vunpack.c.l.s4 1983009808
        %v1391 = vunpack.c.0.s8 %v1390
        %v1392 = vlaneseq
        %v1393 = vshrl.u32 %v1392, 7
        %v1394 = vsub.s32 %v1391, %v1393
        %v1395 = vrot.slane %v1381, %v1394
        %v1396 = vcombine.low %v1361, %v1369
        %v1397 = vcombine.high %v1361, %v1369
        %v1399 = vunpack.c.l.s4 1983009808
        %v1400 = vunpack.c.0.s8 %v1399
        %v1401 = vlaneseq
        %v1402 = vshrl.u32 %v1401, 7
        %v1403 = vsub.s32 %v1400, %v1402
        %v1404 = vrot.slane %v1396, %v1403
        %v1406 = vunpack.c.l.s4 1983009808
        %v1407 = vunpack.c.0.s8 %v1406
        %v1408 = vlaneseq
        %v1409 = vshrl.u32 %v1408, 7
        %v1410 = vsub.s32 %v1407, %v1409
        %v1411 = vrot.slane %v1397, %v1410
        %v1412 = vcombine.low %v1388, %v1404
        %v1413 = vcombine.high %v1388, %v1404
        %v1415 = vunpack.c.l.s4 1934713408
        %v1416 = vunpack.c.0.s8 %v1415
        %v1417 = vlaneseq
        %v1418 = vshrl.u32 %v1417, 7
        %v1419 = vsub.s32 %v1416, %v1418
        %v1420 = vrot.slane %v1412, %v1419
        %v1422 = vunpack.c.l.s4 1934713408
        %v1423 = vunpack.c.0.s8 %v1422
        %v1424 = vlaneseq
        %v1425 = vshrl.u32 %v1424, 7
        %v1426 = vsub.s32 %v1423, %v1425
        %v1427 = vrot.slane %v1413, %v1426
        %v1428 = vcombine.low %v1395, %v1411
        %v1429 = vcombine.high %v1395, %v1411
        %v1431 = vunpack.c.l.s4 1934713408
        %v1432 = vunpack.c.0.s8 %v1431
        %v1433 = vlaneseq
        %v1434 = vshrl.u32 %v1433, 7
        %v1435 = vsub.s32 %v1432, %v1434
        %v1436 = vrot.slane %v1428, %v1435
        %v1438 = vunpack.c.l.s4 1934713408
        %v1439 = vunpack.c.0.s8 %v1438
        %v1440 = vlaneseq
        %v1441 = vshrl.u32 %v1440, 7
        %v1442 = vsub.s32 %v1439, %v1441
        %v1443 = vrot.slane %v1429, %v1442
        %v1444 = vcombine.high %v1420, 0.0
        %v1445 = vcombine.high %v1427, 0.0
        %v1446 = vcombine.high %v1436, 0.0
        %v1447 = vcombine.high %v1443, 0.0
        %v1448 = vcombine.low %v1359, %v1367
        %v1449 = vcombine.high %v1359, %v1367
        %v1451 = vunpack.c.l.s4 1983009808
        %v1452 = vunpack.c.0.s8 %v1451
        %v1453 = vlaneseq
        %v1454 = vshrl.u32 %v1453, 7
        %v1455 = vsub.s32 %v1452, %v1454
        %v1456 = vrot.slane %v1448, %v1455
        %v1458 = vunpack.c.l.s4 1983009808
        %v1459 = vunpack.c.0.s8 %v1458
        %v1460 = vlaneseq
        %v1461 = vshrl.u32 %v1460, 7
        %v1462 = vsub.s32 %v1459, %v1461
        %v1463 = vrot.slane %v1449, %v1462
        %v1464 = vcombine.low %v1363, %v1371
        %v1465 = vcombine.high %v1363, %v1371
        %v1467 = vunpack.c.l.s4 1983009808
        %v1468 = vunpack.c.0.s8 %v1467
        %v1469 = vlaneseq
        %v1470 = vshrl.u32 %v1469, 7
        %v1471 = vsub.s32 %v1468, %v1470
        %v1472 = vrot.slane %v1464, %v1471
        %v1474 = vunpack.c.l.s4 1983009808
        %v1475 = vunpack.c.0.s8 %v1474
        %v1476 = vlaneseq
        %v1477 = vshrl.u32 %v1476, 7
        %v1478 = vsub.s32 %v1475, %v1477
        %v1479 = vrot.slane %v1465, %v1478
        %v1480 = vcombine.low %v1456, %v1472
        %v1481 = vcombine.high %v1456, %v1472
        %v1483 = vunpack.c.l.s4 1934713408
        %v1484 = vunpack.c.0.s8 %v1483
        %v1485 = vlaneseq
        %v1486 = vshrl.u32 %v1485, 7
        %v1487 = vsub.s32 %v1484, %v1486
        %v1488 = vrot.slane %v1480, %v1487
        %v1490 = vunpack.c.l.s4 1934713408
        %v1491 = vunpack.c.0.s8 %v1490
        %v1492 = vlaneseq
        %v1493 = vshrl.u32 %v1492, 7
        %v1494 = vsub.s32 %v1491, %v1493
        %v1495 = vrot.slane %v1481, %v1494
        %v1496 = vcombine.low %v1463, %v1479
        %v1497 = vcombine.high %v1463, %v1479
        %v1499 = vunpack.c.l.s4 1934713408
        %v1500 = vunpack.c.0.s8 %v1499
        %v1501 = vlaneseq
        %v1502 = vshrl.u32 %v1501, 7
        %v1503 = vsub.s32 %v1500, %v1502
        %v1504 = vrot.slane %v1496, %v1503
        %v1506 = vunpack.c.l.s4 1934713408
        %v1507 = vunpack.c.0.s8 %v1506
        %v1508 = vlaneseq
        %v1509 = vshrl.u32 %v1508, 7
        %v1510 = vsub.s32 %v1507, %v1509
        %v1511 = vrot.slane %v1497, %v1510
        %v1512 = vcombine.high %v1488, 0.0
        %v1513 = vcombine.high %v1495, 0.0
        %v1514 = vcombine.high %v1504, 0.0
        %v1515 = vcombine.high %v1511, 0.0
        %1517 = vrot.lane.b32.xlu0 %v1444, 16
        %v1518 = vpop.permute.xlu0 %1517
        %1521 = vrot.lane.b32.xlu0 %v1427, 32
        %v1522 = vpop.permute.xlu0 %1521
        %1525 = vrot.lane.b32.xlu0 %v1445, 48
        %v1526 = vpop.permute.xlu0 %1525
        %1529 = vrot.lane.b32.xlu0 %v1436, 64
        %v1530 = vpop.permute.xlu0 %1529
        %1533 = vrot.lane.b32.xlu0 %v1446, 80
        %v1534 = vpop.permute.xlu0 %1533
        %1537 = vrot.lane.b32.xlu0 %v1443, 96
        %v1538 = vpop.permute.xlu0 %1537
        %1541 = vrot.lane.b32.xlu0 %v1447, 112
        %v1542 = vpop.permute.xlu0 %1541
        %1545 = vrot.lane.b32.xlu0 %v1512, 16
        %v1546 = vpop.permute.xlu0 %1545
        %1549 = vrot.lane.b32.xlu0 %v1495, 32
        %v1550 = vpop.permute.xlu0 %1549
        %1553 = vrot.lane.b32.xlu0 %v1513, 48
        %v1554 = vpop.permute.xlu0 %1553
        %1557 = vrot.lane.b32.xlu0 %v1504, 64
        %v1558 = vpop.permute.xlu0 %1557
        %1561 = vrot.lane.b32.xlu0 %v1514, 80
        %v1562 = vpop.permute.xlu0 %1561
        %1565 = vrot.lane.b32.xlu0 %v1511, 96
        %v1566 = vpop.permute.xlu0 %1565
        %1569 = vrot.lane.b32.xlu0 %v1515, 112
        %v1570 = vpop.permute.xlu0 %1569
        %v1572 = vsel %vm423, %v1420, %v1518
        %v1573 = vsel %vm425, %v1572, %v1522
        %v1574 = vsel %vm427, %v1573, %v1526
        %v1575 = vsel %vm429, %v1574, %v1530
        %v1576 = vsel %vm431, %v1575, %v1534
        %v1577 = vsel %vm433, %v1576, %v1538
        %v1578 = vsel %vm435, %v1577, %v1542
        %v1579 = vsel %vm423, %v1488, %v1546
        %v1580 = vsel %vm425, %v1579, %v1550
        %v1581 = vsel %vm427, %v1580, %v1554
        %v1582 = vsel %vm429, %v1581, %v1558
        %v1583 = vsel %vm431, %v1582, %v1562
        %v1584 = vsel %vm433, %v1583, %v1566
        %v1585 = vsel %vm435, %v1584, %v1570
        %vm1590 = vcmask 1046528
        %v1591 = vrot.slane %v219, 1
        %v1592 = vrot.slane %v220, 1
        %v1593 = vsel %vm1590, %v1591, %v1592
        %v1594 = vrot.slane %v221, 1
        %v1595 = vsel %vm1590, %v1592, %v1594
        %v1596 = vrot.slane %v222, 1
        %v1597 = vrot.slane %v223, 1
        %v1598 = vsel %vm1590, %v1596, %v1597
        %v1599 = vrot.slane %v224, 1
        %v1600 = vsel %vm1590, %v1597, %v1599
        %v1601 = vrot.slane %v225, 1
        %v1602 = vrot.slane %v226, 1
        %v1603 = vsel %vm1590, %v1601, %v1602
        %v1604 = vrot.slane %v227, 1
        %v1605 = vsel %vm1590, %v1602, %v1604
        %v1606 = vrot.slane %v228, 1
        %v1607 = vrot.slane %v229, 1
        %v1608 = vsel %vm1590, %v1606, %v1607
        %v1609 = vrot.slane %v230, 1
        %v1610 = vsel %vm1590, %v1607, %v1609
        %v1619 = vcombine.low %v1593, %v1603
        %v1620 = vcombine.high %v1593, %v1603
        %v1622 = vunpack.c.l.s4 1983009808
        %v1623 = vunpack.c.0.s8 %v1622
        %v1624 = vlaneseq
        %v1625 = vshrl.u32 %v1624, 7
        %v1626 = vsub.s32 %v1623, %v1625
        %v1627 = vrot.slane %v1619, %v1626
        %v1629 = vunpack.c.l.s4 1983009808
        %v1630 = vunpack.c.0.s8 %v1629
        %v1631 = vlaneseq
        %v1632 = vshrl.u32 %v1631, 7
        %v1633 = vsub.s32 %v1630, %v1632
        %v1634 = vrot.slane %v1620, %v1633
        %v1635 = vcombine.low %v1598, %v1608
        %v1636 = vcombine.high %v1598, %v1608
        %v1638 = vunpack.c.l.s4 1983009808
        %v1639 = vunpack.c.0.s8 %v1638
        %v1640 = vlaneseq
        %v1641 = vshrl.u32 %v1640, 7
        %v1642 = vsub.s32 %v1639, %v1641
        %v1643 = vrot.slane %v1635, %v1642
        %v1645 = vunpack.c.l.s4 1983009808
        %v1646 = vunpack.c.0.s8 %v1645
        %v1647 = vlaneseq
        %v1648 = vshrl.u32 %v1647, 7
        %v1649 = vsub.s32 %v1646, %v1648
        %v1650 = vrot.slane %v1636, %v1649
        %v1651 = vcombine.low %v1627, %v1643
        %v1652 = vcombine.high %v1627, %v1643
        %v1654 = vunpack.c.l.s4 1934713408
        %v1655 = vunpack.c.0.s8 %v1654
        %v1656 = vlaneseq
        %v1657 = vshrl.u32 %v1656, 7
        %v1658 = vsub.s32 %v1655, %v1657
        %v1659 = vrot.slane %v1651, %v1658
        %v1661 = vunpack.c.l.s4 1934713408
        %v1662 = vunpack.c.0.s8 %v1661
        %v1663 = vlaneseq
        %v1664 = vshrl.u32 %v1663, 7
        %v1665 = vsub.s32 %v1662, %v1664
        %v1666 = vrot.slane %v1652, %v1665
        %v1667 = vcombine.low %v1634, %v1650
        %v1668 = vcombine.high %v1634, %v1650
        %v1670 = vunpack.c.l.s4 1934713408
        %v1671 = vunpack.c.0.s8 %v1670
        %v1672 = vlaneseq
        %v1673 = vshrl.u32 %v1672, 7
        %v1674 = vsub.s32 %v1671, %v1673
        %v1675 = vrot.slane %v1667, %v1674
        %v1677 = vunpack.c.l.s4 1934713408
        %v1678 = vunpack.c.0.s8 %v1677
        %v1679 = vlaneseq
        %v1680 = vshrl.u32 %v1679, 7
        %v1681 = vsub.s32 %v1678, %v1680
        %v1682 = vrot.slane %v1668, %v1681
        %v1683 = vcombine.high %v1659, 0.0
        %v1684 = vcombine.high %v1666, 0.0
        %v1685 = vcombine.high %v1675, 0.0
        %v1686 = vcombine.high %v1682, 0.0
        %v1687 = vcombine.low %v1595, %v1605
        %v1688 = vcombine.high %v1595, %v1605
        %v1690 = vunpack.c.l.s4 1983009808
        %v1691 = vunpack.c.0.s8 %v1690
        %v1692 = vlaneseq
        %v1693 = vshrl.u32 %v1692, 7
        %v1694 = vsub.s32 %v1691, %v1693
        %v1695 = vrot.slane %v1687, %v1694
        %v1697 = vunpack.c.l.s4 1983009808
        %v1698 = vunpack.c.0.s8 %v1697
        %v1699 = vlaneseq
        %v1700 = vshrl.u32 %v1699, 7
        %v1701 = vsub.s32 %v1698, %v1700
        %v1702 = vrot.slane %v1688, %v1701
        %v1703 = vcombine.low %v1600, %v1610
        %v1704 = vcombine.high %v1600, %v1610
        %v1706 = vunpack.c.l.s4 1983009808
        %v1707 = vunpack.c.0.s8 %v1706
        %v1708 = vlaneseq
        %v1709 = vshrl.u32 %v1708, 7
        %v1710 = vsub.s32 %v1707, %v1709
        %v1711 = vrot.slane %v1703, %v1710
        %v1713 = vunpack.c.l.s4 1983009808
        %v1714 = vunpack.c.0.s8 %v1713
        %v1715 = vlaneseq
        %v1716 = vshrl.u32 %v1715, 7
        %v1717 = vsub.s32 %v1714, %v1716
        %v1718 = vrot.slane %v1704, %v1717
        %v1719 = vcombine.low %v1695, %v1711
        %v1720 = vcombine.high %v1695, %v1711
        %v1722 = vunpack.c.l.s4 1934713408
        %v1723 = vunpack.c.0.s8 %v1722
        %v1724 = vlaneseq
        %v1725 = vshrl.u32 %v1724, 7
        %v1726 = vsub.s32 %v1723, %v1725
        %v1727 = vrot.slane %v1719, %v1726
        %v1729 = vunpack.c.l.s4 1934713408
        %v1730 = vunpack.c.0.s8 %v1729
        %v1731 = vlaneseq
        %v1732 = vshrl.u32 %v1731, 7
        %v1733 = vsub.s32 %v1730, %v1732
        %v1734 = vrot.slane %v1720, %v1733
        %v1735 = vcombine.low %v1702, %v1718
        %v1736 = vcombine.high %v1702, %v1718
        %v1738 = vunpack.c.l.s4 1934713408
        %v1739 = vunpack.c.0.s8 %v1738
        %v1740 = vlaneseq
        %v1741 = vshrl.u32 %v1740, 7
        %v1742 = vsub.s32 %v1739, %v1741
        %v1743 = vrot.slane %v1735, %v1742
        %v1745 = vunpack.c.l.s4 1934713408
        %v1746 = vunpack.c.0.s8 %v1745
        %v1747 = vlaneseq
        %v1748 = vshrl.u32 %v1747, 7
        %v1749 = vsub.s32 %v1746, %v1748
        %v1750 = vrot.slane %v1736, %v1749
        %v1751 = vcombine.high %v1727, 0.0
        %v1752 = vcombine.high %v1734, 0.0
        %v1753 = vcombine.high %v1743, 0.0
        %v1754 = vcombine.high %v1750, 0.0
        %1756 = vrot.lane.b32.xlu0 %v1683, 16
        %v1757 = vpop.permute.xlu0 %1756
        %1760 = vrot.lane.b32.xlu0 %v1666, 32
        %v1761 = vpop.permute.xlu0 %1760
        %1764 = vrot.lane.b32.xlu0 %v1684, 48
        %v1765 = vpop.permute.xlu0 %1764
        %1768 = vrot.lane.b32.xlu0 %v1675, 64
        %v1769 = vpop.permute.xlu0 %1768
        %1772 = vrot.lane.b32.xlu0 %v1685, 80
        %v1773 = vpop.permute.xlu0 %1772
        %1776 = vrot.lane.b32.xlu0 %v1682, 96
        %v1777 = vpop.permute.xlu0 %1776
        %1780 = vrot.lane.b32.xlu0 %v1686, 112
        %v1781 = vpop.permute.xlu0 %1780
        %1784 = vrot.lane.b32.xlu0 %v1751, 16
        %v1785 = vpop.permute.xlu0 %1784
        %1788 = vrot.lane.b32.xlu0 %v1734, 32
        %v1789 = vpop.permute.xlu0 %1788
        %1792 = vrot.lane.b32.xlu0 %v1752, 48
        %v1793 = vpop.permute.xlu0 %1792
        %1796 = vrot.lane.b32.xlu0 %v1743, 64
        %v1797 = vpop.permute.xlu0 %1796
        %1800 = vrot.lane.b32.xlu0 %v1753, 80
        %v1801 = vpop.permute.xlu0 %1800
        %1804 = vrot.lane.b32.xlu0 %v1750, 96
        %v1805 = vpop.permute.xlu0 %1804
        %1808 = vrot.lane.b32.xlu0 %v1754, 112
        %v1809 = vpop.permute.xlu0 %1808
        %v1811 = vsel %vm423, %v1659, %v1757
        %v1812 = vsel %vm425, %v1811, %v1761
        %v1813 = vsel %vm427, %v1812, %v1765
        %v1814 = vsel %vm429, %v1813, %v1769
        %v1815 = vsel %vm431, %v1814, %v1773
        %v1816 = vsel %vm433, %v1815, %v1777
        %v1817 = vsel %vm435, %v1816, %v1781
        %v1818 = vsel %vm423, %v1727, %v1785
        %v1819 = vsel %vm425, %v1818, %v1789
        %v1820 = vsel %vm427, %v1819, %v1793
        %v1821 = vsel %vm429, %v1820, %v1797
        %v1822 = vsel %vm431, %v1821, %v1801
        %v1823 = vsel %vm433, %v1822, %v1805
        %v1824 = vsel %vm435, %v1823, %v1809
        %v1829 = vrot.slane %v207, 1
        %v1830 = vrot.slane %v208, 1
        %v1831 = vsel %vm1590, %v1829, %v1830
        %v1832 = vrot.slane %v209, 1
        %v1833 = vsel %vm1590, %v1830, %v1832
        %v1834 = vrot.slane %v210, 1
        %v1835 = vrot.slane %v211, 1
        %v1836 = vsel %vm1590, %v1834, %v1835
        %v1837 = vrot.slane %v212, 1
        %v1838 = vsel %vm1590, %v1835, %v1837
        %v1839 = vrot.slane %v213, 1
        %v1840 = vrot.slane %v214, 1
        %v1841 = vsel %vm1590, %v1839, %v1840
        %v1842 = vrot.slane %v215, 1
        %v1843 = vsel %vm1590, %v1840, %v1842
        %v1844 = vrot.slane %v216, 1
        %v1845 = vrot.slane %v217, 1
        %v1846 = vsel %vm1590, %v1844, %v1845
        %v1847 = vrot.slane %v218, 1
        %v1848 = vsel %vm1590, %v1845, %v1847
        %v1857 = vcombine.low %v1831, %v1841
        %v1858 = vcombine.high %v1831, %v1841
        %v1860 = vunpack.c.l.s4 1983009808
        %v1861 = vunpack.c.0.s8 %v1860
        %v1862 = vlaneseq
        %v1863 = vshrl.u32 %v1862, 7
        %v1864 = vsub.s32 %v1861, %v1863
        %v1865 = vrot.slane %v1857, %v1864
        %v1867 = vunpack.c.l.s4 1983009808
        %v1868 = vunpack.c.0.s8 %v1867
        %v1869 = vlaneseq
        %v1870 = vshrl.u32 %v1869, 7
        %v1871 = vsub.s32 %v1868, %v1870
        %v1872 = vrot.slane %v1858, %v1871
        %v1873 = vcombine.low %v1836, %v1846
        %v1874 = vcombine.high %v1836, %v1846
        %v1876 = vunpack.c.l.s4 1983009808
        %v1877 = vunpack.c.0.s8 %v1876
        %v1878 = vlaneseq
        %v1879 = vshrl.u32 %v1878, 7
        %v1880 = vsub.s32 %v1877, %v1879
        %v1881 = vrot.slane %v1873, %v1880
        %v1883 = vunpack.c.l.s4 1983009808
        %v1884 = vunpack.c.0.s8 %v1883
        %v1885 = vlaneseq
        %v1886 = vshrl.u32 %v1885, 7
        %v1887 = vsub.s32 %v1884, %v1886
        %v1888 = vrot.slane %v1874, %v1887
        %v1889 = vcombine.low %v1865, %v1881
        %v1890 = vcombine.high %v1865, %v1881
        %v1892 = vunpack.c.l.s4 1934713408
        %v1893 = vunpack.c.0.s8 %v1892
        %v1894 = vlaneseq
        %v1895 = vshrl.u32 %v1894, 7
        %v1896 = vsub.s32 %v1893, %v1895
        %v1897 = vrot.slane %v1889, %v1896
        %v1899 = vunpack.c.l.s4 1934713408
        %v1900 = vunpack.c.0.s8 %v1899
        %v1901 = vlaneseq
        %v1902 = vshrl.u32 %v1901, 7
        %v1903 = vsub.s32 %v1900, %v1902
        %v1904 = vrot.slane %v1890, %v1903
        %v1905 = vcombine.low %v1872, %v1888
        %v1906 = vcombine.high %v1872, %v1888
        %v1908 = vunpack.c.l.s4 1934713408
        %v1909 = vunpack.c.0.s8 %v1908
        %v1910 = vlaneseq
        %v1911 = vshrl.u32 %v1910, 7
        %v1912 = vsub.s32 %v1909, %v1911
        %v1913 = vrot.slane %v1905, %v1912
        %v1915 = vunpack.c.l.s4 1934713408
        %v1916 = vunpack.c.0.s8 %v1915
        %v1917 = vlaneseq
        %v1918 = vshrl.u32 %v1917, 7
        %v1919 = vsub.s32 %v1916, %v1918
        %v1920 = vrot.slane %v1906, %v1919
        %v1921 = vcombine.high %v1897, 0.0
        %v1922 = vcombine.high %v1904, 0.0
        %v1923 = vcombine.high %v1913, 0.0
        %v1924 = vcombine.high %v1920, 0.0
        %v1925 = vcombine.low %v1833, %v1843
        %v1926 = vcombine.high %v1833, %v1843
        %v1928 = vunpack.c.l.s4 1983009808
        %v1929 = vunpack.c.0.s8 %v1928
        %v1930 = vlaneseq
        %v1931 = vshrl.u32 %v1930, 7
        %v1932 = vsub.s32 %v1929, %v1931
        %v1933 = vrot.slane %v1925, %v1932
        %v1935 = vunpack.c.l.s4 1983009808
        %v1936 = vunpack.c.0.s8 %v1935
        %v1937 = vlaneseq
        %v1938 = vshrl.u32 %v1937, 7
        %v1939 = vsub.s32 %v1936, %v1938
        %v1940 = vrot.slane %v1926, %v1939
        %v1941 = vcombine.low %v1838, %v1848
        %v1942 = vcombine.high %v1838, %v1848
        %v1944 = vunpack.c.l.s4 1983009808
        %v1945 = vunpack.c.0.s8 %v1944
        %v1946 = vlaneseq
        %v1947 = vshrl.u32 %v1946, 7
        %v1948 = vsub.s32 %v1945, %v1947
        %v1949 = vrot.slane %v1941, %v1948
        %v1951 = vunpack.c.l.s4 1983009808
        %v1952 = vunpack.c.0.s8 %v1951
        %v1953 = vlaneseq
        %v1954 = vshrl.u32 %v1953, 7
        %v1955 = vsub.s32 %v1952, %v1954
        %v1956 = vrot.slane %v1942, %v1955
        %v1957 = vcombine.low %v1933, %v1949
        %v1958 = vcombine.high %v1933, %v1949
        %v1960 = vunpack.c.l.s4 1934713408
        %v1961 = vunpack.c.0.s8 %v1960
        %v1962 = vlaneseq
        %v1963 = vshrl.u32 %v1962, 7
        %v1964 = vsub.s32 %v1961, %v1963
        %v1965 = vrot.slane %v1957, %v1964
        %v1967 = vunpack.c.l.s4 1934713408
        %v1968 = vunpack.c.0.s8 %v1967
        %v1969 = vlaneseq
        %v1970 = vshrl.u32 %v1969, 7
        %v1971 = vsub.s32 %v1968, %v1970
        %v1972 = vrot.slane %v1958, %v1971
        %v1973 = vcombine.low %v1940, %v1956
        %v1974 = vcombine.high %v1940, %v1956
        %v1976 = vunpack.c.l.s4 1934713408
        %v1977 = vunpack.c.0.s8 %v1976
        %v1978 = vlaneseq
        %v1979 = vshrl.u32 %v1978, 7
        %v1980 = vsub.s32 %v1977, %v1979
        %v1981 = vrot.slane %v1973, %v1980
        %v1983 = vunpack.c.l.s4 1934713408
        %v1984 = vunpack.c.0.s8 %v1983
        %v1985 = vlaneseq
        %v1986 = vshrl.u32 %v1985, 7
        %v1987 = vsub.s32 %v1984, %v1986
        %v1988 = vrot.slane %v1974, %v1987
        %v1989 = vcombine.high %v1965, 0.0
        %v1990 = vcombine.high %v1972, 0.0
        %v1991 = vcombine.high %v1981, 0.0
        %v1992 = vcombine.high %v1988, 0.0
        %1994 = vrot.lane.b32.xlu0 %v1921, 16
        %v1995 = vpop.permute.xlu0 %1994
        %1998 = vrot.lane.b32.xlu0 %v1904, 32
        %v1999 = vpop.permute.xlu0 %1998
        %2002 = vrot.lane.b32.xlu0 %v1922, 48
        %v2003 = vpop.permute.xlu0 %2002
        %2006 = vrot.lane.b32.xlu0 %v1913, 64
        %v2007 = vpop.permute.xlu0 %2006
        %2010 = vrot.lane.b32.xlu0 %v1923, 80
        %v2011 = vpop.permute.xlu0 %2010
        %2014 = vrot.lane.b32.xlu0 %v1920, 96
        %v2015 = vpop.permute.xlu0 %2014
        %2018 = vrot.lane.b32.xlu0 %v1924, 112
        %v2019 = vpop.permute.xlu0 %2018
        %2022 = vrot.lane.b32.xlu0 %v1989, 16
        %v2023 = vpop.permute.xlu0 %2022
        %2026 = vrot.lane.b32.xlu0 %v1972, 32
        %v2027 = vpop.permute.xlu0 %2026
        %2030 = vrot.lane.b32.xlu0 %v1990, 48
        %v2031 = vpop.permute.xlu0 %2030
        %2034 = vrot.lane.b32.xlu0 %v1981, 64
        %v2035 = vpop.permute.xlu0 %2034
        %2038 = vrot.lane.b32.xlu0 %v1991, 80
        %v2039 = vpop.permute.xlu0 %2038
        %2042 = vrot.lane.b32.xlu0 %v1988, 96
        %v2043 = vpop.permute.xlu0 %2042
        %2046 = vrot.lane.b32.xlu0 %v1992, 112
        %v2047 = vpop.permute.xlu0 %2046
        %v2049 = vsel %vm423, %v1897, %v1995
        %v2050 = vsel %vm425, %v2049, %v1999
        %v2051 = vsel %vm427, %v2050, %v2003
        %v2052 = vsel %vm429, %v2051, %v2007
        %v2053 = vsel %vm431, %v2052, %v2011
        %v2054 = vsel %vm433, %v2053, %v2015
        %v2055 = vsel %vm435, %v2054, %v2019
        %v2056 = vsel %vm423, %v1965, %v2023
        %v2057 = vsel %vm425, %v2056, %v2027
        %v2058 = vsel %vm427, %v2057, %v2031
        %v2059 = vsel %vm429, %v2058, %v2035
        %v2060 = vsel %vm431, %v2059, %v2039
        %v2061 = vsel %vm433, %v2060, %v2043
        %v2062 = vsel %vm435, %v2061, %v2047
        %2063 = vrot.lane.b32.xlu0 %v1593, 127
        %v2064 = vpop.permute.xlu0 %2063
        %2065 = vrot.lane.b32.xlu0 %v1595, 127
        %v2066 = vpop.permute.xlu0 %2065
        %2067 = vrot.lane.b32.xlu0 %v1598, 127
        %v2068 = vpop.permute.xlu0 %2067
        %2069 = vrot.lane.b32.xlu0 %v1600, 127
        %v2070 = vpop.permute.xlu0 %2069
        %2071 = vrot.lane.b32.xlu0 %v1603, 127
        %v2072 = vpop.permute.xlu0 %2071
        %2073 = vrot.lane.b32.xlu0 %v1605, 127
        %v2074 = vpop.permute.xlu0 %2073
        %2075 = vrot.lane.b32.xlu0 %v1608, 127
        %v2076 = vpop.permute.xlu0 %2075
        %2077 = vrot.lane.b32.xlu0 %v1610, 127
        %v2078 = vpop.permute.xlu0 %2077
        %v2087 = vcombine.low %v2064, %v2072
        %v2088 = vcombine.high %v2064, %v2072
        %v2090 = vunpack.c.l.s4 1983009808
        %v2091 = vunpack.c.0.s8 %v2090
        %v2092 = vlaneseq
        %v2093 = vshrl.u32 %v2092, 7
        %v2094 = vsub.s32 %v2091, %v2093
        %v2095 = vrot.slane %v2087, %v2094
        %v2097 = vunpack.c.l.s4 1983009808
        %v2098 = vunpack.c.0.s8 %v2097
        %v2099 = vlaneseq
        %v2100 = vshrl.u32 %v2099, 7
        %v2101 = vsub.s32 %v2098, %v2100
        %v2102 = vrot.slane %v2088, %v2101
        %v2103 = vcombine.low %v2068, %v2076
        %v2104 = vcombine.high %v2068, %v2076
        %v2106 = vunpack.c.l.s4 1983009808
        %v2107 = vunpack.c.0.s8 %v2106
        %v2108 = vlaneseq
        %v2109 = vshrl.u32 %v2108, 7
        %v2110 = vsub.s32 %v2107, %v2109
        %v2111 = vrot.slane %v2103, %v2110
        %v2113 = vunpack.c.l.s4 1983009808
        %v2114 = vunpack.c.0.s8 %v2113
        %v2115 = vlaneseq
        %v2116 = vshrl.u32 %v2115, 7
        %v2117 = vsub.s32 %v2114, %v2116
        %v2118 = vrot.slane %v2104, %v2117
        %v2119 = vcombine.low %v2095, %v2111
        %v2120 = vcombine.high %v2095, %v2111
        %v2122 = vunpack.c.l.s4 1934713408
        %v2123 = vunpack.c.0.s8 %v2122
        %v2124 = vlaneseq
        %v2125 = vshrl.u32 %v2124, 7
        %v2126 = vsub.s32 %v2123, %v2125
        %v2127 = vrot.slane %v2119, %v2126
        %v2129 = vunpack.c.l.s4 1934713408
        %v2130 = vunpack.c.0.s8 %v2129
        %v2131 = vlaneseq
        %v2132 = vshrl.u32 %v2131, 7
        %v2133 = vsub.s32 %v2130, %v2132
        %v2134 = vrot.slane %v2120, %v2133
        %v2135 = vcombine.low %v2102, %v2118
        %v2136 = vcombine.high %v2102, %v2118
        %v2138 = vunpack.c.l.s4 1934713408
        %v2139 = vunpack.c.0.s8 %v2138
        %v2140 = vlaneseq
        %v2141 = vshrl.u32 %v2140, 7
        %v2142 = vsub.s32 %v2139, %v2141
        %v2143 = vrot.slane %v2135, %v2142
        %v2145 = vunpack.c.l.s4 1934713408
        %v2146 = vunpack.c.0.s8 %v2145
        %v2147 = vlaneseq
        %v2148 = vshrl.u32 %v2147, 7
        %v2149 = vsub.s32 %v2146, %v2148
        %v2150 = vrot.slane %v2136, %v2149
        %v2151 = vcombine.high %v2127, 0.0
        %v2152 = vcombine.high %v2134, 0.0
        %v2153 = vcombine.high %v2143, 0.0
        %v2154 = vcombine.high %v2150, 0.0
        %v2155 = vcombine.low %v2066, %v2074
        %v2156 = vcombine.high %v2066, %v2074
        %v2158 = vunpack.c.l.s4 1983009808
        %v2159 = vunpack.c.0.s8 %v2158
        %v2160 = vlaneseq
        %v2161 = vshrl.u32 %v2160, 7
        %v2162 = vsub.s32 %v2159, %v2161
        %v2163 = vrot.slane %v2155, %v2162
        %v2165 = vunpack.c.l.s4 1983009808
        %v2166 = vunpack.c.0.s8 %v2165
        %v2167 = vlaneseq
        %v2168 = vshrl.u32 %v2167, 7
        %v2169 = vsub.s32 %v2166, %v2168
        %v2170 = vrot.slane %v2156, %v2169
        %v2171 = vcombine.low %v2070, %v2078
        %v2172 = vcombine.high %v2070, %v2078
        %v2174 = vunpack.c.l.s4 1983009808
        %v2175 = vunpack.c.0.s8 %v2174
        %v2176 = vlaneseq
        %v2177 = vshrl.u32 %v2176, 7
        %v2178 = vsub.s32 %v2175, %v2177
        %v2179 = vrot.slane %v2171, %v2178
        %v2181 = vunpack.c.l.s4 1983009808
        %v2182 = vunpack.c.0.s8 %v2181
        %v2183 = vlaneseq
        %v2184 = vshrl.u32 %v2183, 7
        %v2185 = vsub.s32 %v2182, %v2184
        %v2186 = vrot.slane %v2172, %v2185
        %v2187 = vcombine.low %v2163, %v2179
        %v2188 = vcombine.high %v2163, %v2179
        %v2190 = vunpack.c.l.s4 1934713408
        %v2191 = vunpack.c.0.s8 %v2190
        %v2192 = vlaneseq
        %v2193 = vshrl.u32 %v2192, 7
        %v2194 = vsub.s32 %v2191, %v2193
        %v2195 = vrot.slane %v2187, %v2194
        %v2197 = vunpack.c.l.s4 1934713408
        %v2198 = vunpack.c.0.s8 %v2197
        %v2199 = vlaneseq
        %v2200 = vshrl.u32 %v2199, 7
        %v2201 = vsub.s32 %v2198, %v2200
        %v2202 = vrot.slane %v2188, %v2201
        %v2203 = vcombine.low %v2170, %v2186
        %v2204 = vcombine.high %v2170, %v2186
        %v2206 = vunpack.c.l.s4 1934713408
        %v2207 = vunpack.c.0.s8 %v2206
        %v2208 = vlaneseq
        %v2209 = vshrl.u32 %v2208, 7
        %v2210 = vsub.s32 %v2207, %v2209
        %v2211 = vrot.slane %v2203, %v2210
        %v2213 = vunpack.c.l.s4 1934713408
        %v2214 = vunpack.c.0.s8 %v2213
        %v2215 = vlaneseq
        %v2216 = vshrl.u32 %v2215, 7
        %v2217 = vsub.s32 %v2214, %v2216
        %v2218 = vrot.slane %v2204, %v2217
        %v2219 = vcombine.high %v2195, 0.0
        %v2220 = vcombine.high %v2202, 0.0
        %v2221 = vcombine.high %v2211, 0.0
        %v2222 = vcombine.high %v2218, 0.0
        %2224 = vrot.lane.b32.xlu0 %v2151, 16
        %v2225 = vpop.permute.xlu0 %2224
        %2228 = vrot.lane.b32.xlu0 %v2134, 32
        %v2229 = vpop.permute.xlu0 %2228
        %2232 = vrot.lane.b32.xlu0 %v2152, 48
        %v2233 = vpop.permute.xlu0 %2232
        %2236 = vrot.lane.b32.xlu0 %v2143, 64
        %v2237 = vpop.permute.xlu0 %2236
        %2240 = vrot.lane.b32.xlu0 %v2153, 80
        %v2241 = vpop.permute.xlu0 %2240
        %2244 = vrot.lane.b32.xlu0 %v2150, 96
        %v2245 = vpop.permute.xlu0 %2244
        %2248 = vrot.lane.b32.xlu0 %v2154, 112
        %v2249 = vpop.permute.xlu0 %2248
        %2252 = vrot.lane.b32.xlu0 %v2219, 16
        %v2253 = vpop.permute.xlu0 %2252
        %2256 = vrot.lane.b32.xlu0 %v2202, 32
        %v2257 = vpop.permute.xlu0 %2256
        %2260 = vrot.lane.b32.xlu0 %v2220, 48
        %v2261 = vpop.permute.xlu0 %2260
        %2264 = vrot.lane.b32.xlu0 %v2211, 64
        %v2265 = vpop.permute.xlu0 %2264
        %2268 = vrot.lane.b32.xlu0 %v2221, 80
        %v2269 = vpop.permute.xlu0 %2268
        %2272 = vrot.lane.b32.xlu0 %v2218, 96
        %v2273 = vpop.permute.xlu0 %2272
        %2276 = vrot.lane.b32.xlu0 %v2222, 112
        %v2277 = vpop.permute.xlu0 %2276
        %v2279 = vsel %vm423, %v2127, %v2225
        %v2280 = vsel %vm425, %v2279, %v2229
        %v2281 = vsel %vm427, %v2280, %v2233
        %v2282 = vsel %vm429, %v2281, %v2237
        %v2283 = vsel %vm431, %v2282, %v2241
        %v2284 = vsel %vm433, %v2283, %v2245
        %v2285 = vsel %vm435, %v2284, %v2249
        %v2286 = vsel %vm423, %v2195, %v2253
        %v2287 = vsel %vm425, %v2286, %v2257
        %v2288 = vsel %vm427, %v2287, %v2261
        %v2289 = vsel %vm429, %v2288, %v2265
        %v2290 = vsel %vm431, %v2289, %v2269
        %v2291 = vsel %vm433, %v2290, %v2273
        %v2292 = vsel %vm435, %v2291, %v2277
        %2293 = vrot.lane.b32.xlu0 %v1831, 127
        %v2294 = vpop.permute.xlu0 %2293
        %2295 = vrot.lane.b32.xlu0 %v1833, 127
        %v2296 = vpop.permute.xlu0 %2295
        %2297 = vrot.lane.b32.xlu0 %v1836, 127
        %v2298 = vpop.permute.xlu0 %2297
        %2299 = vrot.lane.b32.xlu0 %v1838, 127
        %v2300 = vpop.permute.xlu0 %2299
        %2301 = vrot.lane.b32.xlu0 %v1841, 127
        %v2302 = vpop.permute.xlu0 %2301
        %2303 = vrot.lane.b32.xlu0 %v1843, 127
        %v2304 = vpop.permute.xlu0 %2303
        %2305 = vrot.lane.b32.xlu0 %v1846, 127
        %v2306 = vpop.permute.xlu0 %2305
        %2307 = vrot.lane.b32.xlu0 %v1848, 127
        %v2308 = vpop.permute.xlu0 %2307
        %v2317 = vcombine.low %v2294, %v2302
        %v2318 = vcombine.high %v2294, %v2302
        %v2320 = vunpack.c.l.s4 1983009808
        %v2321 = vunpack.c.0.s8 %v2320
        %v2322 = vlaneseq
        %v2323 = vshrl.u32 %v2322, 7
        %v2324 = vsub.s32 %v2321, %v2323
        %v2325 = vrot.slane %v2317, %v2324
        %v2327 = vunpack.c.l.s4 1983009808
        %v2328 = vunpack.c.0.s8 %v2327
        %v2329 = vlaneseq
        %v2330 = vshrl.u32 %v2329, 7
        %v2331 = vsub.s32 %v2328, %v2330
        %v2332 = vrot.slane %v2318, %v2331
        %v2333 = vcombine.low %v2298, %v2306
        %v2334 = vcombine.high %v2298, %v2306
        %v2336 = vunpack.c.l.s4 1983009808
        %v2337 = vunpack.c.0.s8 %v2336
        %v2338 = vlaneseq
        %v2339 = vshrl.u32 %v2338, 7
        %v2340 = vsub.s32 %v2337, %v2339
        %v2341 = vrot.slane %v2333, %v2340
        %v2343 = vunpack.c.l.s4 1983009808
        %v2344 = vunpack.c.0.s8 %v2343
        %v2345 = vlaneseq
        %v2346 = vshrl.u32 %v2345, 7
        %v2347 = vsub.s32 %v2344, %v2346
        %v2348 = vrot.slane %v2334, %v2347
        %v2349 = vcombine.low %v2325, %v2341
        %v2350 = vcombine.high %v2325, %v2341
        %v2352 = vunpack.c.l.s4 1934713408
        %v2353 = vunpack.c.0.s8 %v2352
        %v2354 = vlaneseq
        %v2355 = vshrl.u32 %v2354, 7
        %v2356 = vsub.s32 %v2353, %v2355
        %v2357 = vrot.slane %v2349, %v2356
        %v2359 = vunpack.c.l.s4 1934713408
        %v2360 = vunpack.c.0.s8 %v2359
        %v2361 = vlaneseq
        %v2362 = vshrl.u32 %v2361, 7
        %v2363 = vsub.s32 %v2360, %v2362
        %v2364 = vrot.slane %v2350, %v2363
        %v2365 = vcombine.low %v2332, %v2348
        %v2366 = vcombine.high %v2332, %v2348
        %v2368 = vunpack.c.l.s4 1934713408
        %v2369 = vunpack.c.0.s8 %v2368
        %v2370 = vlaneseq
        %v2371 = vshrl.u32 %v2370, 7
        %v2372 = vsub.s32 %v2369, %v2371
        %v2373 = vrot.slane %v2365, %v2372
        %v2375 = vunpack.c.l.s4 1934713408
        %v2376 = vunpack.c.0.s8 %v2375
        %v2377 = vlaneseq
        %v2378 = vshrl.u32 %v2377, 7
        %v2379 = vsub.s32 %v2376, %v2378
        %v2380 = vrot.slane %v2366, %v2379
        %v2381 = vcombine.high %v2357, 0.0
        %v2382 = vcombine.high %v2364, 0.0
        %v2383 = vcombine.high %v2373, 0.0
        %v2384 = vcombine.high %v2380, 0.0
        %v2385 = vcombine.low %v2296, %v2304
        %v2386 = vcombine.high %v2296, %v2304
        %v2388 = vunpack.c.l.s4 1983009808
        %v2389 = vunpack.c.0.s8 %v2388
        %v2390 = vlaneseq
        %v2391 = vshrl.u32 %v2390, 7
        %v2392 = vsub.s32 %v2389, %v2391
        %v2393 = vrot.slane %v2385, %v2392
        %v2395 = vunpack.c.l.s4 1983009808
        %v2396 = vunpack.c.0.s8 %v2395
        %v2397 = vlaneseq
        %v2398 = vshrl.u32 %v2397, 7
        %v2399 = vsub.s32 %v2396, %v2398
        %v2400 = vrot.slane %v2386, %v2399
        %v2401 = vcombine.low %v2300, %v2308
        %v2402 = vcombine.high %v2300, %v2308
        %v2404 = vunpack.c.l.s4 1983009808
        %v2405 = vunpack.c.0.s8 %v2404
        %v2406 = vlaneseq
        %v2407 = vshrl.u32 %v2406, 7
        %v2408 = vsub.s32 %v2405, %v2407
        %v2409 = vrot.slane %v2401, %v2408
        %v2411 = vunpack.c.l.s4 1983009808
        %v2412 = vunpack.c.0.s8 %v2411
        %v2413 = vlaneseq
        %v2414 = vshrl.u32 %v2413, 7
        %v2415 = vsub.s32 %v2412, %v2414
        %v2416 = vrot.slane %v2402, %v2415
        %v2417 = vcombine.low %v2393, %v2409
        %v2418 = vcombine.high %v2393, %v2409
        %v2420 = vunpack.c.l.s4 1934713408
        %v2421 = vunpack.c.0.s8 %v2420
        %v2422 = vlaneseq
        %v2423 = vshrl.u32 %v2422, 7
        %v2424 = vsub.s32 %v2421, %v2423
        %v2425 = vrot.slane %v2417, %v2424
        %v2427 = vunpack.c.l.s4 1934713408
        %v2428 = vunpack.c.0.s8 %v2427
        %v2429 = vlaneseq
        %v2430 = vshrl.u32 %v2429, 7
        %v2431 = vsub.s32 %v2428, %v2430
        %v2432 = vrot.slane %v2418, %v2431
        %v2433 = vcombine.low %v2400, %v2416
        %v2434 = vcombine.high %v2400, %v2416
        %v2436 = vunpack.c.l.s4 1934713408
        %v2437 = vunpack.c.0.s8 %v2436
        %v2438 = vlaneseq
        %v2439 = vshrl.u32 %v2438, 7
        %v2440 = vsub.s32 %v2437, %v2439
        %v2441 = vrot.slane %v2433, %v2440
        %v2443 = vunpack.c.l.s4 1934713408
        %v2444 = vunpack.c.0.s8 %v2443
        %v2445 = vlaneseq
        %v2446 = vshrl.u32 %v2445, 7
        %v2447 = vsub.s32 %v2444, %v2446
        %v2448 = vrot.slane %v2434, %v2447
        %v2449 = vcombine.high %v2425, 0.0
        %v2450 = vcombine.high %v2432, 0.0
        %v2451 = vcombine.high %v2441, 0.0
        %v2452 = vcombine.high %v2448, 0.0
        %2454 = vrot.lane.b32.xlu0 %v2381, 16
        %v2455 = vpop.permute.xlu0 %2454
        %2458 = vrot.lane.b32.xlu0 %v2364, 32
        %v2459 = vpop.permute.xlu0 %2458
        %2462 = vrot.lane.b32.xlu0 %v2382, 48
        %v2463 = vpop.permute.xlu0 %2462
        %2466 = vrot.lane.b32.xlu0 %v2373, 64
        %v2467 = vpop.permute.xlu0 %2466
        %2470 = vrot.lane.b32.xlu0 %v2383, 80
        %v2471 = vpop.permute.xlu0 %2470
        %2474 = vrot.lane.b32.xlu0 %v2380, 96
        %v2475 = vpop.permute.xlu0 %2474
        %2478 = vrot.lane.b32.xlu0 %v2384, 112
        %v2479 = vpop.permute.xlu0 %2478
        %2482 = vrot.lane.b32.xlu0 %v2449, 16
        %v2483 = vpop.permute.xlu0 %2482
        %2486 = vrot.lane.b32.xlu0 %v2432, 32
        %v2487 = vpop.permute.xlu0 %2486
        %2490 = vrot.lane.b32.xlu0 %v2450, 48
        %v2491 = vpop.permute.xlu0 %2490
        %2494 = vrot.lane.b32.xlu0 %v2441, 64
        %v2495 = vpop.permute.xlu0 %2494
        %2498 = vrot.lane.b32.xlu0 %v2451, 80
        %v2499 = vpop.permute.xlu0 %2498
        %2502 = vrot.lane.b32.xlu0 %v2448, 96
        %v2503 = vpop.permute.xlu0 %2502
        %2506 = vrot.lane.b32.xlu0 %v2452, 112
        %v2507 = vpop.permute.xlu0 %2506
        %v2509 = vsel %vm423, %v2357, %v2455
        %v2510 = vsel %vm425, %v2509, %v2459
        %v2511 = vsel %vm427, %v2510, %v2463
        %v2512 = vsel %vm429, %v2511, %v2467
        %v2513 = vsel %vm431, %v2512, %v2471
        %v2514 = vsel %vm433, %v2513, %v2475
        %v2515 = vsel %vm435, %v2514, %v2479
        %v2516 = vsel %vm423, %v2425, %v2483
        %v2517 = vsel %vm425, %v2516, %v2487
        %v2518 = vsel %vm427, %v2517, %v2491
        %v2519 = vsel %vm429, %v2518, %v2495
        %v2520 = vsel %vm431, %v2519, %v2499
        %v2521 = vsel %vm433, %v2520, %v2503
        %v2522 = vsel %vm435, %v2521, %v2507
        %2523 = vrot.lane.b32.xlu0 %v1593, 126
        %v2524 = vpop.permute.xlu0 %2523
        %2525 = vrot.lane.b32.xlu0 %v1595, 126
        %v2526 = vpop.permute.xlu0 %2525
        %2527 = vrot.lane.b32.xlu0 %v1598, 126
        %v2528 = vpop.permute.xlu0 %2527
        %2529 = vrot.lane.b32.xlu0 %v1600, 126
        %v2530 = vpop.permute.xlu0 %2529
        %2531 = vrot.lane.b32.xlu0 %v1603, 126
        %v2532 = vpop.permute.xlu0 %2531
        %2533 = vrot.lane.b32.xlu0 %v1605, 126
        %v2534 = vpop.permute.xlu0 %2533
        %2535 = vrot.lane.b32.xlu0 %v1608, 126
        %v2536 = vpop.permute.xlu0 %2535
        %2537 = vrot.lane.b32.xlu0 %v1610, 126
        %v2538 = vpop.permute.xlu0 %2537
        %v2547 = vcombine.low %v2524, %v2532
        %v2548 = vcombine.high %v2524, %v2532
        %v2550 = vunpack.c.l.s4 1983009808
        %v2551 = vunpack.c.0.s8 %v2550
        %v2552 = vlaneseq
        %v2553 = vshrl.u32 %v2552, 7
        %v2554 = vsub.s32 %v2551, %v2553
        %v2555 = vrot.slane %v2547, %v2554
        %v2557 = vunpack.c.l.s4 1983009808
        %v2558 = vunpack.c.0.s8 %v2557
        %v2559 = vlaneseq
        %v2560 = vshrl.u32 %v2559, 7
        %v2561 = vsub.s32 %v2558, %v2560
        %v2562 = vrot.slane %v2548, %v2561
        %v2563 = vcombine.low %v2528, %v2536
        %v2564 = vcombine.high %v2528, %v2536
        %v2566 = vunpack.c.l.s4 1983009808
        %v2567 = vunpack.c.0.s8 %v2566
        %v2568 = vlaneseq
        %v2569 = vshrl.u32 %v2568, 7
        %v2570 = vsub.s32 %v2567, %v2569
        %v2571 = vrot.slane %v2563, %v2570
        %v2573 = vunpack.c.l.s4 1983009808
        %v2574 = vunpack.c.0.s8 %v2573
        %v2575 = vlaneseq
        %v2576 = vshrl.u32 %v2575, 7
        %v2577 = vsub.s32 %v2574, %v2576
        %v2578 = vrot.slane %v2564, %v2577
        %v2579 = vcombine.low %v2555, %v2571
        %v2580 = vcombine.high %v2555, %v2571
        %v2582 = vunpack.c.l.s4 1934713408
        %v2583 = vunpack.c.0.s8 %v2582
        %v2584 = vlaneseq
        %v2585 = vshrl.u32 %v2584, 7
        %v2586 = vsub.s32 %v2583, %v2585
        %v2587 = vrot.slane %v2579, %v2586
        %v2589 = vunpack.c.l.s4 1934713408
        %v2590 = vunpack.c.0.s8 %v2589
        %v2591 = vlaneseq
        %v2592 = vshrl.u32 %v2591, 7
        %v2593 = vsub.s32 %v2590, %v2592
        %v2594 = vrot.slane %v2580, %v2593
        %v2595 = vcombine.low %v2562, %v2578
        %v2596 = vcombine.high %v2562, %v2578
        %v2598 = vunpack.c.l.s4 1934713408
        %v2599 = vunpack.c.0.s8 %v2598
        %v2600 = vlaneseq
        %v2601 = vshrl.u32 %v2600, 7
        %v2602 = vsub.s32 %v2599, %v2601
        %v2603 = vrot.slane %v2595, %v2602
        %v2605 = vunpack.c.l.s4 1934713408
        %v2606 = vunpack.c.0.s8 %v2605
        %v2607 = vlaneseq
        %v2608 = vshrl.u32 %v2607, 7
        %v2609 = vsub.s32 %v2606, %v2608
        %v2610 = vrot.slane %v2596, %v2609
        %v2611 = vcombine.high %v2587, 0.0
        %v2612 = vcombine.high %v2594, 0.0
        %v2613 = vcombine.high %v2603, 0.0
        %v2614 = vcombine.high %v2610, 0.0
        %v2615 = vcombine.low %v2526, %v2534
        %v2616 = vcombine.high %v2526, %v2534
        %v2618 = vunpack.c.l.s4 1983009808
        %v2619 = vunpack.c.0.s8 %v2618
        %v2620 = vlaneseq
        %v2621 = vshrl.u32 %v2620, 7
        %v2622 = vsub.s32 %v2619, %v2621
        %v2623 = vrot.slane %v2615, %v2622
        %v2625 = vunpack.c.l.s4 1983009808
        %v2626 = vunpack.c.0.s8 %v2625
        %v2627 = vlaneseq
        %v2628 = vshrl.u32 %v2627, 7
        %v2629 = vsub.s32 %v2626, %v2628
        %v2630 = vrot.slane %v2616, %v2629
        %v2631 = vcombine.low %v2530, %v2538
        %v2632 = vcombine.high %v2530, %v2538
        %v2634 = vunpack.c.l.s4 1983009808
        %v2635 = vunpack.c.0.s8 %v2634
        %v2636 = vlaneseq
        %v2637 = vshrl.u32 %v2636, 7
        %v2638 = vsub.s32 %v2635, %v2637
        %v2639 = vrot.slane %v2631, %v2638
        %v2641 = vunpack.c.l.s4 1983009808
        %v2642 = vunpack.c.0.s8 %v2641
        %v2643 = vlaneseq
        %v2644 = vshrl.u32 %v2643, 7
        %v2645 = vsub.s32 %v2642, %v2644
        %v2646 = vrot.slane %v2632, %v2645
        %v2647 = vcombine.low %v2623, %v2639
        %v2648 = vcombine.high %v2623, %v2639
        %v2650 = vunpack.c.l.s4 1934713408
        %v2651 = vunpack.c.0.s8 %v2650
        %v2652 = vlaneseq
        %v2653 = vshrl.u32 %v2652, 7
        %v2654 = vsub.s32 %v2651, %v2653
        %v2655 = vrot.slane %v2647, %v2654
        %v2657 = vunpack.c.l.s4 1934713408
        %v2658 = vunpack.c.0.s8 %v2657
        %v2659 = vlaneseq
        %v2660 = vshrl.u32 %v2659, 7
        %v2661 = vsub.s32 %v2658, %v2660
        %v2662 = vrot.slane %v2648, %v2661
        %v2663 = vcombine.low %v2630, %v2646
        %v2664 = vcombine.high %v2630, %v2646
        %v2666 = vunpack.c.l.s4 1934713408
        %v2667 = vunpack.c.0.s8 %v2666
        %v2668 = vlaneseq
        %v2669 = vshrl.u32 %v2668, 7
        %v2670 = vsub.s32 %v2667, %v2669
        %v2671 = vrot.slane %v2663, %v2670
        %v2673 = vunpack.c.l.s4 1934713408
        %v2674 = vunpack.c.0.s8 %v2673
        %v2675 = vlaneseq
        %v2676 = vshrl.u32 %v2675, 7
        %v2677 = vsub.s32 %v2674, %v2676
        %v2678 = vrot.slane %v2664, %v2677
        %v2679 = vcombine.high %v2655, 0.0
        %v2680 = vcombine.high %v2662, 0.0
        %v2681 = vcombine.high %v2671, 0.0
        %v2682 = vcombine.high %v2678, 0.0
        %2684 = vrot.lane.b32.xlu0 %v2611, 16
        %v2685 = vpop.permute.xlu0 %2684
        %2688 = vrot.lane.b32.xlu0 %v2594, 32
        %v2689 = vpop.permute.xlu0 %2688
        %2692 = vrot.lane.b32.xlu0 %v2612, 48
        %v2693 = vpop.permute.xlu0 %2692
        %2696 = vrot.lane.b32.xlu0 %v2603, 64
        %v2697 = vpop.permute.xlu0 %2696
        %2700 = vrot.lane.b32.xlu0 %v2613, 80
        %v2701 = vpop.permute.xlu0 %2700
        %2704 = vrot.lane.b32.xlu0 %v2610, 96
        %v2705 = vpop.permute.xlu0 %2704
        %2708 = vrot.lane.b32.xlu0 %v2614, 112
        %v2709 = vpop.permute.xlu0 %2708
        %2712 = vrot.lane.b32.xlu0 %v2679, 16
        %v2713 = vpop.permute.xlu0 %2712
        %2716 = vrot.lane.b32.xlu0 %v2662, 32
        %v2717 = vpop.permute.xlu0 %2716
        %2720 = vrot.lane.b32.xlu0 %v2680, 48
        %v2721 = vpop.permute.xlu0 %2720
        %2724 = vrot.lane.b32.xlu0 %v2671, 64
        %v2725 = vpop.permute.xlu0 %2724
        %2728 = vrot.lane.b32.xlu0 %v2681, 80
        %v2729 = vpop.permute.xlu0 %2728
        %2732 = vrot.lane.b32.xlu0 %v2678, 96
        %v2733 = vpop.permute.xlu0 %2732
        %2736 = vrot.lane.b32.xlu0 %v2682, 112
        %v2737 = vpop.permute.xlu0 %2736
        %v2739 = vsel %vm423, %v2587, %v2685
        %v2740 = vsel %vm425, %v2739, %v2689
        %v2741 = vsel %vm427, %v2740, %v2693
        %v2742 = vsel %vm429, %v2741, %v2697
        %v2743 = vsel %vm431, %v2742, %v2701
        %v2744 = vsel %vm433, %v2743, %v2705
        %v2745 = vsel %vm435, %v2744, %v2709
        %v2746 = vsel %vm423, %v2655, %v2713
        %v2747 = vsel %vm425, %v2746, %v2717
        %v2748 = vsel %vm427, %v2747, %v2721
        %v2749 = vsel %vm429, %v2748, %v2725
        %v2750 = vsel %vm431, %v2749, %v2729
        %v2751 = vsel %vm433, %v2750, %v2733
        %v2752 = vsel %vm435, %v2751, %v2737
        %2753 = vrot.lane.b32.xlu0 %v1831, 126
        %v2754 = vpop.permute.xlu0 %2753
        %2755 = vrot.lane.b32.xlu0 %v1833, 126
        %v2756 = vpop.permute.xlu0 %2755
        %2757 = vrot.lane.b32.xlu0 %v1836, 126
        %v2758 = vpop.permute.xlu0 %2757
        %2759 = vrot.lane.b32.xlu0 %v1838, 126
        %v2760 = vpop.permute.xlu0 %2759
        %2761 = vrot.lane.b32.xlu0 %v1841, 126
        %v2762 = vpop.permute.xlu0 %2761
        %2763 = vrot.lane.b32.xlu0 %v1843, 126
        %v2764 = vpop.permute.xlu0 %2763
        %2765 = vrot.lane.b32.xlu0 %v1846, 126
        %v2766 = vpop.permute.xlu0 %2765
        %2767 = vrot.lane.b32.xlu0 %v1848, 126
        %v2768 = vpop.permute.xlu0 %2767
        %v2777 = vcombine.low %v2754, %v2762
        %v2778 = vcombine.high %v2754, %v2762
        %v2780 = vunpack.c.l.s4 1983009808
        %v2781 = vunpack.c.0.s8 %v2780
        %v2782 = vlaneseq
        %v2783 = vshrl.u32 %v2782, 7
        %v2784 = vsub.s32 %v2781, %v2783
        %v2785 = vrot.slane %v2777, %v2784
        %v2787 = vunpack.c.l.s4 1983009808
        %v2788 = vunpack.c.0.s8 %v2787
        %v2789 = vlaneseq
        %v2790 = vshrl.u32 %v2789, 7
        %v2791 = vsub.s32 %v2788, %v2790
        %v2792 = vrot.slane %v2778, %v2791
        %v2793 = vcombine.low %v2758, %v2766
        %v2794 = vcombine.high %v2758, %v2766
        %v2796 = vunpack.c.l.s4 1983009808
        %v2797 = vunpack.c.0.s8 %v2796
        %v2798 = vlaneseq
        %v2799 = vshrl.u32 %v2798, 7
        %v2800 = vsub.s32 %v2797, %v2799
        %v2801 = vrot.slane %v2793, %v2800
        %v2803 = vunpack.c.l.s4 1983009808
        %v2804 = vunpack.c.0.s8 %v2803
        %v2805 = vlaneseq
        %v2806 = vshrl.u32 %v2805, 7
        %v2807 = vsub.s32 %v2804, %v2806
        %v2808 = vrot.slane %v2794, %v2807
        %v2809 = vcombine.low %v2785, %v2801
        %v2810 = vcombine.high %v2785, %v2801
        %v2812 = vunpack.c.l.s4 1934713408
        %v2813 = vunpack.c.0.s8 %v2812
        %v2814 = vlaneseq
        %v2815 = vshrl.u32 %v2814, 7
        %v2816 = vsub.s32 %v2813, %v2815
        %v2817 = vrot.slane %v2809, %v2816
        %v2819 = vunpack.c.l.s4 1934713408
        %v2820 = vunpack.c.0.s8 %v2819
        %v2821 = vlaneseq
        %v2822 = vshrl.u32 %v2821, 7
        %v2823 = vsub.s32 %v2820, %v2822
        %v2824 = vrot.slane %v2810, %v2823
        %v2825 = vcombine.low %v2792, %v2808
        %v2826 = vcombine.high %v2792, %v2808
        %v2828 = vunpack.c.l.s4 1934713408
        %v2829 = vunpack.c.0.s8 %v2828
        %v2830 = vlaneseq
        %v2831 = vshrl.u32 %v2830, 7
        %v2832 = vsub.s32 %v2829, %v2831
        %v2833 = vrot.slane %v2825, %v2832
        %v2835 = vunpack.c.l.s4 1934713408
        %v2836 = vunpack.c.0.s8 %v2835
        %v2837 = vlaneseq
        %v2838 = vshrl.u32 %v2837, 7
        %v2839 = vsub.s32 %v2836, %v2838
        %v2840 = vrot.slane %v2826, %v2839
        %v2841 = vcombine.high %v2817, 0.0
        %v2842 = vcombine.high %v2824, 0.0
        %v2843 = vcombine.high %v2833, 0.0
        %v2844 = vcombine.high %v2840, 0.0
        %v2845 = vcombine.low %v2756, %v2764
        %v2846 = vcombine.high %v2756, %v2764
        %v2848 = vunpack.c.l.s4 1983009808
        %v2849 = vunpack.c.0.s8 %v2848
        %v2850 = vlaneseq
        %v2851 = vshrl.u32 %v2850, 7
        %v2852 = vsub.s32 %v2849, %v2851
        %v2853 = vrot.slane %v2845, %v2852
        %v2855 = vunpack.c.l.s4 1983009808
        %v2856 = vunpack.c.0.s8 %v2855
        %v2857 = vlaneseq
        %v2858 = vshrl.u32 %v2857, 7
        %v2859 = vsub.s32 %v2856, %v2858
        %v2860 = vrot.slane %v2846, %v2859
        %v2861 = vcombine.low %v2760, %v2768
        %v2862 = vcombine.high %v2760, %v2768
        %v2864 = vunpack.c.l.s4 1983009808
        %v2865 = vunpack.c.0.s8 %v2864
        %v2866 = vlaneseq
        %v2867 = vshrl.u32 %v2866, 7
        %v2868 = vsub.s32 %v2865, %v2867
        %v2869 = vrot.slane %v2861, %v2868
        %v2871 = vunpack.c.l.s4 1983009808
        %v2872 = vunpack.c.0.s8 %v2871
        %v2873 = vlaneseq
        %v2874 = vshrl.u32 %v2873, 7
        %v2875 = vsub.s32 %v2872, %v2874
        %v2876 = vrot.slane %v2862, %v2875
        %v2877 = vcombine.low %v2853, %v2869
        %v2878 = vcombine.high %v2853, %v2869
        %v2880 = vunpack.c.l.s4 1934713408
        %v2881 = vunpack.c.0.s8 %v2880
        %v2882 = vlaneseq
        %v2883 = vshrl.u32 %v2882, 7
        %v2884 = vsub.s32 %v2881, %v2883
        %v2885 = vrot.slane %v2877, %v2884
        %v2887 = vunpack.c.l.s4 1934713408
        %v2888 = vunpack.c.0.s8 %v2887
        %v2889 = vlaneseq
        %v2890 = vshrl.u32 %v2889, 7
        %v2891 = vsub.s32 %v2888, %v2890
        %v2892 = vrot.slane %v2878, %v2891
        %v2893 = vcombine.low %v2860, %v2876
        %v2894 = vcombine.high %v2860, %v2876
        %v2896 = vunpack.c.l.s4 1934713408
        %v2897 = vunpack.c.0.s8 %v2896
        %v2898 = vlaneseq
        %v2899 = vshrl.u32 %v2898, 7
        %v2900 = vsub.s32 %v2897, %v2899
        %v2901 = vrot.slane %v2893, %v2900
        %v2903 = vunpack.c.l.s4 1934713408
        %v2904 = vunpack.c.0.s8 %v2903
        %v2905 = vlaneseq
        %v2906 = vshrl.u32 %v2905, 7
        %v2907 = vsub.s32 %v2904, %v2906
        %v2908 = vrot.slane %v2894, %v2907
        %v2909 = vcombine.high %v2885, 0.0
        %v2910 = vcombine.high %v2892, 0.0
        %v2911 = vcombine.high %v2901, 0.0
        %v2912 = vcombine.high %v2908, 0.0
        %2914 = vrot.lane.b32.xlu0 %v2841, 16
        %v2915 = vpop.permute.xlu0 %2914
        %2918 = vrot.lane.b32.xlu0 %v2824, 32
        %v2919 = vpop.permute.xlu0 %2918
        %2922 = vrot.lane.b32.xlu0 %v2842, 48
        %v2923 = vpop.permute.xlu0 %2922
        %2926 = vrot.lane.b32.xlu0 %v2833, 64
        %v2927 = vpop.permute.xlu0 %2926
        %2930 = vrot.lane.b32.xlu0 %v2843, 80
        %v2931 = vpop.permute.xlu0 %2930
        %2934 = vrot.lane.b32.xlu0 %v2840, 96
        %v2935 = vpop.permute.xlu0 %2934
        %2938 = vrot.lane.b32.xlu0 %v2844, 112
        %v2939 = vpop.permute.xlu0 %2938
        %2942 = vrot.lane.b32.xlu0 %v2909, 16
        %v2943 = vpop.permute.xlu0 %2942
        %2946 = vrot.lane.b32.xlu0 %v2892, 32
        %v2947 = vpop.permute.xlu0 %2946
        %2950 = vrot.lane.b32.xlu0 %v2910, 48
        %v2951 = vpop.permute.xlu0 %2950
        %2954 = vrot.lane.b32.xlu0 %v2901, 64
        %v2955 = vpop.permute.xlu0 %2954
        %2958 = vrot.lane.b32.xlu0 %v2911, 80
        %v2959 = vpop.permute.xlu0 %2958
        %2962 = vrot.lane.b32.xlu0 %v2908, 96
        %v2963 = vpop.permute.xlu0 %2962
        %2966 = vrot.lane.b32.xlu0 %v2912, 112
        %v2967 = vpop.permute.xlu0 %2966
        %v2969 = vsel %vm423, %v2817, %v2915
        %v2970 = vsel %vm425, %v2969, %v2919
        %v2971 = vsel %vm427, %v2970, %v2923
        %v2972 = vsel %vm429, %v2971, %v2927
        %v2973 = vsel %vm431, %v2972, %v2931
        %v2974 = vsel %vm433, %v2973, %v2935
        %v2975 = vsel %vm435, %v2974, %v2939
        %v2976 = vsel %vm423, %v2885, %v2943
        %v2977 = vsel %vm425, %v2976, %v2947
        %v2978 = vsel %vm427, %v2977, %v2951
        %v2979 = vsel %vm429, %v2978, %v2955
        %v2980 = vsel %vm431, %v2979, %v2959
        %v2981 = vsel %vm433, %v2980, %v2963
        %v2982 = vsel %vm435, %v2981, %v2967
        %vm2983 = vcmask 1045504
        %v2984 = vrot.slane %v219, 2
        %v2985 = vrot.slane %v220, 2
        %v2986 = vsel %vm2983, %v2984, %v2985
        %v2987 = vrot.slane %v221, 2
        %v2988 = vsel %vm2983, %v2985, %v2987
        %v2989 = vrot.slane %v222, 2
        %v2990 = vrot.slane %v223, 2
        %v2991 = vsel %vm2983, %v2989, %v2990
        %v2992 = vrot.slane %v224, 2
        %v2993 = vsel %vm2983, %v2990, %v2992
        %v2994 = vrot.slane %v225, 2
        %v2995 = vrot.slane %v226, 2
        %v2996 = vsel %vm2983, %v2994, %v2995
        %v2997 = vrot.slane %v227, 2
        %v2998 = vsel %vm2983, %v2995, %v2997
        %v2999 = vrot.slane %v228, 2
        %v3000 = vrot.slane %v229, 2
        %v3001 = vsel %vm2983, %v2999, %v3000
        %v3002 = vrot.slane %v230, 2
        %v3003 = vsel %vm2983, %v3000, %v3002
        %v3012 = vcombine.low %v2986, %v2996
        %v3013 = vcombine.high %v2986, %v2996
        %v3015 = vunpack.c.l.s4 1983009808
        %v3016 = vunpack.c.0.s8 %v3015
        %v3017 = vlaneseq
        %v3018 = vshrl.u32 %v3017, 7
        %v3019 = vsub.s32 %v3016, %v3018
        %v3020 = vrot.slane %v3012, %v3019
        %v3022 = vunpack.c.l.s4 1983009808
        %v3023 = vunpack.c.0.s8 %v3022
        %v3024 = vlaneseq
        %v3025 = vshrl.u32 %v3024, 7
        %v3026 = vsub.s32 %v3023, %v3025
        %v3027 = vrot.slane %v3013, %v3026
        %v3028 = vcombine.low %v2991, %v3001
        %v3029 = vcombine.high %v2991, %v3001
        %v3031 = vunpack.c.l.s4 1983009808
        %v3032 = vunpack.c.0.s8 %v3031
        %v3033 = vlaneseq
        %v3034 = vshrl.u32 %v3033, 7
        %v3035 = vsub.s32 %v3032, %v3034
        %v3036 = vrot.slane %v3028, %v3035
        %v3038 = vunpack.c.l.s4 1983009808
        %v3039 = vunpack.c.0.s8 %v3038
        %v3040 = vlaneseq
        %v3041 = vshrl.u32 %v3040, 7
        %v3042 = vsub.s32 %v3039, %v3041
        %v3043 = vrot.slane %v3029, %v3042
        %v3044 = vcombine.low %v3020, %v3036
        %v3045 = vcombine.high %v3020, %v3036
        %v3047 = vunpack.c.l.s4 1934713408
        %v3048 = vunpack.c.0.s8 %v3047
        %v3049 = vlaneseq
        %v3050 = vshrl.u32 %v3049, 7
        %v3051 = vsub.s32 %v3048, %v3050
        %v3052 = vrot.slane %v3044, %v3051
        %v3054 = vunpack.c.l.s4 1934713408
        %v3055 = vunpack.c.0.s8 %v3054
        %v3056 = vlaneseq
        %v3057 = vshrl.u32 %v3056, 7
        %v3058 = vsub.s32 %v3055, %v3057
        %v3059 = vrot.slane %v3045, %v3058
        %v3060 = vcombine.low %v3027, %v3043
        %v3061 = vcombine.high %v3027, %v3043
        %v3063 = vunpack.c.l.s4 1934713408
        %v3064 = vunpack.c.0.s8 %v3063
        %v3065 = vlaneseq
        %v3066 = vshrl.u32 %v3065, 7
        %v3067 = vsub.s32 %v3064, %v3066
        %v3068 = vrot.slane %v3060, %v3067
        %v3070 = vunpack.c.l.s4 1934713408
        %v3071 = vunpack.c.0.s8 %v3070
        %v3072 = vlaneseq
        %v3073 = vshrl.u32 %v3072, 7
        %v3074 = vsub.s32 %v3071, %v3073
        %v3075 = vrot.slane %v3061, %v3074
        %v3076 = vcombine.high %v3052, 0.0
        %v3077 = vcombine.high %v3059, 0.0
        %v3078 = vcombine.high %v3068, 0.0
        %v3079 = vcombine.high %v3075, 0.0
        %v3080 = vcombine.low %v2988, %v2998
        %v3081 = vcombine.high %v2988, %v2998
        %v3083 = vunpack.c.l.s4 1983009808
        %v3084 = vunpack.c.0.s8 %v3083
        %v3085 = vlaneseq
        %v3086 = vshrl.u32 %v3085, 7
        %v3087 = vsub.s32 %v3084, %v3086
        %v3088 = vrot.slane %v3080, %v3087
        %v3090 = vunpack.c.l.s4 1983009808
        %v3091 = vunpack.c.0.s8 %v3090
        %v3092 = vlaneseq
        %v3093 = vshrl.u32 %v3092, 7
        %v3094 = vsub.s32 %v3091, %v3093
        %v3095 = vrot.slane %v3081, %v3094
        %v3096 = vcombine.low %v2993, %v3003
        %v3097 = vcombine.high %v2993, %v3003
        %v3099 = vunpack.c.l.s4 1983009808
        %v3100 = vunpack.c.0.s8 %v3099
        %v3101 = vlaneseq
        %v3102 = vshrl.u32 %v3101, 7
        %v3103 = vsub.s32 %v3100, %v3102
        %v3104 = vrot.slane %v3096, %v3103
        %v3106 = vunpack.c.l.s4 1983009808
        %v3107 = vunpack.c.0.s8 %v3106
        %v3108 = vlaneseq
        %v3109 = vshrl.u32 %v3108, 7
        %v3110 = vsub.s32 %v3107, %v3109
        %v3111 = vrot.slane %v3097, %v3110
        %v3112 = vcombine.low %v3088, %v3104
        %v3113 = vcombine.high %v3088, %v3104
        %v3115 = vunpack.c.l.s4 1934713408
        %v3116 = vunpack.c.0.s8 %v3115
        %v3117 = vlaneseq
        %v3118 = vshrl.u32 %v3117, 7
        %v3119 = vsub.s32 %v3116, %v3118
        %v3120 = vrot.slane %v3112, %v3119
        %v3122 = vunpack.c.l.s4 1934713408
        %v3123 = vunpack.c.0.s8 %v3122
        %v3124 = vlaneseq
        %v3125 = vshrl.u32 %v3124, 7
        %v3126 = vsub.s32 %v3123, %v3125
        %v3127 = vrot.slane %v3113, %v3126
        %v3128 = vcombine.low %v3095, %v3111
        %v3129 = vcombine.high %v3095, %v3111
        %v3131 = vunpack.c.l.s4 1934713408
        %v3132 = vunpack.c.0.s8 %v3131
        %v3133 = vlaneseq
        %v3134 = vshrl.u32 %v3133, 7
        %v3135 = vsub.s32 %v3132, %v3134
        %v3136 = vrot.slane %v3128, %v3135
        %v3138 = vunpack.c.l.s4 1934713408
        %v3139 = vunpack.c.0.s8 %v3138
        %v3140 = vlaneseq
        %v3141 = vshrl.u32 %v3140, 7
        %v3142 = vsub.s32 %v3139, %v3141
        %v3143 = vrot.slane %v3129, %v3142
        %v3144 = vcombine.high %v3120, 0.0
        %v3145 = vcombine.high %v3127, 0.0
        %v3146 = vcombine.high %v3136, 0.0
        %v3147 = vcombine.high %v3143, 0.0
        %3149 = vrot.lane.b32.xlu0 %v3076, 16
        %v3150 = vpop.permute.xlu0 %3149
        %3153 = vrot.lane.b32.xlu0 %v3059, 32
        %v3154 = vpop.permute.xlu0 %3153
        %3157 = vrot.lane.b32.xlu0 %v3077, 48
        %v3158 = vpop.permute.xlu0 %3157
        %3161 = vrot.lane.b32.xlu0 %v3068, 64
        %v3162 = vpop.permute.xlu0 %3161
        %3165 = vrot.lane.b32.xlu0 %v3078, 80
        %v3166 = vpop.permute.xlu0 %3165
        %3169 = vrot.lane.b32.xlu0 %v3075, 96
        %v3170 = vpop.permute.xlu0 %3169
        %3173 = vrot.lane.b32.xlu0 %v3079, 112
        %v3174 = vpop.permute.xlu0 %3173
        %3177 = vrot.lane.b32.xlu0 %v3144, 16
        %v3178 = vpop.permute.xlu0 %3177
        %3181 = vrot.lane.b32.xlu0 %v3127, 32
        %v3182 = vpop.permute.xlu0 %3181
        %3185 = vrot.lane.b32.xlu0 %v3145, 48
        %v3186 = vpop.permute.xlu0 %3185
        %3189 = vrot.lane.b32.xlu0 %v3136, 64
        %v3190 = vpop.permute.xlu0 %3189
        %3193 = vrot.lane.b32.xlu0 %v3146, 80
        %v3194 = vpop.permute.xlu0 %3193
        %3197 = vrot.lane.b32.xlu0 %v3143, 96
        %v3198 = vpop.permute.xlu0 %3197
        %3201 = vrot.lane.b32.xlu0 %v3147, 112
        %v3202 = vpop.permute.xlu0 %3201
        %v3204 = vsel %vm423, %v3052, %v3150
        %v3205 = vsel %vm425, %v3204, %v3154
        %v3206 = vsel %vm427, %v3205, %v3158
        %v3207 = vsel %vm429, %v3206, %v3162
        %v3208 = vsel %vm431, %v3207, %v3166
        %v3209 = vsel %vm433, %v3208, %v3170
        %v3210 = vsel %vm435, %v3209, %v3174
        %v3211 = vsel %vm423, %v3120, %v3178
        %v3212 = vsel %vm425, %v3211, %v3182
        %v3213 = vsel %vm427, %v3212, %v3186
        %v3214 = vsel %vm429, %v3213, %v3190
        %v3215 = vsel %vm431, %v3214, %v3194
        %v3216 = vsel %vm433, %v3215, %v3198
        %v3217 = vsel %vm435, %v3216, %v3202
        %v3218 = vrot.slane %v207, 2
        %v3219 = vrot.slane %v208, 2
        %v3220 = vsel %vm2983, %v3218, %v3219
        %v3221 = vrot.slane %v209, 2
        %v3222 = vsel %vm2983, %v3219, %v3221
        %v3223 = vrot.slane %v210, 2
        %v3224 = vrot.slane %v211, 2
        %v3225 = vsel %vm2983, %v3223, %v3224
        %v3226 = vrot.slane %v212, 2
        %v3227 = vsel %vm2983, %v3224, %v3226
        %v3228 = vrot.slane %v213, 2
        %v3229 = vrot.slane %v214, 2
        %v3230 = vsel %vm2983, %v3228, %v3229
        %v3231 = vrot.slane %v215, 2
        %v3232 = vsel %vm2983, %v3229, %v3231
        %v3233 = vrot.slane %v216, 2
        %v3234 = vrot.slane %v217, 2
        %v3235 = vsel %vm2983, %v3233, %v3234
        %v3236 = vrot.slane %v218, 2
        %v3237 = vsel %vm2983, %v3234, %v3236
        %v3246 = vcombine.low %v3220, %v3230
        %v3247 = vcombine.high %v3220, %v3230
        %v3249 = vunpack.c.l.s4 1983009808
        %v3250 = vunpack.c.0.s8 %v3249
        %v3251 = vlaneseq
        %v3252 = vshrl.u32 %v3251, 7
        %v3253 = vsub.s32 %v3250, %v3252
        %v3254 = vrot.slane %v3246, %v3253
        %v3256 = vunpack.c.l.s4 1983009808
        %v3257 = vunpack.c.0.s8 %v3256
        %v3258 = vlaneseq
        %v3259 = vshrl.u32 %v3258, 7
        %v3260 = vsub.s32 %v3257, %v3259
        %v3261 = vrot.slane %v3247, %v3260
        %v3262 = vcombine.low %v3225, %v3235
        %v3263 = vcombine.high %v3225, %v3235
        %v3265 = vunpack.c.l.s4 1983009808
        %v3266 = vunpack.c.0.s8 %v3265
        %v3267 = vlaneseq
        %v3268 = vshrl.u32 %v3267, 7
        %v3269 = vsub.s32 %v3266, %v3268
        %v3270 = vrot.slane %v3262, %v3269
        %v3272 = vunpack.c.l.s4 1983009808
        %v3273 = vunpack.c.0.s8 %v3272
        %v3274 = vlaneseq
        %v3275 = vshrl.u32 %v3274, 7
        %v3276 = vsub.s32 %v3273, %v3275
        %v3277 = vrot.slane %v3263, %v3276
        %v3278 = vcombine.low %v3254, %v3270
        %v3279 = vcombine.high %v3254, %v3270
        %v3281 = vunpack.c.l.s4 1934713408
        %v3282 = vunpack.c.0.s8 %v3281
        %v3283 = vlaneseq
        %v3284 = vshrl.u32 %v3283, 7
        %v3285 = vsub.s32 %v3282, %v3284
        %v3286 = vrot.slane %v3278, %v3285
        %v3288 = vunpack.c.l.s4 1934713408
        %v3289 = vunpack.c.0.s8 %v3288
        %v3290 = vlaneseq
        %v3291 = vshrl.u32 %v3290, 7
        %v3292 = vsub.s32 %v3289, %v3291
        %v3293 = vrot.slane %v3279, %v3292
        %v3294 = vcombine.low %v3261, %v3277
        %v3295 = vcombine.high %v3261, %v3277
        %v3297 = vunpack.c.l.s4 1934713408
        %v3298 = vunpack.c.0.s8 %v3297
        %v3299 = vlaneseq
        %v3300 = vshrl.u32 %v3299, 7
        %v3301 = vsub.s32 %v3298, %v3300
        %v3302 = vrot.slane %v3294, %v3301
        %v3304 = vunpack.c.l.s4 1934713408
        %v3305 = vunpack.c.0.s8 %v3304
        %v3306 = vlaneseq
        %v3307 = vshrl.u32 %v3306, 7
        %v3308 = vsub.s32 %v3305, %v3307
        %v3309 = vrot.slane %v3295, %v3308
        %v3310 = vcombine.high %v3286, 0.0
        %v3311 = vcombine.high %v3293, 0.0
        %v3312 = vcombine.high %v3302, 0.0
        %v3313 = vcombine.high %v3309, 0.0
        %v3314 = vcombine.low %v3222, %v3232
        %v3315 = vcombine.high %v3222, %v3232
        %v3317 = vunpack.c.l.s4 1983009808
        %v3318 = vunpack.c.0.s8 %v3317
        %v3319 = vlaneseq
        %v3320 = vshrl.u32 %v3319, 7
        %v3321 = vsub.s32 %v3318, %v3320
        %v3322 = vrot.slane %v3314, %v3321
        %v3324 = vunpack.c.l.s4 1983009808
        %v3325 = vunpack.c.0.s8 %v3324
        %v3326 = vlaneseq
        %v3327 = vshrl.u32 %v3326, 7
        %v3328 = vsub.s32 %v3325, %v3327
        %v3329 = vrot.slane %v3315, %v3328
        %v3330 = vcombine.low %v3227, %v3237
        %v3331 = vcombine.high %v3227, %v3237
        %v3333 = vunpack.c.l.s4 1983009808
        %v3334 = vunpack.c.0.s8 %v3333
        %v3335 = vlaneseq
        %v3336 = vshrl.u32 %v3335, 7
        %v3337 = vsub.s32 %v3334, %v3336
        %v3338 = vrot.slane %v3330, %v3337
        %v3340 = vunpack.c.l.s4 1983009808
        %v3341 = vunpack.c.0.s8 %v3340
        %v3342 = vlaneseq
        %v3343 = vshrl.u32 %v3342, 7
        %v3344 = vsub.s32 %v3341, %v3343
        %v3345 = vrot.slane %v3331, %v3344
        %v3346 = vcombine.low %v3322, %v3338
        %v3347 = vcombine.high %v3322, %v3338
        %v3349 = vunpack.c.l.s4 1934713408
        %v3350 = vunpack.c.0.s8 %v3349
        %v3351 = vlaneseq
        %v3352 = vshrl.u32 %v3351, 7
        %v3353 = vsub.s32 %v3350, %v3352
        %v3354 = vrot.slane %v3346, %v3353
        %v3356 = vunpack.c.l.s4 1934713408
        %v3357 = vunpack.c.0.s8 %v3356
        %v3358 = vlaneseq
        %v3359 = vshrl.u32 %v3358, 7
        %v3360 = vsub.s32 %v3357, %v3359
        %v3361 = vrot.slane %v3347, %v3360
        %v3362 = vcombine.low %v3329, %v3345
        %v3363 = vcombine.high %v3329, %v3345
        %v3365 = vunpack.c.l.s4 1934713408
        %v3366 = vunpack.c.0.s8 %v3365
        %v3367 = vlaneseq
        %v3368 = vshrl.u32 %v3367, 7
        %v3369 = vsub.s32 %v3366, %v3368
        %v3370 = vrot.slane %v3362, %v3369
        %v3372 = vunpack.c.l.s4 1934713408
        %v3373 = vunpack.c.0.s8 %v3372
        %v3374 = vlaneseq
        %v3375 = vshrl.u32 %v3374, 7
        %v3376 = vsub.s32 %v3373, %v3375
        %v3377 = vrot.slane %v3363, %v3376
        %v3378 = vcombine.high %v3354, 0.0
        %v3379 = vcombine.high %v3361, 0.0
        %v3380 = vcombine.high %v3370, 0.0
        %v3381 = vcombine.high %v3377, 0.0
        %3383 = vrot.lane.b32.xlu0 %v3310, 16
        %v3384 = vpop.permute.xlu0 %3383
        %3387 = vrot.lane.b32.xlu0 %v3293, 32
        %v3388 = vpop.permute.xlu0 %3387
        %3391 = vrot.lane.b32.xlu0 %v3311, 48
        %v3392 = vpop.permute.xlu0 %3391
        %3395 = vrot.lane.b32.xlu0 %v3302, 64
        %v3396 = vpop.permute.xlu0 %3395
        %3399 = vrot.lane.b32.xlu0 %v3312, 80
        %v3400 = vpop.permute.xlu0 %3399
        %3403 = vrot.lane.b32.xlu0 %v3309, 96
        %v3404 = vpop.permute.xlu0 %3403
        %3407 = vrot.lane.b32.xlu0 %v3313, 112
        %v3408 = vpop.permute.xlu0 %3407
        %3411 = vrot.lane.b32.xlu0 %v3378, 16
        %v3412 = vpop.permute.xlu0 %3411
        %3415 = vrot.lane.b32.xlu0 %v3361, 32
        %v3416 = vpop.permute.xlu0 %3415
        %3419 = vrot.lane.b32.xlu0 %v3379, 48
        %v3420 = vpop.permute.xlu0 %3419
        %3423 = vrot.lane.b32.xlu0 %v3370, 64
        %v3424 = vpop.permute.xlu0 %3423
        %3427 = vrot.lane.b32.xlu0 %v3380, 80
        %v3428 = vpop.permute.xlu0 %3427
        %3431 = vrot.lane.b32.xlu0 %v3377, 96
        %v3432 = vpop.permute.xlu0 %3431
        %3435 = vrot.lane.b32.xlu0 %v3381, 112
        %v3436 = vpop.permute.xlu0 %3435
        %v3438 = vsel %vm423, %v3286, %v3384
        %v3439 = vsel %vm425, %v3438, %v3388
        %v3440 = vsel %vm427, %v3439, %v3392
        %v3441 = vsel %vm429, %v3440, %v3396
        %v3442 = vsel %vm431, %v3441, %v3400
        %v3443 = vsel %vm433, %v3442, %v3404
        %v3444 = vsel %vm435, %v3443, %v3408
        %v3445 = vsel %vm423, %v3354, %v3412
        %v3446 = vsel %vm425, %v3445, %v3416
        %v3447 = vsel %vm427, %v3446, %v3420
        %v3448 = vsel %vm429, %v3447, %v3424
        %v3449 = vsel %vm431, %v3448, %v3428
        %v3450 = vsel %vm433, %v3449, %v3432
        %v3451 = vsel %vm435, %v3450, %v3436
        %3452 = vrot.lane.b32.xlu0 %v2986, 127
        %v3453 = vpop.permute.xlu0 %3452
        %3454 = vrot.lane.b32.xlu0 %v2988, 127
        %v3455 = vpop.permute.xlu0 %3454
        %3456 = vrot.lane.b32.xlu0 %v2991, 127
        %v3457 = vpop.permute.xlu0 %3456
        %3458 = vrot.lane.b32.xlu0 %v2993, 127
        %v3459 = vpop.permute.xlu0 %3458
        %3460 = vrot.lane.b32.xlu0 %v2996, 127
        %v3461 = vpop.permute.xlu0 %3460
        %3462 = vrot.lane.b32.xlu0 %v2998, 127
        %v3463 = vpop.permute.xlu0 %3462
        %3464 = vrot.lane.b32.xlu0 %v3001, 127
        %v3465 = vpop.permute.xlu0 %3464
        %3466 = vrot.lane.b32.xlu0 %v3003, 127
        %v3467 = vpop.permute.xlu0 %3466
        %v3476 = vcombine.low %v3453, %v3461
        %v3477 = vcombine.high %v3453, %v3461
        %v3479 = vunpack.c.l.s4 1983009808
        %v3480 = vunpack.c.0.s8 %v3479
        %v3481 = vlaneseq
        %v3482 = vshrl.u32 %v3481, 7
        %v3483 = vsub.s32 %v3480, %v3482
        %v3484 = vrot.slane %v3476, %v3483
        %v3486 = vunpack.c.l.s4 1983009808
        %v3487 = vunpack.c.0.s8 %v3486
        %v3488 = vlaneseq
        %v3489 = vshrl.u32 %v3488, 7
        %v3490 = vsub.s32 %v3487, %v3489
        %v3491 = vrot.slane %v3477, %v3490
        %v3492 = vcombine.low %v3457, %v3465
        %v3493 = vcombine.high %v3457, %v3465
        %v3495 = vunpack.c.l.s4 1983009808
        %v3496 = vunpack.c.0.s8 %v3495
        %v3497 = vlaneseq
        %v3498 = vshrl.u32 %v3497, 7
        %v3499 = vsub.s32 %v3496, %v3498
        %v3500 = vrot.slane %v3492, %v3499
        %v3502 = vunpack.c.l.s4 1983009808
        %v3503 = vunpack.c.0.s8 %v3502
        %v3504 = vlaneseq
        %v3505 = vshrl.u32 %v3504, 7
        %v3506 = vsub.s32 %v3503, %v3505
        %v3507 = vrot.slane %v3493, %v3506
        %v3508 = vcombine.low %v3484, %v3500
        %v3509 = vcombine.high %v3484, %v3500
        %v3511 = vunpack.c.l.s4 1934713408
        %v3512 = vunpack.c.0.s8 %v3511
        %v3513 = vlaneseq
        %v3514 = vshrl.u32 %v3513, 7
        %v3515 = vsub.s32 %v3512, %v3514
        %v3516 = vrot.slane %v3508, %v3515
        %v3518 = vunpack.c.l.s4 1934713408
        %v3519 = vunpack.c.0.s8 %v3518
        %v3520 = vlaneseq
        %v3521 = vshrl.u32 %v3520, 7
        %v3522 = vsub.s32 %v3519, %v3521
        %v3523 = vrot.slane %v3509, %v3522
        %v3524 = vcombine.low %v3491, %v3507
        %v3525 = vcombine.high %v3491, %v3507
        %v3527 = vunpack.c.l.s4 1934713408
        %v3528 = vunpack.c.0.s8 %v3527
        %v3529 = vlaneseq
        %v3530 = vshrl.u32 %v3529, 7
        %v3531 = vsub.s32 %v3528, %v3530
        %v3532 = vrot.slane %v3524, %v3531
        %v3534 = vunpack.c.l.s4 1934713408
        %v3535 = vunpack.c.0.s8 %v3534
        %v3536 = vlaneseq
        %v3537 = vshrl.u32 %v3536, 7
        %v3538 = vsub.s32 %v3535, %v3537
        %v3539 = vrot.slane %v3525, %v3538
        %v3540 = vcombine.high %v3516, 0.0
        %v3541 = vcombine.high %v3523, 0.0
        %v3542 = vcombine.high %v3532, 0.0
        %v3543 = vcombine.high %v3539, 0.0
        %v3544 = vcombine.low %v3455, %v3463
        %v3545 = vcombine.high %v3455, %v3463
        %v3547 = vunpack.c.l.s4 1983009808
        %v3548 = vunpack.c.0.s8 %v3547
        %v3549 = vlaneseq
        %v3550 = vshrl.u32 %v3549, 7
        %v3551 = vsub.s32 %v3548, %v3550
        %v3552 = vrot.slane %v3544, %v3551
        %v3554 = vunpack.c.l.s4 1983009808
        %v3555 = vunpack.c.0.s8 %v3554
        %v3556 = vlaneseq
        %v3557 = vshrl.u32 %v3556, 7
        %v3558 = vsub.s32 %v3555, %v3557
        %v3559 = vrot.slane %v3545, %v3558
        %v3560 = vcombine.low %v3459, %v3467
        %v3561 = vcombine.high %v3459, %v3467
        %v3563 = vunpack.c.l.s4 1983009808
        %v3564 = vunpack.c.0.s8 %v3563
        %v3565 = vlaneseq
        %v3566 = vshrl.u32 %v3565, 7
        %v3567 = vsub.s32 %v3564, %v3566
        %v3568 = vrot.slane %v3560, %v3567
        %v3570 = vunpack.c.l.s4 1983009808
        %v3571 = vunpack.c.0.s8 %v3570
        %v3572 = vlaneseq
        %v3573 = vshrl.u32 %v3572, 7
        %v3574 = vsub.s32 %v3571, %v3573
        %v3575 = vrot.slane %v3561, %v3574
        %v3576 = vcombine.low %v3552, %v3568
        %v3577 = vcombine.high %v3552, %v3568
        %v3579 = vunpack.c.l.s4 1934713408
        %v3580 = vunpack.c.0.s8 %v3579
        %v3581 = vlaneseq
        %v3582 = vshrl.u32 %v3581, 7
        %v3583 = vsub.s32 %v3580, %v3582
        %v3584 = vrot.slane %v3576, %v3583
        %v3586 = vunpack.c.l.s4 1934713408
        %v3587 = vunpack.c.0.s8 %v3586
        %v3588 = vlaneseq
        %v3589 = vshrl.u32 %v3588, 7
        %v3590 = vsub.s32 %v3587, %v3589
        %v3591 = vrot.slane %v3577, %v3590
        %v3592 = vcombine.low %v3559, %v3575
        %v3593 = vcombine.high %v3559, %v3575
        %v3595 = vunpack.c.l.s4 1934713408
        %v3596 = vunpack.c.0.s8 %v3595
        %v3597 = vlaneseq
        %v3598 = vshrl.u32 %v3597, 7
        %v3599 = vsub.s32 %v3596, %v3598
        %v3600 = vrot.slane %v3592, %v3599
        %v3602 = vunpack.c.l.s4 1934713408
        %v3603 = vunpack.c.0.s8 %v3602
        %v3604 = vlaneseq
        %v3605 = vshrl.u32 %v3604, 7
        %v3606 = vsub.s32 %v3603, %v3605
        %v3607 = vrot.slane %v3593, %v3606
        %v3608 = vcombine.high %v3584, 0.0
        %v3609 = vcombine.high %v3591, 0.0
        %v3610 = vcombine.high %v3600, 0.0
        %v3611 = vcombine.high %v3607, 0.0
        %3613 = vrot.lane.b32.xlu0 %v3540, 16
        %v3614 = vpop.permute.xlu0 %3613
        %3617 = vrot.lane.b32.xlu0 %v3523, 32
        %v3618 = vpop.permute.xlu0 %3617
        %3621 = vrot.lane.b32.xlu0 %v3541, 48
        %v3622 = vpop.permute.xlu0 %3621
        %3625 = vrot.lane.b32.xlu0 %v3532, 64
        %v3626 = vpop.permute.xlu0 %3625
        %3629 = vrot.lane.b32.xlu0 %v3542, 80
        %v3630 = vpop.permute.xlu0 %3629
        %3633 = vrot.lane.b32.xlu0 %v3539, 96
        %v3634 = vpop.permute.xlu0 %3633
        %3637 = vrot.lane.b32.xlu0 %v3543, 112
        %v3638 = vpop.permute.xlu0 %3637
        %3641 = vrot.lane.b32.xlu0 %v3608, 16
        %v3642 = vpop.permute.xlu0 %3641
        %3645 = vrot.lane.b32.xlu0 %v3591, 32
        %v3646 = vpop.permute.xlu0 %3645
        %3649 = vrot.lane.b32.xlu0 %v3609, 48
        %v3650 = vpop.permute.xlu0 %3649
        %3653 = vrot.lane.b32.xlu0 %v3600, 64
        %v3654 = vpop.permute.xlu0 %3653
        %3657 = vrot.lane.b32.xlu0 %v3610, 80
        %v3658 = vpop.permute.xlu0 %3657
        %3661 = vrot.lane.b32.xlu0 %v3607, 96
        %v3662 = vpop.permute.xlu0 %3661
        %3665 = vrot.lane.b32.xlu0 %v3611, 112
        %v3666 = vpop.permute.xlu0 %3665
        %v3668 = vsel %vm423, %v3516, %v3614
        %v3669 = vsel %vm425, %v3668, %v3618
        %v3670 = vsel %vm427, %v3669, %v3622
        %v3671 = vsel %vm429, %v3670, %v3626
        %v3672 = vsel %vm431, %v3671, %v3630
        %v3673 = vsel %vm433, %v3672, %v3634
        %v3674 = vsel %vm435, %v3673, %v3638
        %v3675 = vsel %vm423, %v3584, %v3642
        %v3676 = vsel %vm425, %v3675, %v3646
        %v3677 = vsel %vm427, %v3676, %v3650
        %v3678 = vsel %vm429, %v3677, %v3654
        %v3679 = vsel %vm431, %v3678, %v3658
        %v3680 = vsel %vm433, %v3679, %v3662
        %v3681 = vsel %vm435, %v3680, %v3666
        %3682 = vrot.lane.b32.xlu0 %v3220, 127
        %v3683 = vpop.permute.xlu0 %3682
        %3684 = vrot.lane.b32.xlu0 %v3222, 127
        %v3685 = vpop.permute.xlu0 %3684
        %3686 = vrot.lane.b32.xlu0 %v3225, 127
        %v3687 = vpop.permute.xlu0 %3686
        %3688 = vrot.lane.b32.xlu0 %v3227, 127
        %v3689 = vpop.permute.xlu0 %3688
        %3690 = vrot.lane.b32.xlu0 %v3230, 127
        %v3691 = vpop.permute.xlu0 %3690
        %3692 = vrot.lane.b32.xlu0 %v3232, 127
        %v3693 = vpop.permute.xlu0 %3692
        %3694 = vrot.lane.b32.xlu0 %v3235, 127
        %v3695 = vpop.permute.xlu0 %3694
        %3696 = vrot.lane.b32.xlu0 %v3237, 127
        %v3697 = vpop.permute.xlu0 %3696
        %v3706 = vcombine.low %v3683, %v3691
        %v3707 = vcombine.high %v3683, %v3691
        %v3709 = vunpack.c.l.s4 1983009808
        %v3710 = vunpack.c.0.s8 %v3709
        %v3711 = vlaneseq
        %v3712 = vshrl.u32 %v3711, 7
        %v3713 = vsub.s32 %v3710, %v3712
        %v3714 = vrot.slane %v3706, %v3713
        %v3716 = vunpack.c.l.s4 1983009808
        %v3717 = vunpack.c.0.s8 %v3716
        %v3718 = vlaneseq
        %v3719 = vshrl.u32 %v3718, 7
        %v3720 = vsub.s32 %v3717, %v3719
        %v3721 = vrot.slane %v3707, %v3720
        %v3722 = vcombine.low %v3687, %v3695
        %v3723 = vcombine.high %v3687, %v3695
        %v3725 = vunpack.c.l.s4 1983009808
        %v3726 = vunpack.c.0.s8 %v3725
        %v3727 = vlaneseq
        %v3728 = vshrl.u32 %v3727, 7
        %v3729 = vsub.s32 %v3726, %v3728
        %v3730 = vrot.slane %v3722, %v3729
        %v3732 = vunpack.c.l.s4 1983009808
        %v3733 = vunpack.c.0.s8 %v3732
        %v3734 = vlaneseq
        %v3735 = vshrl.u32 %v3734, 7
        %v3736 = vsub.s32 %v3733, %v3735
        %v3737 = vrot.slane %v3723, %v3736
        %v3738 = vcombine.low %v3714, %v3730
        %v3739 = vcombine.high %v3714, %v3730
        %v3741 = vunpack.c.l.s4 1934713408
        %v3742 = vunpack.c.0.s8 %v3741
        %v3743 = vlaneseq
        %v3744 = vshrl.u32 %v3743, 7
        %v3745 = vsub.s32 %v3742, %v3744
        %v3746 = vrot.slane %v3738, %v3745
        %v3748 = vunpack.c.l.s4 1934713408
        %v3749 = vunpack.c.0.s8 %v3748
        %v3750 = vlaneseq
        %v3751 = vshrl.u32 %v3750, 7
        %v3752 = vsub.s32 %v3749, %v3751
        %v3753 = vrot.slane %v3739, %v3752
        %v3754 = vcombine.low %v3721, %v3737
        %v3755 = vcombine.high %v3721, %v3737
        %v3757 = vunpack.c.l.s4 1934713408
        %v3758 = vunpack.c.0.s8 %v3757
        %v3759 = vlaneseq
        %v3760 = vshrl.u32 %v3759, 7
        %v3761 = vsub.s32 %v3758, %v3760
        %v3762 = vrot.slane %v3754, %v3761
        %v3764 = vunpack.c.l.s4 1934713408
        %v3765 = vunpack.c.0.s8 %v3764
        %v3766 = vlaneseq
        %v3767 = vshrl.u32 %v3766, 7
        %v3768 = vsub.s32 %v3765, %v3767
        %v3769 = vrot.slane %v3755, %v3768
        %v3770 = vcombine.high %v3746, 0.0
        %v3771 = vcombine.high %v3753, 0.0
        %v3772 = vcombine.high %v3762, 0.0
        %v3773 = vcombine.high %v3769, 0.0
        %v3774 = vcombine.low %v3685, %v3693
        %v3775 = vcombine.high %v3685, %v3693
        %v3777 = vunpack.c.l.s4 1983009808
        %v3778 = vunpack.c.0.s8 %v3777
        %v3779 = vlaneseq
        %v3780 = vshrl.u32 %v3779, 7
        %v3781 = vsub.s32 %v3778, %v3780
        %v3782 = vrot.slane %v3774, %v3781
        %v3784 = vunpack.c.l.s4 1983009808
        %v3785 = vunpack.c.0.s8 %v3784
        %v3786 = vlaneseq
        %v3787 = vshrl.u32 %v3786, 7
        %v3788 = vsub.s32 %v3785, %v3787
        %v3789 = vrot.slane %v3775, %v3788
        %v3790 = vcombine.low %v3689, %v3697
        %v3791 = vcombine.high %v3689, %v3697
        %v3793 = vunpack.c.l.s4 1983009808
        %v3794 = vunpack.c.0.s8 %v3793
        %v3795 = vlaneseq
        %v3796 = vshrl.u32 %v3795, 7
        %v3797 = vsub.s32 %v3794, %v3796
        %v3798 = vrot.slane %v3790, %v3797
        %v3800 = vunpack.c.l.s4 1983009808
        %v3801 = vunpack.c.0.s8 %v3800
        %v3802 = vlaneseq
        %v3803 = vshrl.u32 %v3802, 7
        %v3804 = vsub.s32 %v3801, %v3803
        %v3805 = vrot.slane %v3791, %v3804
        %v3806 = vcombine.low %v3782, %v3798
        %v3807 = vcombine.high %v3782, %v3798
        %v3809 = vunpack.c.l.s4 1934713408
        %v3810 = vunpack.c.0.s8 %v3809
        %v3811 = vlaneseq
        %v3812 = vshrl.u32 %v3811, 7
        %v3813 = vsub.s32 %v3810, %v3812
        %v3814 = vrot.slane %v3806, %v3813
        %v3816 = vunpack.c.l.s4 1934713408
        %v3817 = vunpack.c.0.s8 %v3816
        %v3818 = vlaneseq
        %v3819 = vshrl.u32 %v3818, 7
        %v3820 = vsub.s32 %v3817, %v3819
        %v3821 = vrot.slane %v3807, %v3820
        %v3822 = vcombine.low %v3789, %v3805
        %v3823 = vcombine.high %v3789, %v3805
        %v3825 = vunpack.c.l.s4 1934713408
        %v3826 = vunpack.c.0.s8 %v3825
        %v3827 = vlaneseq
        %v3828 = vshrl.u32 %v3827, 7
        %v3829 = vsub.s32 %v3826, %v3828
        %v3830 = vrot.slane %v3822, %v3829
        %v3832 = vunpack.c.l.s4 1934713408
        %v3833 = vunpack.c.0.s8 %v3832
        %v3834 = vlaneseq
        %v3835 = vshrl.u32 %v3834, 7
        %v3836 = vsub.s32 %v3833, %v3835
        %v3837 = vrot.slane %v3823, %v3836
        %v3838 = vcombine.high %v3814, 0.0
        %v3839 = vcombine.high %v3821, 0.0
        %v3840 = vcombine.high %v3830, 0.0
        %v3841 = vcombine.high %v3837, 0.0
        %3843 = vrot.lane.b32.xlu0 %v3770, 16
        %v3844 = vpop.permute.xlu0 %3843
        %3847 = vrot.lane.b32.xlu0 %v3753, 32
        %v3848 = vpop.permute.xlu0 %3847
        %3851 = vrot.lane.b32.xlu0 %v3771, 48
        %v3852 = vpop.permute.xlu0 %3851
        %3855 = vrot.lane.b32.xlu0 %v3762, 64
        %v3856 = vpop.permute.xlu0 %3855
        %3859 = vrot.lane.b32.xlu0 %v3772, 80
        %v3860 = vpop.permute.xlu0 %3859
        %3863 = vrot.lane.b32.xlu0 %v3769, 96
        %v3864 = vpop.permute.xlu0 %3863
        %3867 = vrot.lane.b32.xlu0 %v3773, 112
        %v3868 = vpop.permute.xlu0 %3867
        %3871 = vrot.lane.b32.xlu0 %v3838, 16
        %v3872 = vpop.permute.xlu0 %3871
        %3875 = vrot.lane.b32.xlu0 %v3821, 32
        %v3876 = vpop.permute.xlu0 %3875
        %3879 = vrot.lane.b32.xlu0 %v3839, 48
        %v3880 = vpop.permute.xlu0 %3879
        %3883 = vrot.lane.b32.xlu0 %v3830, 64
        %v3884 = vpop.permute.xlu0 %3883
        %3887 = vrot.lane.b32.xlu0 %v3840, 80
        %v3888 = vpop.permute.xlu0 %3887
        %3891 = vrot.lane.b32.xlu0 %v3837, 96
        %v3892 = vpop.permute.xlu0 %3891
        %3895 = vrot.lane.b32.xlu0 %v3841, 112
        %v3896 = vpop.permute.xlu0 %3895
        %v3898 = vsel %vm423, %v3746, %v3844
        %v3899 = vsel %vm425, %v3898, %v3848
        %v3900 = vsel %vm427, %v3899, %v3852
        %v3901 = vsel %vm429, %v3900, %v3856
        %v3902 = vsel %vm431, %v3901, %v3860
        %v3903 = vsel %vm433, %v3902, %v3864
        %v3904 = vsel %vm435, %v3903, %v3868
        %v3905 = vsel %vm423, %v3814, %v3872
        %v3906 = vsel %vm425, %v3905, %v3876
        %v3907 = vsel %vm427, %v3906, %v3880
        %v3908 = vsel %vm429, %v3907, %v3884
        %v3909 = vsel %vm431, %v3908, %v3888
        %v3910 = vsel %vm433, %v3909, %v3892
        %v3911 = vsel %vm435, %v3910, %v3896
        %3912 = vrot.lane.b32.xlu0 %v2986, 126
        %v3913 = vpop.permute.xlu0 %3912
        %3914 = vrot.lane.b32.xlu0 %v2988, 126
        %v3915 = vpop.permute.xlu0 %3914
        %3916 = vrot.lane.b32.xlu0 %v2991, 126
        %v3917 = vpop.permute.xlu0 %3916
        %3918 = vrot.lane.b32.xlu0 %v2993, 126
        %v3919 = vpop.permute.xlu0 %3918
        %3920 = vrot.lane.b32.xlu0 %v2996, 126
        %v3921 = vpop.permute.xlu0 %3920
        %3922 = vrot.lane.b32.xlu0 %v2998, 126
        %v3923 = vpop.permute.xlu0 %3922
        %3924 = vrot.lane.b32.xlu0 %v3001, 126
        %v3925 = vpop.permute.xlu0 %3924
        %3926 = vrot.lane.b32.xlu0 %v3003, 126
        %v3927 = vpop.permute.xlu0 %3926
        %v3936 = vcombine.low %v3913, %v3921
        %v3937 = vcombine.high %v3913, %v3921
        %v3939 = vunpack.c.l.s4 1983009808
        %v3940 = vunpack.c.0.s8 %v3939
        %v3941 = vlaneseq
        %v3942 = vshrl.u32 %v3941, 7
        %v3943 = vsub.s32 %v3940, %v3942
        %v3944 = vrot.slane %v3936, %v3943
        %v3946 = vunpack.c.l.s4 1983009808
        %v3947 = vunpack.c.0.s8 %v3946
        %v3948 = vlaneseq
        %v3949 = vshrl.u32 %v3948, 7
        %v3950 = vsub.s32 %v3947, %v3949
        %v3951 = vrot.slane %v3937, %v3950
        %v3952 = vcombine.low %v3917, %v3925
        %v3953 = vcombine.high %v3917, %v3925
        %v3955 = vunpack.c.l.s4 1983009808
        %v3956 = vunpack.c.0.s8 %v3955
        %v3957 = vlaneseq
        %v3958 = vshrl.u32 %v3957, 7
        %v3959 = vsub.s32 %v3956, %v3958
        %v3960 = vrot.slane %v3952, %v3959
        %v3962 = vunpack.c.l.s4 1983009808
        %v3963 = vunpack.c.0.s8 %v3962
        %v3964 = vlaneseq
        %v3965 = vshrl.u32 %v3964, 7
        %v3966 = vsub.s32 %v3963, %v3965
        %v3967 = vrot.slane %v3953, %v3966
        %v3968 = vcombine.low %v3944, %v3960
        %v3969 = vcombine.high %v3944, %v3960
        %v3971 = vunpack.c.l.s4 1934713408
        %v3972 = vunpack.c.0.s8 %v3971
        %v3973 = vlaneseq
        %v3974 = vshrl.u32 %v3973, 7
        %v3975 = vsub.s32 %v3972, %v3974
        %v3976 = vrot.slane %v3968, %v3975
        %v3978 = vunpack.c.l.s4 1934713408
        %v3979 = vunpack.c.0.s8 %v3978
        %v3980 = vlaneseq
        %v3981 = vshrl.u32 %v3980, 7
        %v3982 = vsub.s32 %v3979, %v3981
        %v3983 = vrot.slane %v3969, %v3982
        %v3984 = vcombine.low %v3951, %v3967
        %v3985 = vcombine.high %v3951, %v3967
        %v3987 = vunpack.c.l.s4 1934713408
        %v3988 = vunpack.c.0.s8 %v3987
        %v3989 = vlaneseq
        %v3990 = vshrl.u32 %v3989, 7
        %v3991 = vsub.s32 %v3988, %v3990
        %v3992 = vrot.slane %v3984, %v3991
        %v3994 = vunpack.c.l.s4 1934713408
        %v3995 = vunpack.c.0.s8 %v3994
        %v3996 = vlaneseq
        %v3997 = vshrl.u32 %v3996, 7
        %v3998 = vsub.s32 %v3995, %v3997
        %v3999 = vrot.slane %v3985, %v3998
        %v4000 = vcombine.high %v3976, 0.0
        %v4001 = vcombine.high %v3983, 0.0
        %v4002 = vcombine.high %v3992, 0.0
        %v4003 = vcombine.high %v3999, 0.0
        %v4004 = vcombine.low %v3915, %v3923
        %v4005 = vcombine.high %v3915, %v3923
        %v4007 = vunpack.c.l.s4 1983009808
        %v4008 = vunpack.c.0.s8 %v4007
        %v4009 = vlaneseq
        %v4010 = vshrl.u32 %v4009, 7
        %v4011 = vsub.s32 %v4008, %v4010
        %v4012 = vrot.slane %v4004, %v4011
        %v4014 = vunpack.c.l.s4 1983009808
        %v4015 = vunpack.c.0.s8 %v4014
        %v4016 = vlaneseq
        %v4017 = vshrl.u32 %v4016, 7
        %v4018 = vsub.s32 %v4015, %v4017
        %v4019 = vrot.slane %v4005, %v4018
        %v4020 = vcombine.low %v3919, %v3927
        %v4021 = vcombine.high %v3919, %v3927
        %v4023 = vunpack.c.l.s4 1983009808
        %v4024 = vunpack.c.0.s8 %v4023
        %v4025 = vlaneseq
        %v4026 = vshrl.u32 %v4025, 7
        %v4027 = vsub.s32 %v4024, %v4026
        %v4028 = vrot.slane %v4020, %v4027
        %v4030 = vunpack.c.l.s4 1983009808
        %v4031 = vunpack.c.0.s8 %v4030
        %v4032 = vlaneseq
        %v4033 = vshrl.u32 %v4032, 7
        %v4034 = vsub.s32 %v4031, %v4033
        %v4035 = vrot.slane %v4021, %v4034
        %v4036 = vcombine.low %v4012, %v4028
        %v4037 = vcombine.high %v4012, %v4028
        %v4039 = vunpack.c.l.s4 1934713408
        %v4040 = vunpack.c.0.s8 %v4039
        %v4041 = vlaneseq
        %v4042 = vshrl.u32 %v4041, 7
        %v4043 = vsub.s32 %v4040, %v4042
        %v4044 = vrot.slane %v4036, %v4043
        %v4046 = vunpack.c.l.s4 1934713408
        %v4047 = vunpack.c.0.s8 %v4046
        %v4048 = vlaneseq
        %v4049 = vshrl.u32 %v4048, 7
        %v4050 = vsub.s32 %v4047, %v4049
        %v4051 = vrot.slane %v4037, %v4050
        %v4052 = vcombine.low %v4019, %v4035
        %v4053 = vcombine.high %v4019, %v4035
        %v4055 = vunpack.c.l.s4 1934713408
        %v4056 = vunpack.c.0.s8 %v4055
        %v4057 = vlaneseq
        %v4058 = vshrl.u32 %v4057, 7
        %v4059 = vsub.s32 %v4056, %v4058
        %v4060 = vrot.slane %v4052, %v4059
        %v4062 = vunpack.c.l.s4 1934713408
        %v4063 = vunpack.c.0.s8 %v4062
        %v4064 = vlaneseq
        %v4065 = vshrl.u32 %v4064, 7
        %v4066 = vsub.s32 %v4063, %v4065
        %v4067 = vrot.slane %v4053, %v4066
        %v4068 = vcombine.high %v4044, 0.0
        %v4069 = vcombine.high %v4051, 0.0
        %v4070 = vcombine.high %v4060, 0.0
        %v4071 = vcombine.high %v4067, 0.0
        %4073 = vrot.lane.b32.xlu0 %v4000, 16
        %v4074 = vpop.permute.xlu0 %4073
        %4077 = vrot.lane.b32.xlu0 %v3983, 32
        %v4078 = vpop.permute.xlu0 %4077
        %4081 = vrot.lane.b32.xlu0 %v4001, 48
        %v4082 = vpop.permute.xlu0 %4081
        %4085 = vrot.lane.b32.xlu0 %v3992, 64
        %v4086 = vpop.permute.xlu0 %4085
        %4089 = vrot.lane.b32.xlu0 %v4002, 80
        %v4090 = vpop.permute.xlu0 %4089
        %4093 = vrot.lane.b32.xlu0 %v3999, 96
        %v4094 = vpop.permute.xlu0 %4093
        %4097 = vrot.lane.b32.xlu0 %v4003, 112
        %v4098 = vpop.permute.xlu0 %4097
        %4101 = vrot.lane.b32.xlu0 %v4068, 16
        %v4102 = vpop.permute.xlu0 %4101
        %4105 = vrot.lane.b32.xlu0 %v4051, 32
        %v4106 = vpop.permute.xlu0 %4105
        %4109 = vrot.lane.b32.xlu0 %v4069, 48
        %v4110 = vpop.permute.xlu0 %4109
        %4113 = vrot.lane.b32.xlu0 %v4060, 64
        %v4114 = vpop.permute.xlu0 %4113
        %4117 = vrot.lane.b32.xlu0 %v4070, 80
        %v4118 = vpop.permute.xlu0 %4117
        %4121 = vrot.lane.b32.xlu0 %v4067, 96
        %v4122 = vpop.permute.xlu0 %4121
        %4125 = vrot.lane.b32.xlu0 %v4071, 112
        %v4126 = vpop.permute.xlu0 %4125
        %v4128 = vsel %vm423, %v3976, %v4074
        %v4129 = vsel %vm425, %v4128, %v4078
        %v4130 = vsel %vm427, %v4129, %v4082
        %v4131 = vsel %vm429, %v4130, %v4086
        %v4132 = vsel %vm431, %v4131, %v4090
        %v4133 = vsel %vm433, %v4132, %v4094
        %v4134 = vsel %vm435, %v4133, %v4098
        %v4135 = vsel %vm423, %v4044, %v4102
        %v4136 = vsel %vm425, %v4135, %v4106
        %v4137 = vsel %vm427, %v4136, %v4110
        %v4138 = vsel %vm429, %v4137, %v4114
        %v4139 = vsel %vm431, %v4138, %v4118
        %v4140 = vsel %vm433, %v4139, %v4122
        %v4141 = vsel %vm435, %v4140, %v4126
        %4142 = vrot.lane.b32.xlu0 %v3220, 126
        %v4143 = vpop.permute.xlu0 %4142
        %4144 = vrot.lane.b32.xlu0 %v3222, 126
        %v4145 = vpop.permute.xlu0 %4144
        %4146 = vrot.lane.b32.xlu0 %v3225, 126
        %v4147 = vpop.permute.xlu0 %4146
        %4148 = vrot.lane.b32.xlu0 %v3227, 126
        %v4149 = vpop.permute.xlu0 %4148
        %4150 = vrot.lane.b32.xlu0 %v3230, 126
        %v4151 = vpop.permute.xlu0 %4150
        %4152 = vrot.lane.b32.xlu0 %v3232, 126
        %v4153 = vpop.permute.xlu0 %4152
        %4154 = vrot.lane.b32.xlu0 %v3235, 126
        %v4155 = vpop.permute.xlu0 %4154
        %4156 = vrot.lane.b32.xlu0 %v3237, 126
        %v4157 = vpop.permute.xlu0 %4156
        %v4166 = vcombine.low %v4143, %v4151
        %v4167 = vcombine.high %v4143, %v4151
        %v4169 = vunpack.c.l.s4 1983009808
        %v4170 = vunpack.c.0.s8 %v4169
        %v4171 = vlaneseq
        %v4172 = vshrl.u32 %v4171, 7
        %v4173 = vsub.s32 %v4170, %v4172
        %v4174 = vrot.slane %v4166, %v4173
        %v4176 = vunpack.c.l.s4 1983009808
        %v4177 = vunpack.c.0.s8 %v4176
        %v4178 = vlaneseq
        %v4179 = vshrl.u32 %v4178, 7
        %v4180 = vsub.s32 %v4177, %v4179
        %v4181 = vrot.slane %v4167, %v4180
        %v4182 = vcombine.low %v4147, %v4155
        %v4183 = vcombine.high %v4147, %v4155
        %v4185 = vunpack.c.l.s4 1983009808
        %v4186 = vunpack.c.0.s8 %v4185
        %v4187 = vlaneseq
        %v4188 = vshrl.u32 %v4187, 7
        %v4189 = vsub.s32 %v4186, %v4188
        %v4190 = vrot.slane %v4182, %v4189
        %v4192 = vunpack.c.l.s4 1983009808
        %v4193 = vunpack.c.0.s8 %v4192
        %v4194 = vlaneseq
        %v4195 = vshrl.u32 %v4194, 7
        %v4196 = vsub.s32 %v4193, %v4195
        %v4197 = vrot.slane %v4183, %v4196
        %v4198 = vcombine.low %v4174, %v4190
        %v4199 = vcombine.high %v4174, %v4190
        %v4201 = vunpack.c.l.s4 1934713408
        %v4202 = vunpack.c.0.s8 %v4201
        %v4203 = vlaneseq
        %v4204 = vshrl.u32 %v4203, 7
        %v4205 = vsub.s32 %v4202, %v4204
        %v4206 = vrot.slane %v4198, %v4205
        %v4208 = vunpack.c.l.s4 1934713408
        %v4209 = vunpack.c.0.s8 %v4208
        %v4210 = vlaneseq
        %v4211 = vshrl.u32 %v4210, 7
        %v4212 = vsub.s32 %v4209, %v4211
        %v4213 = vrot.slane %v4199, %v4212
        %v4214 = vcombine.low %v4181, %v4197
        %v4215 = vcombine.high %v4181, %v4197
        %v4217 = vunpack.c.l.s4 1934713408
        %v4218 = vunpack.c.0.s8 %v4217
        %v4219 = vlaneseq
        %v4220 = vshrl.u32 %v4219, 7
        %v4221 = vsub.s32 %v4218, %v4220
        %v4222 = vrot.slane %v4214, %v4221
        %v4224 = vunpack.c.l.s4 1934713408
        %v4225 = vunpack.c.0.s8 %v4224
        %v4226 = vlaneseq
        %v4227 = vshrl.u32 %v4226, 7
        %v4228 = vsub.s32 %v4225, %v4227
        %v4229 = vrot.slane %v4215, %v4228
        %v4230 = vcombine.high %v4206, 0.0
        %v4231 = vcombine.high %v4213, 0.0
        %v4232 = vcombine.high %v4222, 0.0
        %v4233 = vcombine.high %v4229, 0.0
        %v4234 = vcombine.low %v4145, %v4153
        %v4235 = vcombine.high %v4145, %v4153
        %v4237 = vunpack.c.l.s4 1983009808
        %v4238 = vunpack.c.0.s8 %v4237
        %v4239 = vlaneseq
        %v4240 = vshrl.u32 %v4239, 7
        %v4241 = vsub.s32 %v4238, %v4240
        %v4242 = vrot.slane %v4234, %v4241
        %v4244 = vunpack.c.l.s4 1983009808
        %v4245 = vunpack.c.0.s8 %v4244
        %v4246 = vlaneseq
        %v4247 = vshrl.u32 %v4246, 7
        %v4248 = vsub.s32 %v4245, %v4247
        %v4249 = vrot.slane %v4235, %v4248
        %v4250 = vcombine.low %v4149, %v4157
        %v4251 = vcombine.high %v4149, %v4157
        %v4253 = vunpack.c.l.s4 1983009808
        %v4254 = vunpack.c.0.s8 %v4253
        %v4255 = vlaneseq
        %v4256 = vshrl.u32 %v4255, 7
        %v4257 = vsub.s32 %v4254, %v4256
        %v4258 = vrot.slane %v4250, %v4257
        %v4260 = vunpack.c.l.s4 1983009808
        %v4261 = vunpack.c.0.s8 %v4260
        %v4262 = vlaneseq
        %v4263 = vshrl.u32 %v4262, 7
        %v4264 = vsub.s32 %v4261, %v4263
        %v4265 = vrot.slane %v4251, %v4264
        %v4266 = vcombine.low %v4242, %v4258
        %v4267 = vcombine.high %v4242, %v4258
        %v4269 = vunpack.c.l.s4 1934713408
        %v4270 = vunpack.c.0.s8 %v4269
        %v4271 = vlaneseq
        %v4272 = vshrl.u32 %v4271, 7
        %v4273 = vsub.s32 %v4270, %v4272
        %v4274 = vrot.slane %v4266, %v4273
        %v4276 = vunpack.c.l.s4 1934713408
        %v4277 = vunpack.c.0.s8 %v4276
        %v4278 = vlaneseq
        %v4279 = vshrl.u32 %v4278, 7
        %v4280 = vsub.s32 %v4277, %v4279
        %v4281 = vrot.slane %v4267, %v4280
        %v4282 = vcombine.low %v4249, %v4265
        %v4283 = vcombine.high %v4249, %v4265
        %v4285 = vunpack.c.l.s4 1934713408
        %v4286 = vunpack.c.0.s8 %v4285
        %v4287 = vlaneseq
        %v4288 = vshrl.u32 %v4287, 7
        %v4289 = vsub.s32 %v4286, %v4288
        %v4290 = vrot.slane %v4282, %v4289
        %v4292 = vunpack.c.l.s4 1934713408
        %v4293 = vunpack.c.0.s8 %v4292
        %v4294 = vlaneseq
        %v4295 = vshrl.u32 %v4294, 7
        %v4296 = vsub.s32 %v4293, %v4295
        %v4297 = vrot.slane %v4283, %v4296
        %v4298 = vcombine.high %v4274, 0.0
        %v4299 = vcombine.high %v4281, 0.0
        %v4300 = vcombine.high %v4290, 0.0
        %v4301 = vcombine.high %v4297, 0.0
        %4303 = vrot.lane.b32.xlu0 %v4230, 16
        %v4304 = vpop.permute.xlu0 %4303
        %4307 = vrot.lane.b32.xlu0 %v4213, 32
        %v4308 = vpop.permute.xlu0 %4307
        %4311 = vrot.lane.b32.xlu0 %v4231, 48
        %v4312 = vpop.permute.xlu0 %4311
        %4315 = vrot.lane.b32.xlu0 %v4222, 64
        %v4316 = vpop.permute.xlu0 %4315
        %4319 = vrot.lane.b32.xlu0 %v4232, 80
        %v4320 = vpop.permute.xlu0 %4319
        %4323 = vrot.lane.b32.xlu0 %v4229, 96
        %v4324 = vpop.permute.xlu0 %4323
        %4327 = vrot.lane.b32.xlu0 %v4233, 112
        %v4328 = vpop.permute.xlu0 %4327
        %4331 = vrot.lane.b32.xlu0 %v4298, 16
        %v4332 = vpop.permute.xlu0 %4331
        %4335 = vrot.lane.b32.xlu0 %v4281, 32
        %v4336 = vpop.permute.xlu0 %4335
        %4339 = vrot.lane.b32.xlu0 %v4299, 48
        %v4340 = vpop.permute.xlu0 %4339
        %4343 = vrot.lane.b32.xlu0 %v4290, 64
        %v4344 = vpop.permute.xlu0 %4343
        %4347 = vrot.lane.b32.xlu0 %v4300, 80
        %v4348 = vpop.permute.xlu0 %4347
        %4351 = vrot.lane.b32.xlu0 %v4297, 96
        %v4352 = vpop.permute.xlu0 %4351
        %4355 = vrot.lane.b32.xlu0 %v4301, 112
        %v4356 = vpop.permute.xlu0 %4355
        %v4358 = vsel %vm423, %v4206, %v4304
        %v4359 = vsel %vm425, %v4358, %v4308
        %v4360 = vsel %vm427, %v4359, %v4312
        %v4361 = vsel %vm429, %v4360, %v4316
        %v4362 = vsel %vm431, %v4361, %v4320
        %v4363 = vsel %vm433, %v4362, %v4324
        %v4364 = vsel %vm435, %v4363, %v4328
        %v4365 = vsel %vm423, %v4274, %v4332
        %v4366 = vsel %vm425, %v4365, %v4336
        %v4367 = vsel %vm427, %v4366, %v4340
        %v4368 = vsel %vm429, %v4367, %v4344
        %v4369 = vsel %vm431, %v4368, %v4348
        %v4370 = vsel %vm433, %v4369, %v4352
        %v4371 = vsel %vm435, %v4370, %v4356
        %v4374 = vrot.slane %v880, 4
        %v4375 = vrot.slane %v887, 4
        %v4380 = vrot.slane %v1817, 4
        %v4381 = vrot.slane %v1824, 4
        %v4386 = vrot.slane %v2745, 4
        %v4387 = vrot.slane %v2752, 4
        %v4392 = vrot.slane %v3674, 4
        %v4393 = vrot.slane %v3681, 4
        %vm4396 = vcmask 1043456
        %v4397 = vsel %vm4396, %v436, %v4374
        %v4398 = vsel %vm4396, %v443, %v4375
        %v4399 = vsel %vm4396, %v1348, %v4380
        %v4400 = vsel %vm4396, %v1355, %v4381
        %v4401 = vsel %vm4396, %v2285, %v4386
        %v4402 = vsel %vm4396, %v2292, %v4387
        %v4403 = vsel %vm4396, %v3210, %v4392
        %v4404 = vsel %vm4396, %v3217, %v4393
        %v4407 = vrot.slane %v1118, 4
        %v4408 = vrot.slane %v1125, 4
        %v4413 = vrot.slane %v2055, 4
        %v4414 = vrot.slane %v2062, 4
        %v4419 = vrot.slane %v2975, 4
        %v4420 = vrot.slane %v2982, 4
        %v4425 = vrot.slane %v3904, 4
        %v4426 = vrot.slane %v3911, 4
        %v4429 = vsel %vm4396, %v642, %v4407
        %v4430 = vsel %vm4396, %v649, %v4408
        %v4431 = vsel %vm4396, %v1578, %v4413
        %v4432 = vsel %vm4396, %v1585, %v4414
        %v4433 = vsel %vm4396, %v2515, %v4419
        %v4434 = vsel %vm4396, %v2522, %v4420
        %v4435 = vsel %vm4396, %v3444, %v4425
        %v4436 = vsel %vm4396, %v3451, %v4426
        %v4437 = vadd.f32 %v4429, %v4431
        %v4438 = vadd.f32 %v4437, %v4433
        %v4439 = vadd.f32 %v4438, %v4435
        %v4440 = vsel %vm4396, %v4364, 0.0
        %v4441 = vadd.f32 %v4439, %v4440
        %v4442 = vrot.slane %v4441, 4
        %v4443 = vadd.f32 %v4441, %v4442
        %v4444 = vrot.slane %v4443, 2
        %v4445 = vadd.f32 %v4443, %v4444
        %v4446 = vrot.slane %v4445, 1
        %v4447 = vadd.f32 %v4445, %v4446
        %v4448 = vadd.f32 %v4430, %v4432
        %v4449 = vadd.f32 %v4448, %v4434
        %v4450 = vadd.f32 %v4449, %v4436
        %v4451 = vsel %vm4396, %v4371, 0.0
        %v4452 = vadd.f32 %v4450, %v4451
        %v4453 = vrot.slane %v4452, 4
        %v4454 = vadd.f32 %v4452, %v4453
        %v4455 = vrot.slane %v4454, 2
        %v4456 = vadd.f32 %v4454, %v4455
        %v4457 = vrot.slane %v4456, 1
        %v4458 = vadd.f32 %v4456, %v4457
        %v4459 = vadd.f32 %v4397, %v4399
        %v4460 = vadd.f32 %v4459, %v4401
        %v4461 = vadd.f32 %v4460, %v4403
        %v4462 = vsel %vm4396, %v4134, 0.0
        %v4463 = vadd.f32 %v4461, %v4462
        %v4464 = vrot.slane %v4463, 4
        %v4465 = vadd.f32 %v4463, %v4464
        %v4466 = vrot.slane %v4465, 2
        %v4467 = vadd.f32 %v4465, %v4466
        %v4468 = vrot.slane %v4467, 1
        %v4469 = vadd.f32 %v4467, %v4468
        %v4470 = vadd.f32 %v4398, %v4400
        %v4471 = vadd.f32 %v4470, %v4402
        %v4472 = vadd.f32 %v4471, %v4404
        %v4473 = vsel %vm4396, %v4141, 0.0
        %v4474 = vadd.f32 %v4472, %v4473
        %v4475 = vrot.slane %v4474, 4
        %v4476 = vadd.f32 %v4474, %v4475
        %v4477 = vrot.slane %v4476, 2
        %v4478 = vadd.f32 %v4476, %v4477
        %v4479 = vrot.slane %v4478, 1
        %v4480 = vadd.f32 %v4478, %v4479
        %v4481 = vsub.f32 36.0, %v4447
        %v4482 = vsub.f32 36.0, %v4458
        %v4483 = vmax.f32 %v4481, 1.0
        %v4484 = vmax.f32 %v4482, 1.0
        %v4485 = vrcp.pop %v4483
        %v4486 = vmul.f32 %v4469, %v4485
        %v4487 = vrcp.pop %v4484
        %v4488 = vmul.f32 %v4480, %v4487
        %vm4489 = vcmask 293888
        %v4491 = vsel %vm4489, %v181, 0
        %v4494 = vsel %vm4396, %v4364, 0
        %v4497 = vsel %vm4396, %v4371, 0
        %4499 = vmatprep.subr.mxu0 %v4430
        %4500 = vmatpush1.msra.mxu0 %v4429
        %4501 = vmatprep.subr.mxu0 %v4432
        %4502 = vmatpush1.msra.mxu0 %v4431
        %4503 = vmatprep.subr.mxu0 %v4434
        %4504 = vmatpush1.msra.mxu0 %v4433
        %4505 = vmatprep.subr.mxu0 %v4436
        %4506 = vmatpush1.msra.mxu0 %v4435
        %4507 = vmatprep.subr.mxu0 %v4497
        %4508 = vmatpush1.msra.mxu0 %v4494
        %4509 = vmatprep.subr.mxu0 0.0
        %4510 = vmatpush1.msra.mxu0 0.0
        %4511 = vmatprep.subr.mxu0 0.0
        %4512 = vmatpush1.msra.mxu0 0.0
        %4513 = vmatprep.subr.mxu0 0.0
        %4514 = vmatpush1.msra.mxu0 0.0
        %4515 = vmatprep.subr.mxu0 0.0
        %4516 = vmatpush1.msra.mxu0 0.0
        %4517 = vmatprep.subr.mxu0 0.0
        %4518 = vmatpush1.msra.mxu0 0.0
        %4519 = vmatprep.subr.mxu0 0.0
        %4520 = vmatpush1.msra.mxu0 0.0
        %4521 = vmatprep.subr.mxu0 0.0
        %4522 = vmatpush1.msra.mxu0 0.0
        %4523 = vmatprep.subr.mxu0 0.0
        %4524 = vmatpush1.msra.mxu0 0.0
        %4525 = vmatprep.subr.mxu0 0.0
        %4526 = vmatpush1.msra.mxu0 0.0
        %4527 = vmatprep.subr.mxu0 0.0
        %4528 = vmatpush1.msra.mxu0 0.0
        %4529 = vmatprep.subr.mxu0 0.0
        %4530 = vmatpush1.msra.mxu0 0.0
        %4531 = vmatprep.subr.mxu0 0.0
        %4532 = vmatpush1.msra.mxu0 0.0
        %4533 = vmatprep.subr.mxu0 0.0
        %4534 = vmatpush1.msra.mxu0 0.0
        %4535 = vmatprep.subr.mxu0 0.0
        %4536 = vmatpush1.msra.mxu0 0.0
        %4537 = vmatprep.subr.mxu0 0.0
        %4538 = vmatpush1.msra.mxu0 0.0
        %4539 = vmatprep.subr.mxu0 0.0
        %4540 = vmatpush1.msra.mxu0 0.0
        %4541 = vmatprep.subr.mxu0 0.0
        %4542 = vmatpush1.msra.mxu0 0.0
        %4543 = vmatprep.subr.mxu0 0.0
        %4544 = vmatpush1.msra.mxu0 0.0
        %4545 = vmatprep.subr.mxu0 0.0
        %4546 = vmatpush1.msra.mxu0 0.0
        %4547 = vmatprep.subr.mxu0 0.0
        %4548 = vmatpush1.msra.mxu0 0.0
        %4549 = vmatprep.subr.mxu0 0.0
        %4550 = vmatpush1.msra.mxu0 0.0
        %4551 = vmatprep.subr.mxu0 0.0
        %4552 = vmatpush1.msra.mxu0 0.0
        %4553 = vmatprep.subr.mxu0 0.0
        %4554 = vmatpush1.msra.mxu0 0.0
        %4555 = vmatprep.subr.mxu0 0.0
        %4556 = vmatpush1.msra.mxu0 0.0
        %4557 = vmatprep.subr.mxu0 0.0
        %4558 = vmatpush1.msra.mxu0 0.0
        %4559 = vmatprep.subr.mxu0 0.0
        %4560 = vmatpush1.msra.mxu0 0.0
        %4561 = vmatprep.subr.mxu0 0.0
        %4562 = vmatpush1.msra.mxu0 0.0
        %4563 = vmatprep.mubr.f32.mxu0 0.0
        %4564 = vmatmul.mubr.f32.gmra.mrb[0].mxu0 %v4491
        %v4565 = vpop.f32.mrb[0].mxu0
        %v4566 = vadd.f32 0.0, %v4565
        %v4567 = vpop.f32.mrb[0].mxu0
        %v4568 = vadd.f32 0.0, %v4567
        %4569 = vdwg.mxu0
        %v4570 = vmul.f32 %v4486, %v4566
        %v4571 = vmul.f32 %v4488, %v4568
        %v4573 = vsel %vm4396, %v4134, 0
        %v4576 = vsel %vm4396, %v4141, 0
        %4578 = vmatprep.subr.mxu0 %v4398
        %4579 = vmatpush1.msra.mxu0 %v4397
        %4580 = vmatprep.subr.mxu0 %v4400
        %4581 = vmatpush1.msra.mxu0 %v4399
        %4582 = vmatprep.subr.mxu0 %v4402
        %4583 = vmatpush1.msra.mxu0 %v4401
        %4584 = vmatprep.subr.mxu0 %v4404
        %4585 = vmatpush1.msra.mxu0 %v4403
        %4586 = vmatprep.subr.mxu0 %v4576
        %4587 = vmatpush1.msra.mxu0 %v4573
        %4588 = vmatprep.subr.mxu0 0.0
        %4589 = vmatpush1.msra.mxu0 0.0
        %4590 = vmatprep.subr.mxu0 0.0
        %4591 = vmatpush1.msra.mxu0 0.0
        %4592 = vmatprep.subr.mxu0 0.0
        %4593 = vmatpush1.msra.mxu0 0.0
        %4594 = vmatprep.subr.mxu0 0.0
        %4595 = vmatpush1.msra.mxu0 0.0
        %4596 = vmatprep.subr.mxu0 0.0
        %4597 = vmatpush1.msra.mxu0 0.0
        %4598 = vmatprep.subr.mxu0 0.0
        %4599 = vmatpush1.msra.mxu0 0.0
        %4600 = vmatprep.subr.mxu0 0.0
        %4601 = vmatpush1.msra.mxu0 0.0
        %4602 = vmatprep.subr.mxu0 0.0
        %4603 = vmatpush1.msra.mxu0 0.0
        %4604 = vmatprep.subr.mxu0 0.0
        %4605 = vmatpush1.msra.mxu0 0.0
        %4606 = vmatprep.subr.mxu0 0.0
        %4607 = vmatpush1.msra.mxu0 0.0
        %4608 = vmatprep.subr.mxu0 0.0
        %4609 = vmatpush1.msra.mxu0 0.0
        %4610 = vmatprep.subr.mxu0 0.0
        %4611 = vmatpush1.msra.mxu0 0.0
        %4612 = vmatprep.subr.mxu0 0.0
        %4613 = vmatpush1.msra.mxu0 0.0
        %4614 = vmatprep.subr.mxu0 0.0
        %4615 = vmatpush1.msra.mxu0 0.0
        %4616 = vmatprep.subr.mxu0 0.0
        %4617 = vmatpush1.msra.mxu0 0.0
        %4618 = vmatprep.subr.mxu0 0.0
        %4619 = vmatpush1.msra.mxu0 0.0
        %4620 = vmatprep.subr.mxu0 0.0
        %4621 = vmatpush1.msra.mxu0 0.0
        %4622 = vmatprep.subr.mxu0 0.0
        %4623 = vmatpush1.msra.mxu0 0.0
        %4624 = vmatprep.subr.mxu0 0.0
        %4625 = vmatpush1.msra.mxu0 0.0
        %4626 = vmatprep.subr.mxu0 0.0
        %4627 = vmatpush1.msra.mxu0 0.0
        %4628 = vmatprep.subr.mxu0 0.0
        %4629 = vmatpush1.msra.mxu0 0.0
        %4630 = vmatprep.subr.mxu0 0.0
        %4631 = vmatpush1.msra.mxu0 0.0
        %4632 = vmatprep.subr.mxu0 0.0
        %4633 = vmatpush1.msra.mxu0 0.0
        %4634 = vmatprep.subr.mxu0 0.0
        %4635 = vmatpush1.msra.mxu0 0.0
        %4636 = vmatprep.subr.mxu0 0.0
        %4637 = vmatpush1.msra.mxu0 0.0
        %4638 = vmatprep.subr.mxu0 0.0
        %4639 = vmatpush1.msra.mxu0 0.0
        %4640 = vmatprep.subr.mxu0 0.0
        %4641 = vmatpush1.msra.mxu0 0.0
        %4642 = vmatprep.mubr.f32.mxu0 0.0
        %4643 = vmatmul.mubr.f32.gmra.mrb[0].mxu0 %v4491
        %v4644 = vpop.f32.mrb[0].mxu0
        %v4645 = vadd.f32 %v4570, %v4644
        %v4646 = vpop.f32.mrb[0].mxu0
        %v4647 = vadd.f32 %v4571, %v4646
        %4648 = vdwg.mxu0
        %4650 = vset.pattern.permute.xlu0 0
        %4651 = vperm.xlu0 %4650, %v182
        %v4652 = vpop.permute.xlu0 %4651
        %v4654 = vadd.f32 %v4645, %v4652
        %v4655 = vadd.f32 %v4647, %v4652
        %vm4656 = vcmp.ge.f32.partialorder %v4447, 18.0
        %vm4657 = vcmp.ge.f32.partialorder %v4458, 18.0
        %vm4658 = vcmp.ge.f32.partialorder %v4447, 36.0
        %vm4659 = vcmp.ge.f32.partialorder %v4458, 36.0
        %vm4660 = vmor %vm4656, %vm4658
        %vm4661 = vmor %vm4657, %vm4659
        %v4662 = vsel %vm4660, 1, 0
        %v4663 = vsel %vm4661, 1, 0
        %vm4664 = vcmp.eq.s32.totalorder %v4662, 1
        %vm4665 = vcmp.eq.s32.totalorder %v4663, 1
        %v4666 = vsel %vm4664, nan, %v4654
        %v4667 = vsel %vm4665, nan, %v4655
        %4668 = vst [vmem:[%s163] sm:$0xff] %v4666
        %4669 = vst [vmem:[%s163 + $0x8] sm:$0xff] %v4667
        %s4670 = sand.u32 %s93, 1
        %s4671 = scalar_lea.sflag [#allocation3], %s4670
        %s4672 = sand.u32 %s93, 1
        %s4673 = smul.addr %s4672, 16
        %s4674 = scalar_lea.vmem [#allocation2], %s4673
        // Predicated region
        $region33: #{tpu_custom_call.1} parent=31 // pred_check
          %p4675 = pneg %p103
        $region34: #{tpu_custom_call.1} parent=31 // pred_check_branch
          %4677 = sbr.rel (%p4675) target = $region36
        $region35: #{tpu_custom_call.1} parent=31 // pred_region
          %s4679 = ssub.s32 256, 256
          %4680 = vsyncadd %s4671, %s4679
          %s4681 = smul.addr %s17, 2
          %s4682 = smul.addr %s4681, 128
          %s4683 = scalar_lea.hbm %s3, %s4682
          %s4685 = sshll.u32 %s4674, 4
          %s4686 = int_to_ptr.vmem [resolvable:$true] %s4685
          %4688 = dma.vmem_to_hbm [thread:$0]  %s4686, 256, %s4683, %s4671
        $region36: #{tpu_custom_call.1} parent=31 // pred_fallthru
          _
      $region32: #{tpu_custom_call.1} parent=5 // pred_fallthru
        _
      %p4689 = scmp.le.s32.totalorder 2, %s12
      // Predicated region
      $region37: #{tpu_custom_call.1} parent=5 // pred_check
        %p4690 = pneg %p4689
      $region38: #{tpu_custom_call.1} parent=5 // pred_check_branch
        %4692 = sbr.rel (%p4690) target = $region40
      $region39: #{tpu_custom_call.1} parent=5 // pred_region
        %s4693 = ssub.s32 %s12, 2
        // Predicated region
        $region41: #{tpu_custom_call.1} parent=39 // pred_check
          %p4694 = pneg %p109
        $region42: #{tpu_custom_call.1} parent=39 // pred_check_branch
          %4696 = sbr.rel (%p4694) target = $region44
        $region43: #{tpu_custom_call.1} parent=39 // pred_region
          %s4697 = sand.u32 %s94, 1
          %s4698 = scalar_lea.sflag [#allocation3], %s4697
          %s4699 = sand.u32 %s94, 1
          %s4700 = smul.addr %s4699, 16
          %s4701 = scalar_lea.vmem [#allocation2], %s4700
          %4702 = dma.done %s4698, 256
        $region44: #{tpu_custom_call.1} parent=39 // pred_fallthru
          _
      $region40: #{tpu_custom_call.1} parent=5 // pred_fallthru
        _
    $region6: #{tpu_custom_call.1} parent=1 // loop_footer
      %s16 = sadd.s32 1, %s12
    $region7: #{tpu_custom_call.1} parent=1 // loop_footer_branch
      %11 = sbr.rel target = $region3
    $region8: #{tpu_custom_call.1} parent=1 // loop_exit
      _
    %4703 = vsyncpa [#allocation3], 1
    %s4704 = scalar_lea.sflag [#allocation3], 1
    %4705 = vsyncpa %s4704, 1

</llo_original>
